<compile_context>
chip_gen: v6e
topology: v6e:2x2x1
jax: 0.10.0
libtpu: 0.0.40
codegen_flags: <defaults>
</compile_context>

<pallas_src>
import numpy as np
import jax
import jax.numpy as jnp
from jax.experimental import pallas as pl
from jax.experimental.pallas import tpu as pltpu

NUM_BETAS = 16            # shape-space size
NUM_VERTS = 128           # synthetic vertex count (real SMPL: 6890)
J = 24                    # SMPL joint count
N_JOINTS = 22             # SourceKeyPoints.n_joints
LANES = 128               # padded lane width of kernel output (3*J = 72 used)
KP = NUM_BETAS + 1        # betas + ones bias column (folds in J_template)

SMPL_PARENTS = np.array(
    [-1, 0, 0, 0, 1, 2, 3, 4, 5, 6, 7, 8, 9, 9, 9, 12, 13, 14, 16, 17, 18,
     19, 20, 21], dtype=np.int32)
# The in-kernel FK unroll (and the reference chain) require parents[i] < i.
assert all(int(SMPL_PARENTS[i]) < i for i in range(1, J))
assert 3 * J <= LANES


# ---------------------------------------------------------------------------
# Fused Pallas kernel: rest-joint GEMM + Rodrigues + forward kinematics.
# All I/O is lane-major 2-D, component-major joint layout (lane = c*J + j).
# ---------------------------------------------------------------------------
def _fused_kpts_kernel(betas_ref, jdirs_ref, pose_ref, trans_ref, out_ref):
    f32 = jnp.float32

    # ---- 1. Rest-pose joints: ONE MXU GEMM, J_template folded in as the
    #         last row of jdirs (betas carry a ones column).
    jrest = jnp.dot(betas_ref[...], jdirs_ref[...],
                    preferred_element_type=f32)              # (B, 128)
    jx = jrest[:, 0 * J:1 * J]                               # (B, 24)
    jy = jrest[:, 1 * J:2 * J]
    jz = jrest[:, 2 * J:3 * J]

    # ---- 2. Rodrigues axis-angle -> rotation matrices, vectorized over
    #         (B, 24). sqrt/sin/cos go to the EUP slot, rest is VPU — both
    #         idle while the tiny dot runs, so this is essentially free.
    ax = pose_ref[:, 0 * J:1 * J]
    ay = pose_ref[:, 1 * J:2 * J]
    az = pose_ref[:, 2 * J:3 * J]
    # TODO(synk): eps-regularized norm matches the SMPL reference forward;
    # switch to a sinc-style series if zero-pose gradients ever matter.
    angle = jnp.sqrt(ax * ax + ay * ay + az * az + 1e-12)
    inv = 1.0 / angle
    nx = ax * inv
    ny = ay * inv
    nz = az * inv
    c = jnp.cos(angle)
    s = jnp.sin(angle)
    ic = 1.0 - c
    r00 = c + ic * nx * nx
    r01 = ic * nx * ny - s * nz
    r02 = ic * nx * nz + s * ny
    r10 = ic * ny * nx + s * nz
    r11 = c + ic * ny * ny
    r12 = ic * ny * nz - s * nx
    r20 = ic * nz * nx - s * ny
    r21 = ic * nz * ny + s * nx
    r22 = c + ic * nz * nz

    def col(a, i):                      # static lane slice -> (B, 1)
        return a[:, i:i + 1]

    # ---- 3. Forward kinematics, fully unrolled over the SMPL tree with
    #         3x3 + 3-vec composition (R_w = R_p @ R_i, t_w = R_p @ rel + t_p).
    #         Global translation is folded into the root joint.
    trx = trans_ref[:, 0:1]
    try_ = trans_ref[:, 1:2]
    trz = trans_ref[:, 2:3]

    Rw = [None] * J
    tw = [None] * J
    Rw[0] = (col(r00, 0), col(r01, 0), col(r02, 0),
             col(r10, 0), col(r11, 0), col(r12, 0),
             col(r20, 0), col(r21, 0), col(r22, 0))
    tw[0] = (col(jx, 0) + trx, col(jy, 0) + try_, col(jz, 0) + trz)

    for i in range(1, J):
        p = int(SMPL_PARENTS[i])
        a00, a01, a02, a10, a11, a12, a20, a21, a22 = Rw[p]
        b00, b01, b02 = col(r00, i), col(r01, i), col(r02, i)
        b10, b11, b12 = col(r10, i), col(r11, i), col(r12, i)
        b20, b21, b22 = col(r20, i), col(r21, i), col(r22, i)
        Rw[i] = (
            a00 * b00 + a01 * b10 + a02 * b20,
            a00 * b01 + a01 * b11 + a02 * b21,
            a00 * b02 + a01 * b12 + a02 * b22,
            a10 * b00 + a11 * b10 + a12 * b20,
            a10 * b01 + a11 * b11 + a12 * b21,
            a10 * b02 + a11 * b12 + a12 * b22,
            a20 * b00 + a21 * b10 + a22 * b20,
            a20 * b01 + a21 * b11 + a22 * b21,
            a20 * b02 + a21 * b12 + a22 * b22,
        )
        rx = col(jx, i) - col(jx, p)
        ry = col(jy, i) - col(jy, p)
        rz = col(jz, i) - col(jz, p)
        tx, ty, tz = tw[p]
        tw[i] = (a00 * rx + a01 * ry + a02 * rz + tx,
                 a10 * rx + a11 * ry + a12 * rz + ty,
                 a20 * rx + a21 * ry + a22 * rz + tz)

    # ---- 4. Write-back (component-major lanes, zero-padded to 128).
    out_ref[...] = jnp.zeros_like(out_ref)
    for i in range(J):
        for c_idx in range(3):
            out_ref[:, c_idx * J + i:c_idx * J + i + 1] = tw[i][c_idx]


def fused_kpts_pallas(betas_aug, j_dirs_aug, pose_cm, trans, *, batch_block=512):
    """betas_aug (B,17), j_dirs_aug (17,128), pose_cm (B,72), trans (B,3)
    -> posed joints, component-major, (B, 128) float32 (first 72 lanes valid)."""
    B, Kp = betas_aug.shape
    JP = j_dirs_aug.shape[1]
    P3 = pose_cm.shape[1]
    cost = pl.CostEstimate(
        flops=int(2 * B * Kp * JP + B * J * 40 + B * (J - 1) * 70),
        transcendentals=int(3 * B * J),
        bytes_accessed=int(4 * (B * Kp + Kp * JP + B * P3 + B * 3 + B * JP)))

    if B >= batch_block and B % batch_block == 0:
        # Large fitting batches: tile the batch and mark it "parallel" so the
        # grid is sharded across v7x's 2 TensorCores (no-op on v5e/v6e).
        # Weights stay resident (index_map returns (0, 0)); at TB=512 the
        # double-buffered streams are ~0.5 MiB, far under any VMEM limit.
        # TODO(synk): optionally cast betas/j_dirs to bf16 (f32 accumulation)
        # here to halve the only batch-scaled input stream on v5e/v6e.
        return pl.pallas_call(
            _fused_kpts_kernel,
            out_shape=jax.ShapeDtypeStruct((B, JP), jnp.float32),
            grid=(B // batch_block,),
            in_specs=[
                pl.BlockSpec((batch_block, Kp), lambda i: (i, 0)),
                pl.BlockSpec((Kp, JP), lambda i: (0, 0)),
                pl.BlockSpec((batch_block, P3), lambda i: (i, 0)),
                pl.BlockSpec((batch_block, 3), lambda i: (i, 0)),
            ],
            out_specs=pl.BlockSpec((batch_block, JP), lambda i: (i, 0)),
            compiler_params=pltpu.CompilerParams(
                dimension_semantics=("parallel",)),
            cost_estimate=cost,
        )(betas_aug, j_dirs_aug, pose_cm, trans)

    # Typical small fitting batches: single ungridded whole-array step.
    return pl.pallas_call(
        _fused_kpts_kernel,
        out_shape=jax.ShapeDtypeStruct((B, JP), jnp.float32),
        in_specs=[pl.BlockSpec(memory_space=pltpu.MemorySpace.VMEM)] * 4,
        out_specs=pl.BlockSpec(memory_space=pltpu.MemorySpace.VMEM),
        cost_estimate=cost,
    )(betas_aug, j_dirs_aug, pose_cm, trans)


# ---------------------------------------------------------------------------
# SourceKeyPoints.forward equivalent (thin wrapper, everything hot in Pallas).
# ---------------------------------------------------------------------------
def _build_full_pose(root_orient, pose_body):
    """root (B,3) + body (B,63) + zero extra joints -> (B, J, 3) axis-angle."""
    B = root_orient.shape[0]
    n_pad = 3 * (J - 1) - pose_body.shape[1]
    full = jnp.concatenate(
        [root_orient, pose_body, jnp.zeros((B, n_pad), pose_body.dtype)],
        axis=1)
    return full.reshape(B, J, 3)


def source_key_points(body_parms, params, n_joints=N_JOINTS):
    betas = body_parms['betas'].astype(jnp.float32)
    root_orient = body_parms['root_orient'].astype(jnp.float32)
    pose_body = body_parms['pose_body'].astype(jnp.float32)
    trans = body_parms['trans'].astype(jnp.float32)
    B = betas.shape[0]

    betas_aug = jnp.concatenate([betas, jnp.ones((B, 1), jnp.float32)], axis=1)
    full_aa = _build_full_pose(root_orient, pose_body)                 # (B,J,3)
    pose_cm = full_aa.transpose(0, 2, 1).reshape(B, 3 * J)             # (B,72)

    out = fused_kpts_pallas(betas_aug, params['j_dirs_aug'], pose_cm, trans)
    jtr = out[:, :3 * J].reshape(B, 3, J).transpose(0, 2, 1)           # (B,J,3)
    return {'source_kpts': jtr[:, :n_joints]}


# ---------------------------------------------------------------------------
# Deterministic synthetic BodyModel params; static vertex axis contracted
# offline (J_dirs / J_template), template folded in as a bias row.
# ---------------------------------------------------------------------------
def init_body_model_params(key):
    k1, k2, k3 = jax.random.split(key, 3)
    v_template = 0.5 * jax.random.normal(k1, (NUM_VERTS, 3), jnp.float32)
    shapedirs = 0.01 * jax.random.normal(k2, (NUM_VERTS, 3, NUM_BETAS),
                                         jnp.float32)
    j_regressor = jax.nn.softmax(
        jax.random.normal(k3, (J, NUM_VERTS), jnp.float32), axis=-1)   # (J,V)

    # Offline contraction of V (component-major lane layout c*J + j):
    j_dirs = jnp.einsum('jv,vck->kcj', j_regressor, shapedirs).reshape(
        NUM_BETAS, 3 * J)                                              # (K,72)
    j_tmpl = (j_regressor @ v_template).T.reshape(1, 3 * J)            # (1,72)
    j_dirs_aug = jnp.concatenate([j_dirs, j_tmpl], axis=0)             # (17,72)
    j_dirs_aug = jnp.pad(j_dirs_aug, ((0, 0), (0, LANES - 3 * J)))     # (17,128)

    raw = {'v_template': v_template, 'shapedirs': shapedirs,
           'j_regressor': j_regressor}
    return {'j_dirs_aug': j_dirs_aug, 'raw': raw}


# ---------------------------------------------------------------------------
# Pure-JAX reference (uncontracted, homogeneous-4x4 FK) for cross-checking.
# ---------------------------------------------------------------------------
def _reference_rodrigues(aa):
    angle = jnp.sqrt(jnp.sum(aa * aa, axis=-1, keepdims=True) + 1e-12)
    axis = aa / angle
    cos = jnp.cos(angle)[..., None]
    sin = jnp.sin(angle)[..., None]
    rx, ry, rz = axis[..., 0], axis[..., 1], axis[..., 2]
    zeros = jnp.zeros_like(rx)
    K = jnp.stack([zeros, -rz, ry, rz, zeros, -rx, -ry, rx, zeros],
                  axis=-1).reshape(aa.shape[:-1] + (3, 3))
    I = jnp.eye(3, dtype=aa.dtype)
    return I + sin * K + (1.0 - cos) * jnp.matmul(K, K)


def _reference_fk(rot_mats, j_rest, parents):
    B, Jn, _ = j_rest.shape
    rel = j_rest.at[:, 1:].add(-j_rest[:, parents[1:]])
    T = jnp.concatenate([rot_mats, rel[..., None]], axis=-1)
    bottom = jnp.tile(jnp.array([[0., 0., 0., 1.]], dtype=j_rest.dtype),
                      (B, Jn, 1, 1))
    T = jnp.concatenate([T, bottom], axis=-2)
    chains = [T[:, 0]]
    for i in range(1, Jn):
        chains.append(jnp.matmul(chains[int(parents[i])], T[:, i]))
    return jnp.stack(chains, axis=1)[:, :, :3, 3]


def _reference_kpts(body_parms, raw, n_joints=N_JOINTS):
    betas = body_parms['betas']
    trans = body_parms['trans']
    v_shaped = raw['v_template'][None] + jnp.einsum('bl,vcl->bvc', betas,
                                                    raw['shapedirs'])
    j_rest = jnp.einsum('jv,bvc->bjc', raw['j_regressor'], v_shaped)
    rot = _reference_rodrigues(
        _build_full_pose(body_parms['root_orient'], body_parms['pose_body']))
    jtr = _reference_fk(rot, j_rest, SMPL_PARENTS) + trans[:, None, :]
    return jtr[:, :n_joints]


if __name__ == "__main__":
    key = jax.random.PRNGKey(0)
    pk, bk, rk, pbk, tk = jax.random.split(key, 5)
    params = init_body_model_params(pk)

    B = 2
    body_parms = {
        'betas': jax.random.normal(bk, (B, NUM_BETAS), jnp.float32),
        'root_orient': 0.1 * jax.random.normal(rk, (B, 3), jnp.float32),
        'pose_body': 0.1 * jax.random.normal(pbk, (B, 63), jnp.float32),
        'trans': jax.random.normal(tk, (B, 3), jnp.float32),
    }

    out = source_key_points(body_parms, params)
    kpts = jax.block_until_ready(out['source_kpts'])
    assert kpts.shape == (B, N_JOINTS, 3), kpts.shape
    assert kpts.dtype == jnp.float32

    ref = jax.block_until_ready(_reference_kpts(body_parms, params['raw']))
    np.testing.assert_allclose(np.asarray(kpts), np.asarray(ref),
                               rtol=1e-3, atol=1e-4)
    print("KERNEL_OK")
</pallas_src>

<mosaic_0001>
module attributes {stable_mosaic.version = 11 : i64} {
  func.func @_fused_kpts_kernel(%arg0: memref<2x17xf32, #tpu.memory_space<vmem>>, %arg1: memref<17x128xf32, #tpu.memory_space<vmem>>, %arg2: memref<2x72xf32, #tpu.memory_space<vmem>>, %arg3: memref<2x3xf32, #tpu.memory_space<vmem>>, %arg4: memref<2x128xf32, #tpu.memory_space<vmem>>) attributes {dimension_semantics = [], scalar_prefetch = 0 : i64, scratch_operands = 0 : i64, tpu.core_type = #tpu.core_type<tc>} {
    %c0 = arith.constant 0 : index
    %c0_0 = arith.constant 0 : index
    %0 = vector.load %arg0[%c0, %c0_0] : memref<2x17xf32, #tpu.memory_space<vmem>>, vector<2x17xf32>
    %c0_1 = arith.constant 0 : index
    %c0_2 = arith.constant 0 : index
    %1 = vector.load %arg1[%c0_1, %c0_2] : memref<17x128xf32, #tpu.memory_space<vmem>>, vector<17x128xf32>
    %cst = arith.constant dense<0.000000e+00> : vector<2x128xf32>
    %2 = tpu.matmul %0, %1, %cst {dimension_numbers = #tpu.dot_dimension_numbers<[1], [0], [0], [1], [0, 0, 1, 1], [], []>} : vector<2x17xf32>, vector<17x128xf32>, vector<2x128xf32> -> vector<2x128xf32>
    %3 = vector.extract_strided_slice %2 {offsets = [0, 0], sizes = [2, 24], strides = [1, 1]} : vector<2x128xf32> to vector<2x24xf32>
    %4 = vector.extract_strided_slice %2 {offsets = [0, 24], sizes = [2, 24], strides = [1, 1]} : vector<2x128xf32> to vector<2x24xf32>
    %5 = vector.extract_strided_slice %2 {offsets = [0, 48], sizes = [2, 24], strides = [1, 1]} : vector<2x128xf32> to vector<2x24xf32>
    %c0_3 = arith.constant 0 : index
    %c0_4 = arith.constant 0 : index
    %6 = vector.load %arg2[%c0_3, %c0_4] : memref<2x72xf32, #tpu.memory_space<vmem>>, vector<2x24xf32>
    %c0_5 = arith.constant 0 : index
    %c24 = arith.constant 24 : index
    %7 = vector.load %arg2[%c0_5, %c24] : memref<2x72xf32, #tpu.memory_space<vmem>>, vector<2x24xf32>
    %c0_6 = arith.constant 0 : index
    %c48 = arith.constant 48 : index
    %8 = vector.load %arg2[%c0_6, %c48] : memref<2x72xf32, #tpu.memory_space<vmem>>, vector<2x24xf32>
    %9 = arith.mulf %6, %6 : vector<2x24xf32>
    %10 = arith.mulf %7, %7 : vector<2x24xf32>
    %11 = arith.addf %9, %10 : vector<2x24xf32>
    %12 = arith.mulf %8, %8 : vector<2x24xf32>
    %13 = arith.addf %11, %12 : vector<2x24xf32>
    %cst_7 = arith.constant 9.99999996E-13 : f32
    %14 = vector.broadcast %cst_7 : f32 to vector<2x24xf32>
    %15 = arith.addf %13, %14 : vector<2x24xf32>
    %16 = math.sqrt %15 : vector<2x24xf32>
    %cst_8 = arith.constant 1.000000e+00 : f32
    %17 = vector.broadcast %cst_8 : f32 to vector<2x24xf32>
    %18 = arith.divf %17, %16 : vector<2x24xf32>
    %19 = arith.mulf %6, %18 : vector<2x24xf32>
    %20 = arith.mulf %7, %18 : vector<2x24xf32>
    %21 = arith.mulf %8, %18 : vector<2x24xf32>
    %22 = math.cos %16 : vector<2x24xf32>
    %23 = math.sin %16 : vector<2x24xf32>
    %cst_9 = arith.constant 1.000000e+00 : f32
    %24 = vector.broadcast %cst_9 : f32 to vector<2x24xf32>
    %25 = arith.subf %24, %22 : vector<2x24xf32>
    %26 = arith.mulf %25, %19 : vector<2x24xf32>
    %27 = arith.mulf %26, %19 : vector<2x24xf32>
    %28 = arith.addf %22, %27 : vector<2x24xf32>
    %29 = arith.mulf %25, %19 : vector<2x24xf32>
    %30 = arith.mulf %29, %20 : vector<2x24xf32>
    %31 = arith.mulf %23, %21 : vector<2x24xf32>
    %32 = arith.subf %30, %31 : vector<2x24xf32>
    %33 = arith.mulf %25, %19 : vector<2x24xf32>
    %34 = arith.mulf %33, %21 : vector<2x24xf32>
    %35 = arith.mulf %23, %20 : vector<2x24xf32>
    %36 = arith.addf %34, %35 : vector<2x24xf32>
    %37 = arith.mulf %25, %20 : vector<2x24xf32>
    %38 = arith.mulf %37, %19 : vector<2x24xf32>
    %39 = arith.mulf %23, %21 : vector<2x24xf32>
    %40 = arith.addf %38, %39 : vector<2x24xf32>
    %41 = arith.mulf %25, %20 : vector<2x24xf32>
    %42 = arith.mulf %41, %20 : vector<2x24xf32>
    %43 = arith.addf %22, %42 : vector<2x24xf32>
    %44 = arith.mulf %25, %20 : vector<2x24xf32>
    %45 = arith.mulf %44, %21 : vector<2x24xf32>
    %46 = arith.mulf %23, %19 : vector<2x24xf32>
    %47 = arith.subf %45, %46 : vector<2x24xf32>
    %48 = arith.mulf %25, %21 : vector<2x24xf32>
    %49 = arith.mulf %48, %19 : vector<2x24xf32>
    %50 = arith.mulf %23, %20 : vector<2x24xf32>
    %51 = arith.subf %49, %50 : vector<2x24xf32>
    %52 = arith.mulf %25, %21 : vector<2x24xf32>
    %53 = arith.mulf %52, %20 : vector<2x24xf32>
    %54 = arith.mulf %23, %19 : vector<2x24xf32>
    %55 = arith.addf %53, %54 : vector<2x24xf32>
    %56 = arith.mulf %25, %21 : vector<2x24xf32>
    %57 = arith.mulf %56, %21 : vector<2x24xf32>
    %58 = arith.addf %22, %57 : vector<2x24xf32>
    %c0_10 = arith.constant 0 : index
    %c0_11 = arith.constant 0 : index
    %59 = vector.load %arg3[%c0_10, %c0_11] : memref<2x3xf32, #tpu.memory_space<vmem>>, vector<2x1xf32>
    %c0_12 = arith.constant 0 : index
    %c1 = arith.constant 1 : index
    %60 = vector.load %arg3[%c0_12, %c1] : memref<2x3xf32, #tpu.memory_space<vmem>>, vector<2x1xf32>
    %c0_13 = arith.constant 0 : index
    %c2 = arith.constant 2 : index
    %61 = vector.load %arg3[%c0_13, %c2] : memref<2x3xf32, #tpu.memory_space<vmem>>, vector<2x1xf32>
    %62 = vector.extract_strided_slice %28 {offsets = [0, 0], sizes = [2, 1], strides = [1, 1]} : vector<2x24xf32> to vector<2x1xf32>
    %63 = vector.extract_strided_slice %32 {offsets = [0, 0], sizes = [2, 1], strides = [1, 1]} : vector<2x24xf32> to vector<2x1xf32>
    %64 = vector.extract_strided_slice %36 {offsets = [0, 0], sizes = [2, 1], strides = [1, 1]} : vector<2x24xf32> to vector<2x1xf32>
    %65 = vector.extract_strided_slice %40 {offsets = [0, 0], sizes = [2, 1], strides = [1, 1]} : vector<2x24xf32> to vector<2x1xf32>
    %66 = vector.extract_strided_slice %43 {offsets = [0, 0], sizes = [2, 1], strides = [1, 1]} : vector<2x24xf32> to vector<2x1xf32>
    %67 = vector.extract_strided_slice %47 {offsets = [0, 0], sizes = [2, 1], strides = [1, 1]} : vector<2x24xf32> to vector<2x1xf32>
    %68 = vector.extract_strided_slice %51 {offsets = [0, 0], sizes = [2, 1], strides = [1, 1]} : vector<2x24xf32> to vector<2x1xf32>
    %69 = vector.extract_strided_slice %55 {offsets = [0, 0], sizes = [2, 1], strides = [1, 1]} : vector<2x24xf32> to vector<2x1xf32>
    %70 = vector.extract_strided_slice %58 {offsets = [0, 0], sizes = [2, 1], strides = [1, 1]} : vector<2x24xf32> to vector<2x1xf32>
    %71 = vector.extract_strided_slice %3 {offsets = [0, 0], sizes = [2, 1], strides = [1, 1]} : vector<2x24xf32> to vector<2x1xf32>
    %72 = arith.addf %71, %59 : vector<2x1xf32>
    %73 = vector.extract_strided_slice %4 {offsets = [0, 0], sizes = [2, 1], strides = [1, 1]} : vector<2x24xf32> to vector<2x1xf32>
    %74 = arith.addf %73, %60 : vector<2x1xf32>
    %75 = vector.extract_strided_slice %5 {offsets = [0, 0], sizes = [2, 1], strides = [1, 1]} : vector<2x24xf32> to vector<2x1xf32>
    %76 = arith.addf %75, %61 : vector<2x1xf32>
    %77 = vector.extract_strided_slice %28 {offsets = [0, 1], sizes = [2, 1], strides = [1, 1]} : vector<2x24xf32> to vector<2x1xf32>
    %78 = vector.extract_strided_slice %32 {offsets = [0, 1], sizes = [2, 1], strides = [1, 1]} : vector<2x24xf32> to vector<2x1xf32>
    %79 = vector.extract_strided_slice %36 {offsets = [0, 1], sizes = [2, 1], strides = [1, 1]} : vector<2x24xf32> to vector<2x1xf32>
    %80 = vector.extract_strided_slice %40 {offsets = [0, 1], sizes = [2, 1], strides = [1, 1]} : vector<2x24xf32> to vector<2x1xf32>
    %81 = vector.extract_strided_slice %43 {offsets = [0, 1], sizes = [2, 1], strides = [1, 1]} : vector<2x24xf32> to vector<2x1xf32>
    %82 = vector.extract_strided_slice %47 {offsets = [0, 1], sizes = [2, 1], strides = [1, 1]} : vector<2x24xf32> to vector<2x1xf32>
    %83 = vector.extract_strided_slice %51 {offsets = [0, 1], sizes = [2, 1], strides = [1, 1]} : vector<2x24xf32> to vector<2x1xf32>
    %84 = vector.extract_strided_slice %55 {offsets = [0, 1], sizes = [2, 1], strides = [1, 1]} : vector<2x24xf32> to vector<2x1xf32>
    %85 = vector.extract_strided_slice %58 {offsets = [0, 1], sizes = [2, 1], strides = [1, 1]} : vector<2x24xf32> to vector<2x1xf32>
    %86 = arith.mulf %62, %77 : vector<2x1xf32>
    %87 = arith.mulf %63, %80 : vector<2x1xf32>
    %88 = arith.addf %86, %87 : vector<2x1xf32>
    %89 = arith.mulf %64, %83 : vector<2x1xf32>
    %90 = arith.addf %88, %89 : vector<2x1xf32>
    %91 = arith.mulf %62, %78 : vector<2x1xf32>
    %92 = arith.mulf %63, %81 : vector<2x1xf32>
    %93 = arith.addf %91, %92 : vector<2x1xf32>
    %94 = arith.mulf %64, %84 : vector<2x1xf32>
    %95 = arith.addf %93, %94 : vector<2x1xf32>
    %96 = arith.mulf %62, %79 : vector<2x1xf32>
    %97 = arith.mulf %63, %82 : vector<2x1xf32>
    %98 = arith.addf %96, %97 : vector<2x1xf32>
    %99 = arith.mulf %64, %85 : vector<2x1xf32>
    %100 = arith.addf %98, %99 : vector<2x1xf32>
    %101 = arith.mulf %65, %77 : vector<2x1xf32>
    %102 = arith.mulf %66, %80 : vector<2x1xf32>
    %103 = arith.addf %101, %102 : vector<2x1xf32>
    %104 = arith.mulf %67, %83 : vector<2x1xf32>
    %105 = arith.addf %103, %104 : vector<2x1xf32>
    %106 = arith.mulf %65, %78 : vector<2x1xf32>
    %107 = arith.mulf %66, %81 : vector<2x1xf32>
    %108 = arith.addf %106, %107 : vector<2x1xf32>
    %109 = arith.mulf %67, %84 : vector<2x1xf32>
    %110 = arith.addf %108, %109 : vector<2x1xf32>
    %111 = arith.mulf %65, %79 : vector<2x1xf32>
    %112 = arith.mulf %66, %82 : vector<2x1xf32>
    %113 = arith.addf %111, %112 : vector<2x1xf32>
    %114 = arith.mulf %67, %85 : vector<2x1xf32>
    %115 = arith.addf %113, %114 : vector<2x1xf32>
    %116 = arith.mulf %68, %77 : vector<2x1xf32>
    %117 = arith.mulf %69, %80 : vector<2x1xf32>
    %118 = arith.addf %116, %117 : vector<2x1xf32>
    %119 = arith.mulf %70, %83 : vector<2x1xf32>
    %120 = arith.addf %118, %119 : vector<2x1xf32>
    %121 = arith.mulf %68, %78 : vector<2x1xf32>
    %122 = arith.mulf %69, %81 : vector<2x1xf32>
    %123 = arith.addf %121, %122 : vector<2x1xf32>
    %124 = arith.mulf %70, %84 : vector<2x1xf32>
    %125 = arith.addf %123, %124 : vector<2x1xf32>
    %126 = arith.mulf %68, %79 : vector<2x1xf32>
    %127 = arith.mulf %69, %82 : vector<2x1xf32>
    %128 = arith.addf %126, %127 : vector<2x1xf32>
    %129 = arith.mulf %70, %85 : vector<2x1xf32>
    %130 = arith.addf %128, %129 : vector<2x1xf32>
    %131 = vector.extract_strided_slice %3 {offsets = [0, 1], sizes = [2, 1], strides = [1, 1]} : vector<2x24xf32> to vector<2x1xf32>
    %132 = vector.extract_strided_slice %3 {offsets = [0, 0], sizes = [2, 1], strides = [1, 1]} : vector<2x24xf32> to vector<2x1xf32>
    %133 = arith.subf %131, %132 : vector<2x1xf32>
    %134 = vector.extract_strided_slice %4 {offsets = [0, 1], sizes = [2, 1], strides = [1, 1]} : vector<2x24xf32> to vector<2x1xf32>
    %135 = vector.extract_strided_slice %4 {offsets = [0, 0], sizes = [2, 1], strides = [1, 1]} : vector<2x24xf32> to vector<2x1xf32>
    %136 = arith.subf %134, %135 : vector<2x1xf32>
    %137 = vector.extract_strided_slice %5 {offsets = [0, 1], sizes = [2, 1], strides = [1, 1]} : vector<2x24xf32> to vector<2x1xf32>
    %138 = vector.extract_strided_slice %5 {offsets = [0, 0], sizes = [2, 1], strides = [1, 1]} : vector<2x24xf32> to vector<2x1xf32>
    %139 = arith.subf %137, %138 : vector<2x1xf32>
    %140 = arith.mulf %62, %133 : vector<2x1xf32>
    %141 = arith.mulf %63, %136 : vector<2x1xf32>
    %142 = arith.addf %140, %141 : vector<2x1xf32>
    %143 = arith.mulf %64, %139 : vector<2x1xf32>
    %144 = arith.addf %142, %143 : vector<2x1xf32>
    %145 = arith.addf %144, %72 : vector<2x1xf32>
    %146 = arith.mulf %65, %133 : vector<2x1xf32>
    %147 = arith.mulf %66, %136 : vector<2x1xf32>
    %148 = arith.addf %146, %147 : vector<2x1xf32>
    %149 = arith.mulf %67, %139 : vector<2x1xf32>
    %150 = arith.addf %148, %149 : vector<2x1xf32>
    %151 = arith.addf %150, %74 : vector<2x1xf32>
    %152 = arith.mulf %68, %133 : vector<2x1xf32>
    %153 = arith.mulf %69, %136 : vector<2x1xf32>
    %154 = arith.addf %152, %153 : vector<2x1xf32>
    %155 = arith.mulf %70, %139 : vector<2x1xf32>
    %156 = arith.addf %154, %155 : vector<2x1xf32>
    %157 = arith.addf %156, %76 : vector<2x1xf32>
    %158 = vector.extract_strided_slice %28 {offsets = [0, 2], sizes = [2, 1], strides = [1, 1]} : vector<2x24xf32> to vector<2x1xf32>
    %159 = vector.extract_strided_slice %32 {offsets = [0, 2], sizes = [2, 1], strides = [1, 1]} : vector<2x24xf32> to vector<2x1xf32>
    %160 = vector.extract_strided_slice %36 {offsets = [0, 2], sizes = [2, 1], strides = [1, 1]} : vector<2x24xf32> to vector<2x1xf32>
    %161 = vector.extract_strided_slice %40 {offsets = [0, 2], sizes = [2, 1], strides = [1, 1]} : vector<2x24xf32> to vector<2x1xf32>
    %162 = vector.extract_strided_slice %43 {offsets = [0, 2], sizes = [2, 1], strides = [1, 1]} : vector<2x24xf32> to vector<2x1xf32>
    %163 = vector.extract_strided_slice %47 {offsets = [0, 2], sizes = [2, 1], strides = [1, 1]} : vector<2x24xf32> to vector<2x1xf32>
    %164 = vector.extract_strided_slice %51 {offsets = [0, 2], sizes = [2, 1], strides = [1, 1]} : vector<2x24xf32> to vector<2x1xf32>
    %165 = vector.extract_strided_slice %55 {offsets = [0, 2], sizes = [2, 1], strides = [1, 1]} : vector<2x24xf32> to vector<2x1xf32>
    %166 = vector.extract_strided_slice %58 {offsets = [0, 2], sizes = [2, 1], strides = [1, 1]} : vector<2x24xf32> to vector<2x1xf32>
    %167 = arith.mulf %62, %158 : vector<2x1xf32>
    %168 = arith.mulf %63, %161 : vector<2x1xf32>
    %169 = arith.addf %167, %168 : vector<2x1xf32>
    %170 = arith.mulf %64, %164 : vector<2x1xf32>
    %171 = arith.addf %169, %170 : vector<2x1xf32>
    %172 = arith.mulf %62, %159 : vector<2x1xf32>
    %173 = arith.mulf %63, %162 : vector<2x1xf32>
    %174 = arith.addf %172, %173 : vector<2x1xf32>
    %175 = arith.mulf %64, %165 : vector<2x1xf32>
    %176 = arith.addf %174, %175 : vector<2x1xf32>
    %177 = arith.mulf %62, %160 : vector<2x1xf32>
    %178 = arith.mulf %63, %163 : vector<2x1xf32>
    %179 = arith.addf %177, %178 : vector<2x1xf32>
    %180 = arith.mulf %64, %166 : vector<2x1xf32>
    %181 = arith.addf %179, %180 : vector<2x1xf32>
    %182 = arith.mulf %65, %158 : vector<2x1xf32>
    %183 = arith.mulf %66, %161 : vector<2x1xf32>
    %184 = arith.addf %182, %183 : vector<2x1xf32>
    %185 = arith.mulf %67, %164 : vector<2x1xf32>
    %186 = arith.addf %184, %185 : vector<2x1xf32>
    %187 = arith.mulf %65, %159 : vector<2x1xf32>
    %188 = arith.mulf %66, %162 : vector<2x1xf32>
    %189 = arith.addf %187, %188 : vector<2x1xf32>
    %190 = arith.mulf %67, %165 : vector<2x1xf32>
    %191 = arith.addf %189, %190 : vector<2x1xf32>
    %192 = arith.mulf %65, %160 : vector<2x1xf32>
    %193 = arith.mulf %66, %163 : vector<2x1xf32>
    %194 = arith.addf %192, %193 : vector<2x1xf32>
    %195 = arith.mulf %67, %166 : vector<2x1xf32>
    %196 = arith.addf %194, %195 : vector<2x1xf32>
    %197 = arith.mulf %68, %158 : vector<2x1xf32>
    %198 = arith.mulf %69, %161 : vector<2x1xf32>
    %199 = arith.addf %197, %198 : vector<2x1xf32>
    %200 = arith.mulf %70, %164 : vector<2x1xf32>
    %201 = arith.addf %199, %200 : vector<2x1xf32>
    %202 = arith.mulf %68, %159 : vector<2x1xf32>
    %203 = arith.mulf %69, %162 : vector<2x1xf32>
    %204 = arith.addf %202, %203 : vector<2x1xf32>
    %205 = arith.mulf %70, %165 : vector<2x1xf32>
    %206 = arith.addf %204, %205 : vector<2x1xf32>
    %207 = arith.mulf %68, %160 : vector<2x1xf32>
    %208 = arith.mulf %69, %163 : vector<2x1xf32>
    %209 = arith.addf %207, %208 : vector<2x1xf32>
    %210 = arith.mulf %70, %166 : vector<2x1xf32>
    %211 = arith.addf %209, %210 : vector<2x1xf32>
    %212 = vector.extract_strided_slice %3 {offsets = [0, 2], sizes = [2, 1], strides = [1, 1]} : vector<2x24xf32> to vector<2x1xf32>
    %213 = vector.extract_strided_slice %3 {offsets = [0, 0], sizes = [2, 1], strides = [1, 1]} : vector<2x24xf32> to vector<2x1xf32>
    %214 = arith.subf %212, %213 : vector<2x1xf32>
    %215 = vector.extract_strided_slice %4 {offsets = [0, 2], sizes = [2, 1], strides = [1, 1]} : vector<2x24xf32> to vector<2x1xf32>
    %216 = vector.extract_strided_slice %4 {offsets = [0, 0], sizes = [2, 1], strides = [1, 1]} : vector<2x24xf32> to vector<2x1xf32>
    %217 = arith.subf %215, %216 : vector<2x1xf32>
    %218 = vector.extract_strided_slice %5 {offsets = [0, 2], sizes = [2, 1], strides = [1, 1]} : vector<2x24xf32> to vector<2x1xf32>
    %219 = vector.extract_strided_slice %5 {offsets = [0, 0], sizes = [2, 1], strides = [1, 1]} : vector<2x24xf32> to vector<2x1xf32>
    %220 = arith.subf %218, %219 : vector<2x1xf32>
    %221 = arith.mulf %62, %214 : vector<2x1xf32>
    %222 = arith.mulf %63, %217 : vector<2x1xf32>
    %223 = arith.addf %221, %222 : vector<2x1xf32>
    %224 = arith.mulf %64, %220 : vector<2x1xf32>
    %225 = arith.addf %223, %224 : vector<2x1xf32>
    %226 = arith.addf %225, %72 : vector<2x1xf32>
    %227 = arith.mulf %65, %214 : vector<2x1xf32>
    %228 = arith.mulf %66, %217 : vector<2x1xf32>
    %229 = arith.addf %227, %228 : vector<2x1xf32>
    %230 = arith.mulf %67, %220 : vector<2x1xf32>
    %231 = arith.addf %229, %230 : vector<2x1xf32>
    %232 = arith.addf %231, %74 : vector<2x1xf32>
    %233 = arith.mulf %68, %214 : vector<2x1xf32>
    %234 = arith.mulf %69, %217 : vector<2x1xf32>
    %235 = arith.addf %233, %234 : vector<2x1xf32>
    %236 = arith.mulf %70, %220 : vector<2x1xf32>
    %237 = arith.addf %235, %236 : vector<2x1xf32>
    %238 = arith.addf %237, %76 : vector<2x1xf32>
    %239 = vector.extract_strided_slice %28 {offsets = [0, 3], sizes = [2, 1], strides = [1, 1]} : vector<2x24xf32> to vector<2x1xf32>
    %240 = vector.extract_strided_slice %32 {offsets = [0, 3], sizes = [2, 1], strides = [1, 1]} : vector<2x24xf32> to vector<2x1xf32>
    %241 = vector.extract_strided_slice %36 {offsets = [0, 3], sizes = [2, 1], strides = [1, 1]} : vector<2x24xf32> to vector<2x1xf32>
    %242 = vector.extract_strided_slice %40 {offsets = [0, 3], sizes = [2, 1], strides = [1, 1]} : vector<2x24xf32> to vector<2x1xf32>
    %243 = vector.extract_strided_slice %43 {offsets = [0, 3], sizes = [2, 1], strides = [1, 1]} : vector<2x24xf32> to vector<2x1xf32>
    %244 = vector.extract_strided_slice %47 {offsets = [0, 3], sizes = [2, 1], strides = [1, 1]} : vector<2x24xf32> to vector<2x1xf32>
    %245 = vector.extract_strided_slice %51 {offsets = [0, 3], sizes = [2, 1], strides = [1, 1]} : vector<2x24xf32> to vector<2x1xf32>
    %246 = vector.extract_strided_slice %55 {offsets = [0, 3], sizes = [2, 1], strides = [1, 1]} : vector<2x24xf32> to vector<2x1xf32>
    %247 = vector.extract_strided_slice %58 {offsets = [0, 3], sizes = [2, 1], strides = [1, 1]} : vector<2x24xf32> to vector<2x1xf32>
    %248 = arith.mulf %62, %239 : vector<2x1xf32>
    %249 = arith.mulf %63, %242 : vector<2x1xf32>
    %250 = arith.addf %248, %249 : vector<2x1xf32>
    %251 = arith.mulf %64, %245 : vector<2x1xf32>
    %252 = arith.addf %250, %251 : vector<2x1xf32>
    %253 = arith.mulf %62, %240 : vector<2x1xf32>
    %254 = arith.mulf %63, %243 : vector<2x1xf32>
    %255 = arith.addf %253, %254 : vector<2x1xf32>
    %256 = arith.mulf %64, %246 : vector<2x1xf32>
    %257 = arith.addf %255, %256 : vector<2x1xf32>
    %258 = arith.mulf %62, %241 : vector<2x1xf32>
    %259 = arith.mulf %63, %244 : vector<2x1xf32>
    %260 = arith.addf %258, %259 : vector<2x1xf32>
    %261 = arith.mulf %64, %247 : vector<2x1xf32>
    %262 = arith.addf %260, %261 : vector<2x1xf32>
    %263 = arith.mulf %65, %239 : vector<2x1xf32>
    %264 = arith.mulf %66, %242 : vector<2x1xf32>
    %265 = arith.addf %263, %264 : vector<2x1xf32>
    %266 = arith.mulf %67, %245 : vector<2x1xf32>
    %267 = arith.addf %265, %266 : vector<2x1xf32>
    %268 = arith.mulf %65, %240 : vector<2x1xf32>
    %269 = arith.mulf %66, %243 : vector<2x1xf32>
    %270 = arith.addf %268, %269 : vector<2x1xf32>
    %271 = arith.mulf %67, %246 : vector<2x1xf32>
    %272 = arith.addf %270, %271 : vector<2x1xf32>
    %273 = arith.mulf %65, %241 : vector<2x1xf32>
    %274 = arith.mulf %66, %244 : vector<2x1xf32>
    %275 = arith.addf %273, %274 : vector<2x1xf32>
    %276 = arith.mulf %67, %247 : vector<2x1xf32>
    %277 = arith.addf %275, %276 : vector<2x1xf32>
    %278 = arith.mulf %68, %239 : vector<2x1xf32>
    %279 = arith.mulf %69, %242 : vector<2x1xf32>
    %280 = arith.addf %278, %279 : vector<2x1xf32>
    %281 = arith.mulf %70, %245 : vector<2x1xf32>
    %282 = arith.addf %280, %281 : vector<2x1xf32>
    %283 = arith.mulf %68, %240 : vector<2x1xf32>
    %284 = arith.mulf %69, %243 : vector<2x1xf32>
    %285 = arith.addf %283, %284 : vector<2x1xf32>
    %286 = arith.mulf %70, %246 : vector<2x1xf32>
    %287 = arith.addf %285, %286 : vector<2x1xf32>
    %288 = arith.mulf %68, %241 : vector<2x1xf32>
    %289 = arith.mulf %69, %244 : vector<2x1xf32>
    %290 = arith.addf %288, %289 : vector<2x1xf32>
    %291 = arith.mulf %70, %247 : vector<2x1xf32>
    %292 = arith.addf %290, %291 : vector<2x1xf32>
    %293 = vector.extract_strided_slice %3 {offsets = [0, 3], sizes = [2, 1], strides = [1, 1]} : vector<2x24xf32> to vector<2x1xf32>
    %294 = vector.extract_strided_slice %3 {offsets = [0, 0], sizes = [2, 1], strides = [1, 1]} : vector<2x24xf32> to vector<2x1xf32>
    %295 = arith.subf %293, %294 : vector<2x1xf32>
    %296 = vector.extract_strided_slice %4 {offsets = [0, 3], sizes = [2, 1], strides = [1, 1]} : vector<2x24xf32> to vector<2x1xf32>
    %297 = vector.extract_strided_slice %4 {offsets = [0, 0], sizes = [2, 1], strides = [1, 1]} : vector<2x24xf32> to vector<2x1xf32>
    %298 = arith.subf %296, %297 : vector<2x1xf32>
    %299 = vector.extract_strided_slice %5 {offsets = [0, 3], sizes = [2, 1], strides = [1, 1]} : vector<2x24xf32> to vector<2x1xf32>
    %300 = vector.extract_strided_slice %5 {offsets = [0, 0], sizes = [2, 1], strides = [1, 1]} : vector<2x24xf32> to vector<2x1xf32>
    %301 = arith.subf %299, %300 : vector<2x1xf32>
    %302 = arith.mulf %62, %295 : vector<2x1xf32>
    %303 = arith.mulf %63, %298 : vector<2x1xf32>
    %304 = arith.addf %302, %303 : vector<2x1xf32>
    %305 = arith.mulf %64, %301 : vector<2x1xf32>
    %306 = arith.addf %304, %305 : vector<2x1xf32>
    %307 = arith.addf %306, %72 : vector<2x1xf32>
    %308 = arith.mulf %65, %295 : vector<2x1xf32>
    %309 = arith.mulf %66, %298 : vector<2x1xf32>
    %310 = arith.addf %308, %309 : vector<2x1xf32>
    %311 = arith.mulf %67, %301 : vector<2x1xf32>
    %312 = arith.addf %310, %311 : vector<2x1xf32>
    %313 = arith.addf %312, %74 : vector<2x1xf32>
    %314 = arith.mulf %68, %295 : vector<2x1xf32>
    %315 = arith.mulf %69, %298 : vector<2x1xf32>
    %316 = arith.addf %314, %315 : vector<2x1xf32>
    %317 = arith.mulf %70, %301 : vector<2x1xf32>
    %318 = arith.addf %316, %317 : vector<2x1xf32>
    %319 = arith.addf %318, %76 : vector<2x1xf32>
    %320 = vector.extract_strided_slice %28 {offsets = [0, 4], sizes = [2, 1], strides = [1, 1]} : vector<2x24xf32> to vector<2x1xf32>
    %321 = vector.extract_strided_slice %32 {offsets = [0, 4], sizes = [2, 1], strides = [1, 1]} : vector<2x24xf32> to vector<2x1xf32>
    %322 = vector.extract_strided_slice %36 {offsets = [0, 4], sizes = [2, 1], strides = [1, 1]} : vector<2x24xf32> to vector<2x1xf32>
    %323 = vector.extract_strided_slice %40 {offsets = [0, 4], sizes = [2, 1], strides = [1, 1]} : vector<2x24xf32> to vector<2x1xf32>
    %324 = vector.extract_strided_slice %43 {offsets = [0, 4], sizes = [2, 1], strides = [1, 1]} : vector<2x24xf32> to vector<2x1xf32>
    %325 = vector.extract_strided_slice %47 {offsets = [0, 4], sizes = [2, 1], strides = [1, 1]} : vector<2x24xf32> to vector<2x1xf32>
    %326 = vector.extract_strided_slice %51 {offsets = [0, 4], sizes = [2, 1], strides = [1, 1]} : vector<2x24xf32> to vector<2x1xf32>
    %327 = vector.extract_strided_slice %55 {offsets = [0, 4], sizes = [2, 1], strides = [1, 1]} : vector<2x24xf32> to vector<2x1xf32>
    %328 = vector.extract_strided_slice %58 {offsets = [0, 4], sizes = [2, 1], strides = [1, 1]} : vector<2x24xf32> to vector<2x1xf32>
    %329 = arith.mulf %90, %320 : vector<2x1xf32>
    %330 = arith.mulf %95, %323 : vector<2x1xf32>
    %331 = arith.addf %329, %330 : vector<2x1xf32>
    %332 = arith.mulf %100, %326 : vector<2x1xf32>
    %333 = arith.addf %331, %332 : vector<2x1xf32>
    %334 = arith.mulf %90, %321 : vector<2x1xf32>
    %335 = arith.mulf %95, %324 : vector<2x1xf32>
    %336 = arith.addf %334, %335 : vector<2x1xf32>
    %337 = arith.mulf %100, %327 : vector<2x1xf32>
    %338 = arith.addf %336, %337 : vector<2x1xf32>
    %339 = arith.mulf %90, %322 : vector<2x1xf32>
    %340 = arith.mulf %95, %325 : vector<2x1xf32>
    %341 = arith.addf %339, %340 : vector<2x1xf32>
    %342 = arith.mulf %100, %328 : vector<2x1xf32>
    %343 = arith.addf %341, %342 : vector<2x1xf32>
    %344 = arith.mulf %105, %320 : vector<2x1xf32>
    %345 = arith.mulf %110, %323 : vector<2x1xf32>
    %346 = arith.addf %344, %345 : vector<2x1xf32>
    %347 = arith.mulf %115, %326 : vector<2x1xf32>
    %348 = arith.addf %346, %347 : vector<2x1xf32>
    %349 = arith.mulf %105, %321 : vector<2x1xf32>
    %350 = arith.mulf %110, %324 : vector<2x1xf32>
    %351 = arith.addf %349, %350 : vector<2x1xf32>
    %352 = arith.mulf %115, %327 : vector<2x1xf32>
    %353 = arith.addf %351, %352 : vector<2x1xf32>
    %354 = arith.mulf %105, %322 : vector<2x1xf32>
    %355 = arith.mulf %110, %325 : vector<2x1xf32>
    %356 = arith.addf %354, %355 : vector<2x1xf32>
    %357 = arith.mulf %115, %328 : vector<2x1xf32>
    %358 = arith.addf %356, %357 : vector<2x1xf32>
    %359 = arith.mulf %120, %320 : vector<2x1xf32>
    %360 = arith.mulf %125, %323 : vector<2x1xf32>
    %361 = arith.addf %359, %360 : vector<2x1xf32>
    %362 = arith.mulf %130, %326 : vector<2x1xf32>
    %363 = arith.addf %361, %362 : vector<2x1xf32>
    %364 = arith.mulf %120, %321 : vector<2x1xf32>
    %365 = arith.mulf %125, %324 : vector<2x1xf32>
    %366 = arith.addf %364, %365 : vector<2x1xf32>
    %367 = arith.mulf %130, %327 : vector<2x1xf32>
    %368 = arith.addf %366, %367 : vector<2x1xf32>
    %369 = arith.mulf %120, %322 : vector<2x1xf32>
    %370 = arith.mulf %125, %325 : vector<2x1xf32>
    %371 = arith.addf %369, %370 : vector<2x1xf32>
    %372 = arith.mulf %130, %328 : vector<2x1xf32>
    %373 = arith.addf %371, %372 : vector<2x1xf32>
    %374 = vector.extract_strided_slice %3 {offsets = [0, 4], sizes = [2, 1], strides = [1, 1]} : vector<2x24xf32> to vector<2x1xf32>
    %375 = vector.extract_strided_slice %3 {offsets = [0, 1], sizes = [2, 1], strides = [1, 1]} : vector<2x24xf32> to vector<2x1xf32>
    %376 = arith.subf %374, %375 : vector<2x1xf32>
    %377 = vector.extract_strided_slice %4 {offsets = [0, 4], sizes = [2, 1], strides = [1, 1]} : vector<2x24xf32> to vector<2x1xf32>
    %378 = vector.extract_strided_slice %4 {offsets = [0, 1], sizes = [2, 1], strides = [1, 1]} : vector<2x24xf32> to vector<2x1xf32>
    %379 = arith.subf %377, %378 : vector<2x1xf32>
    %380 = vector.extract_strided_slice %5 {offsets = [0, 4], sizes = [2, 1], strides = [1, 1]} : vector<2x24xf32> to vector<2x1xf32>
    %381 = vector.extract_strided_slice %5 {offsets = [0, 1], sizes = [2, 1], strides = [1, 1]} : vector<2x24xf32> to vector<2x1xf32>
    %382 = arith.subf %380, %381 : vector<2x1xf32>
    %383 = arith.mulf %90, %376 : vector<2x1xf32>
    %384 = arith.mulf %95, %379 : vector<2x1xf32>
    %385 = arith.addf %383, %384 : vector<2x1xf32>
    %386 = arith.mulf %100, %382 : vector<2x1xf32>
    %387 = arith.addf %385, %386 : vector<2x1xf32>
    %388 = arith.addf %387, %145 : vector<2x1xf32>
    %389 = arith.mulf %105, %376 : vector<2x1xf32>
    %390 = arith.mulf %110, %379 : vector<2x1xf32>
    %391 = arith.addf %389, %390 : vector<2x1xf32>
    %392 = arith.mulf %115, %382 : vector<2x1xf32>
    %393 = arith.addf %391, %392 : vector<2x1xf32>
    %394 = arith.addf %393, %151 : vector<2x1xf32>
    %395 = arith.mulf %120, %376 : vector<2x1xf32>
    %396 = arith.mulf %125, %379 : vector<2x1xf32>
    %397 = arith.addf %395, %396 : vector<2x1xf32>
    %398 = arith.mulf %130, %382 : vector<2x1xf32>
    %399 = arith.addf %397, %398 : vector<2x1xf32>
    %400 = arith.addf %399, %157 : vector<2x1xf32>
    %401 = vector.extract_strided_slice %28 {offsets = [0, 5], sizes = [2, 1], strides = [1, 1]} : vector<2x24xf32> to vector<2x1xf32>
    %402 = vector.extract_strided_slice %32 {offsets = [0, 5], sizes = [2, 1], strides = [1, 1]} : vector<2x24xf32> to vector<2x1xf32>
    %403 = vector.extract_strided_slice %36 {offsets = [0, 5], sizes = [2, 1], strides = [1, 1]} : vector<2x24xf32> to vector<2x1xf32>
    %404 = vector.extract_strided_slice %40 {offsets = [0, 5], sizes = [2, 1], strides = [1, 1]} : vector<2x24xf32> to vector<2x1xf32>
    %405 = vector.extract_strided_slice %43 {offsets = [0, 5], sizes = [2, 1], strides = [1, 1]} : vector<2x24xf32> to vector<2x1xf32>
    %406 = vector.extract_strided_slice %47 {offsets = [0, 5], sizes = [2, 1], strides = [1, 1]} : vector<2x24xf32> to vector<2x1xf32>
    %407 = vector.extract_strided_slice %51 {offsets = [0, 5], sizes = [2, 1], strides = [1, 1]} : vector<2x24xf32> to vector<2x1xf32>
    %408 = vector.extract_strided_slice %55 {offsets = [0, 5], sizes = [2, 1], strides = [1, 1]} : vector<2x24xf32> to vector<2x1xf32>
    %409 = vector.extract_strided_slice %58 {offsets = [0, 5], sizes = [2, 1], strides = [1, 1]} : vector<2x24xf32> to vector<2x1xf32>
    %410 = arith.mulf %171, %401 : vector<2x1xf32>
    %411 = arith.mulf %176, %404 : vector<2x1xf32>
    %412 = arith.addf %410, %411 : vector<2x1xf32>
    %413 = arith.mulf %181, %407 : vector<2x1xf32>
    %414 = arith.addf %412, %413 : vector<2x1xf32>
    %415 = arith.mulf %171, %402 : vector<2x1xf32>
    %416 = arith.mulf %176, %405 : vector<2x1xf32>
    %417 = arith.addf %415, %416 : vector<2x1xf32>
    %418 = arith.mulf %181, %408 : vector<2x1xf32>
    %419 = arith.addf %417, %418 : vector<2x1xf32>
    %420 = arith.mulf %171, %403 : vector<2x1xf32>
    %421 = arith.mulf %176, %406 : vector<2x1xf32>
    %422 = arith.addf %420, %421 : vector<2x1xf32>
    %423 = arith.mulf %181, %409 : vector<2x1xf32>
    %424 = arith.addf %422, %423 : vector<2x1xf32>
    %425 = arith.mulf %186, %401 : vector<2x1xf32>
    %426 = arith.mulf %191, %404 : vector<2x1xf32>
    %427 = arith.addf %425, %426 : vector<2x1xf32>
    %428 = arith.mulf %196, %407 : vector<2x1xf32>
    %429 = arith.addf %427, %428 : vector<2x1xf32>
    %430 = arith.mulf %186, %402 : vector<2x1xf32>
    %431 = arith.mulf %191, %405 : vector<2x1xf32>
    %432 = arith.addf %430, %431 : vector<2x1xf32>
    %433 = arith.mulf %196, %408 : vector<2x1xf32>
    %434 = arith.addf %432, %433 : vector<2x1xf32>
    %435 = arith.mulf %186, %403 : vector<2x1xf32>
    %436 = arith.mulf %191, %406 : vector<2x1xf32>
    %437 = arith.addf %435, %436 : vector<2x1xf32>
    %438 = arith.mulf %196, %409 : vector<2x1xf32>
    %439 = arith.addf %437, %438 : vector<2x1xf32>
    %440 = arith.mulf %201, %401 : vector<2x1xf32>
    %441 = arith.mulf %206, %404 : vector<2x1xf32>
    %442 = arith.addf %440, %441 : vector<2x1xf32>
    %443 = arith.mulf %211, %407 : vector<2x1xf32>
    %444 = arith.addf %442, %443 : vector<2x1xf32>
    %445 = arith.mulf %201, %402 : vector<2x1xf32>
    %446 = arith.mulf %206, %405 : vector<2x1xf32>
    %447 = arith.addf %445, %446 : vector<2x1xf32>
    %448 = arith.mulf %211, %408 : vector<2x1xf32>
    %449 = arith.addf %447, %448 : vector<2x1xf32>
    %450 = arith.mulf %201, %403 : vector<2x1xf32>
    %451 = arith.mulf %206, %406 : vector<2x1xf32>
    %452 = arith.addf %450, %451 : vector<2x1xf32>
    %453 = arith.mulf %211, %409 : vector<2x1xf32>
    %454 = arith.addf %452, %453 : vector<2x1xf32>
    %455 = vector.extract_strided_slice %3 {offsets = [0, 5], sizes = [2, 1], strides = [1, 1]} : vector<2x24xf32> to vector<2x1xf32>
    %456 = vector.extract_strided_slice %3 {offsets = [0, 2], sizes = [2, 1], strides = [1, 1]} : vector<2x24xf32> to vector<2x1xf32>
    %457 = arith.subf %455, %456 : vector<2x1xf32>
    %458 = vector.extract_strided_slice %4 {offsets = [0, 5], sizes = [2, 1], strides = [1, 1]} : vector<2x24xf32> to vector<2x1xf32>
    %459 = vector.extract_strided_slice %4 {offsets = [0, 2], sizes = [2, 1], strides = [1, 1]} : vector<2x24xf32> to vector<2x1xf32>
    %460 = arith.subf %458, %459 : vector<2x1xf32>
    %461 = vector.extract_strided_slice %5 {offsets = [0, 5], sizes = [2, 1], strides = [1, 1]} : vector<2x24xf32> to vector<2x1xf32>
    %462 = vector.extract_strided_slice %5 {offsets = [0, 2], sizes = [2, 1], strides = [1, 1]} : vector<2x24xf32> to vector<2x1xf32>
    %463 = arith.subf %461, %462 : vector<2x1xf32>
    %464 = arith.mulf %171, %457 : vector<2x1xf32>
    %465 = arith.mulf %176, %460 : vector<2x1xf32>
    %466 = arith.addf %464, %465 : vector<2x1xf32>
    %467 = arith.mulf %181, %463 : vector<2x1xf32>
    %468 = arith.addf %466, %467 : vector<2x1xf32>
    %469 = arith.addf %468, %226 : vector<2x1xf32>
    %470 = arith.mulf %186, %457 : vector<2x1xf32>
    %471 = arith.mulf %191, %460 : vector<2x1xf32>
    %472 = arith.addf %470, %471 : vector<2x1xf32>
    %473 = arith.mulf %196, %463 : vector<2x1xf32>
    %474 = arith.addf %472, %473 : vector<2x1xf32>
    %475 = arith.addf %474, %232 : vector<2x1xf32>
    %476 = arith.mulf %201, %457 : vector<2x1xf32>
    %477 = arith.mulf %206, %460 : vector<2x1xf32>
    %478 = arith.addf %476, %477 : vector<2x1xf32>
    %479 = arith.mulf %211, %463 : vector<2x1xf32>
    %480 = arith.addf %478, %479 : vector<2x1xf32>
    %481 = arith.addf %480, %238 : vector<2x1xf32>
    %482 = vector.extract_strided_slice %28 {offsets = [0, 6], sizes = [2, 1], strides = [1, 1]} : vector<2x24xf32> to vector<2x1xf32>
    %483 = vector.extract_strided_slice %32 {offsets = [0, 6], sizes = [2, 1], strides = [1, 1]} : vector<2x24xf32> to vector<2x1xf32>
    %484 = vector.extract_strided_slice %36 {offsets = [0, 6], sizes = [2, 1], strides = [1, 1]} : vector<2x24xf32> to vector<2x1xf32>
    %485 = vector.extract_strided_slice %40 {offsets = [0, 6], sizes = [2, 1], strides = [1, 1]} : vector<2x24xf32> to vector<2x1xf32>
    %486 = vector.extract_strided_slice %43 {offsets = [0, 6], sizes = [2, 1], strides = [1, 1]} : vector<2x24xf32> to vector<2x1xf32>
    %487 = vector.extract_strided_slice %47 {offsets = [0, 6], sizes = [2, 1], strides = [1, 1]} : vector<2x24xf32> to vector<2x1xf32>
    %488 = vector.extract_strided_slice %51 {offsets = [0, 6], sizes = [2, 1], strides = [1, 1]} : vector<2x24xf32> to vector<2x1xf32>
    %489 = vector.extract_strided_slice %55 {offsets = [0, 6], sizes = [2, 1], strides = [1, 1]} : vector<2x24xf32> to vector<2x1xf32>
    %490 = vector.extract_strided_slice %58 {offsets = [0, 6], sizes = [2, 1], strides = [1, 1]} : vector<2x24xf32> to vector<2x1xf32>
    %491 = arith.mulf %252, %482 : vector<2x1xf32>
    %492 = arith.mulf %257, %485 : vector<2x1xf32>
    %493 = arith.addf %491, %492 : vector<2x1xf32>
    %494 = arith.mulf %262, %488 : vector<2x1xf32>
    %495 = arith.addf %493, %494 : vector<2x1xf32>
    %496 = arith.mulf %252, %483 : vector<2x1xf32>
    %497 = arith.mulf %257, %486 : vector<2x1xf32>
    %498 = arith.addf %496, %497 : vector<2x1xf32>
    %499 = arith.mulf %262, %489 : vector<2x1xf32>
    %500 = arith.addf %498, %499 : vector<2x1xf32>
    %501 = arith.mulf %252, %484 : vector<2x1xf32>
    %502 = arith.mulf %257, %487 : vector<2x1xf32>
    %503 = arith.addf %501, %502 : vector<2x1xf32>
    %504 = arith.mulf %262, %490 : vector<2x1xf32>
    %505 = arith.addf %503, %504 : vector<2x1xf32>
    %506 = arith.mulf %267, %482 : vector<2x1xf32>
    %507 = arith.mulf %272, %485 : vector<2x1xf32>
    %508 = arith.addf %506, %507 : vector<2x1xf32>
    %509 = arith.mulf %277, %488 : vector<2x1xf32>
    %510 = arith.addf %508, %509 : vector<2x1xf32>
    %511 = arith.mulf %267, %483 : vector<2x1xf32>
    %512 = arith.mulf %272, %486 : vector<2x1xf32>
    %513 = arith.addf %511, %512 : vector<2x1xf32>
    %514 = arith.mulf %277, %489 : vector<2x1xf32>
    %515 = arith.addf %513, %514 : vector<2x1xf32>
    %516 = arith.mulf %267, %484 : vector<2x1xf32>
    %517 = arith.mulf %272, %487 : vector<2x1xf32>
    %518 = arith.addf %516, %517 : vector<2x1xf32>
    %519 = arith.mulf %277, %490 : vector<2x1xf32>
    %520 = arith.addf %518, %519 : vector<2x1xf32>
    %521 = arith.mulf %282, %482 : vector<2x1xf32>
    %522 = arith.mulf %287, %485 : vector<2x1xf32>
    %523 = arith.addf %521, %522 : vector<2x1xf32>
    %524 = arith.mulf %292, %488 : vector<2x1xf32>
    %525 = arith.addf %523, %524 : vector<2x1xf32>
    %526 = arith.mulf %282, %483 : vector<2x1xf32>
    %527 = arith.mulf %287, %486 : vector<2x1xf32>
    %528 = arith.addf %526, %527 : vector<2x1xf32>
    %529 = arith.mulf %292, %489 : vector<2x1xf32>
    %530 = arith.addf %528, %529 : vector<2x1xf32>
    %531 = arith.mulf %282, %484 : vector<2x1xf32>
    %532 = arith.mulf %287, %487 : vector<2x1xf32>
    %533 = arith.addf %531, %532 : vector<2x1xf32>
    %534 = arith.mulf %292, %490 : vector<2x1xf32>
    %535 = arith.addf %533, %534 : vector<2x1xf32>
    %536 = vector.extract_strided_slice %3 {offsets = [0, 6], sizes = [2, 1], strides = [1, 1]} : vector<2x24xf32> to vector<2x1xf32>
    %537 = vector.extract_strided_slice %3 {offsets = [0, 3], sizes = [2, 1], strides = [1, 1]} : vector<2x24xf32> to vector<2x1xf32>
    %538 = arith.subf %536, %537 : vector<2x1xf32>
    %539 = vector.extract_strided_slice %4 {offsets = [0, 6], sizes = [2, 1], strides = [1, 1]} : vector<2x24xf32> to vector<2x1xf32>
    %540 = vector.extract_strided_slice %4 {offsets = [0, 3], sizes = [2, 1], strides = [1, 1]} : vector<2x24xf32> to vector<2x1xf32>
    %541 = arith.subf %539, %540 : vector<2x1xf32>
    %542 = vector.extract_strided_slice %5 {offsets = [0, 6], sizes = [2, 1], strides = [1, 1]} : vector<2x24xf32> to vector<2x1xf32>
    %543 = vector.extract_strided_slice %5 {offsets = [0, 3], sizes = [2, 1], strides = [1, 1]} : vector<2x24xf32> to vector<2x1xf32>
    %544 = arith.subf %542, %543 : vector<2x1xf32>
    %545 = arith.mulf %252, %538 : vector<2x1xf32>
    %546 = arith.mulf %257, %541 : vector<2x1xf32>
    %547 = arith.addf %545, %546 : vector<2x1xf32>
    %548 = arith.mulf %262, %544 : vector<2x1xf32>
    %549 = arith.addf %547, %548 : vector<2x1xf32>
    %550 = arith.addf %549, %307 : vector<2x1xf32>
    %551 = arith.mulf %267, %538 : vector<2x1xf32>
    %552 = arith.mulf %272, %541 : vector<2x1xf32>
    %553 = arith.addf %551, %552 : vector<2x1xf32>
    %554 = arith.mulf %277, %544 : vector<2x1xf32>
    %555 = arith.addf %553, %554 : vector<2x1xf32>
    %556 = arith.addf %555, %313 : vector<2x1xf32>
    %557 = arith.mulf %282, %538 : vector<2x1xf32>
    %558 = arith.mulf %287, %541 : vector<2x1xf32>
    %559 = arith.addf %557, %558 : vector<2x1xf32>
    %560 = arith.mulf %292, %544 : vector<2x1xf32>
    %561 = arith.addf %559, %560 : vector<2x1xf32>
    %562 = arith.addf %561, %319 : vector<2x1xf32>
    %563 = vector.extract_strided_slice %28 {offsets = [0, 7], sizes = [2, 1], strides = [1, 1]} : vector<2x24xf32> to vector<2x1xf32>
    %564 = vector.extract_strided_slice %32 {offsets = [0, 7], sizes = [2, 1], strides = [1, 1]} : vector<2x24xf32> to vector<2x1xf32>
    %565 = vector.extract_strided_slice %36 {offsets = [0, 7], sizes = [2, 1], strides = [1, 1]} : vector<2x24xf32> to vector<2x1xf32>
    %566 = vector.extract_strided_slice %40 {offsets = [0, 7], sizes = [2, 1], strides = [1, 1]} : vector<2x24xf32> to vector<2x1xf32>
    %567 = vector.extract_strided_slice %43 {offsets = [0, 7], sizes = [2, 1], strides = [1, 1]} : vector<2x24xf32> to vector<2x1xf32>
    %568 = vector.extract_strided_slice %47 {offsets = [0, 7], sizes = [2, 1], strides = [1, 1]} : vector<2x24xf32> to vector<2x1xf32>
    %569 = vector.extract_strided_slice %51 {offsets = [0, 7], sizes = [2, 1], strides = [1, 1]} : vector<2x24xf32> to vector<2x1xf32>
    %570 = vector.extract_strided_slice %55 {offsets = [0, 7], sizes = [2, 1], strides = [1, 1]} : vector<2x24xf32> to vector<2x1xf32>
    %571 = vector.extract_strided_slice %58 {offsets = [0, 7], sizes = [2, 1], strides = [1, 1]} : vector<2x24xf32> to vector<2x1xf32>
    %572 = arith.mulf %333, %563 : vector<2x1xf32>
    %573 = arith.mulf %338, %566 : vector<2x1xf32>
    %574 = arith.addf %572, %573 : vector<2x1xf32>
    %575 = arith.mulf %343, %569 : vector<2x1xf32>
    %576 = arith.addf %574, %575 : vector<2x1xf32>
    %577 = arith.mulf %333, %564 : vector<2x1xf32>
    %578 = arith.mulf %338, %567 : vector<2x1xf32>
    %579 = arith.addf %577, %578 : vector<2x1xf32>
    %580 = arith.mulf %343, %570 : vector<2x1xf32>
    %581 = arith.addf %579, %580 : vector<2x1xf32>
    %582 = arith.mulf %333, %565 : vector<2x1xf32>
    %583 = arith.mulf %338, %568 : vector<2x1xf32>
    %584 = arith.addf %582, %583 : vector<2x1xf32>
    %585 = arith.mulf %343, %571 : vector<2x1xf32>
    %586 = arith.addf %584, %585 : vector<2x1xf32>
    %587 = arith.mulf %348, %563 : vector<2x1xf32>
    %588 = arith.mulf %353, %566 : vector<2x1xf32>
    %589 = arith.addf %587, %588 : vector<2x1xf32>
    %590 = arith.mulf %358, %569 : vector<2x1xf32>
    %591 = arith.addf %589, %590 : vector<2x1xf32>
    %592 = arith.mulf %348, %564 : vector<2x1xf32>
    %593 = arith.mulf %353, %567 : vector<2x1xf32>
    %594 = arith.addf %592, %593 : vector<2x1xf32>
    %595 = arith.mulf %358, %570 : vector<2x1xf32>
    %596 = arith.addf %594, %595 : vector<2x1xf32>
    %597 = arith.mulf %348, %565 : vector<2x1xf32>
    %598 = arith.mulf %353, %568 : vector<2x1xf32>
    %599 = arith.addf %597, %598 : vector<2x1xf32>
    %600 = arith.mulf %358, %571 : vector<2x1xf32>
    %601 = arith.addf %599, %600 : vector<2x1xf32>
    %602 = arith.mulf %363, %563 : vector<2x1xf32>
    %603 = arith.mulf %368, %566 : vector<2x1xf32>
    %604 = arith.addf %602, %603 : vector<2x1xf32>
    %605 = arith.mulf %373, %569 : vector<2x1xf32>
    %606 = arith.addf %604, %605 : vector<2x1xf32>
    %607 = arith.mulf %363, %564 : vector<2x1xf32>
    %608 = arith.mulf %368, %567 : vector<2x1xf32>
    %609 = arith.addf %607, %608 : vector<2x1xf32>
    %610 = arith.mulf %373, %570 : vector<2x1xf32>
    %611 = arith.addf %609, %610 : vector<2x1xf32>
    %612 = arith.mulf %363, %565 : vector<2x1xf32>
    %613 = arith.mulf %368, %568 : vector<2x1xf32>
    %614 = arith.addf %612, %613 : vector<2x1xf32>
    %615 = arith.mulf %373, %571 : vector<2x1xf32>
    %616 = arith.addf %614, %615 : vector<2x1xf32>
    %617 = vector.extract_strided_slice %3 {offsets = [0, 7], sizes = [2, 1], strides = [1, 1]} : vector<2x24xf32> to vector<2x1xf32>
    %618 = vector.extract_strided_slice %3 {offsets = [0, 4], sizes = [2, 1], strides = [1, 1]} : vector<2x24xf32> to vector<2x1xf32>
    %619 = arith.subf %617, %618 : vector<2x1xf32>
    %620 = vector.extract_strided_slice %4 {offsets = [0, 7], sizes = [2, 1], strides = [1, 1]} : vector<2x24xf32> to vector<2x1xf32>
    %621 = vector.extract_strided_slice %4 {offsets = [0, 4], sizes = [2, 1], strides = [1, 1]} : vector<2x24xf32> to vector<2x1xf32>
    %622 = arith.subf %620, %621 : vector<2x1xf32>
    %623 = vector.extract_strided_slice %5 {offsets = [0, 7], sizes = [2, 1], strides = [1, 1]} : vector<2x24xf32> to vector<2x1xf32>
    %624 = vector.extract_strided_slice %5 {offsets = [0, 4], sizes = [2, 1], strides = [1, 1]} : vector<2x24xf32> to vector<2x1xf32>
    %625 = arith.subf %623, %624 : vector<2x1xf32>
    %626 = arith.mulf %333, %619 : vector<2x1xf32>
    %627 = arith.mulf %338, %622 : vector<2x1xf32>
    %628 = arith.addf %626, %627 : vector<2x1xf32>
    %629 = arith.mulf %343, %625 : vector<2x1xf32>
    %630 = arith.addf %628, %629 : vector<2x1xf32>
    %631 = arith.addf %630, %388 : vector<2x1xf32>
    %632 = arith.mulf %348, %619 : vector<2x1xf32>
    %633 = arith.mulf %353, %622 : vector<2x1xf32>
    %634 = arith.addf %632, %633 : vector<2x1xf32>
    %635 = arith.mulf %358, %625 : vector<2x1xf32>
    %636 = arith.addf %634, %635 : vector<2x1xf32>
    %637 = arith.addf %636, %394 : vector<2x1xf32>
    %638 = arith.mulf %363, %619 : vector<2x1xf32>
    %639 = arith.mulf %368, %622 : vector<2x1xf32>
    %640 = arith.addf %638, %639 : vector<2x1xf32>
    %641 = arith.mulf %373, %625 : vector<2x1xf32>
    %642 = arith.addf %640, %641 : vector<2x1xf32>
    %643 = arith.addf %642, %400 : vector<2x1xf32>
    %644 = vector.extract_strided_slice %28 {offsets = [0, 8], sizes = [2, 1], strides = [1, 1]} : vector<2x24xf32> to vector<2x1xf32>
    %645 = vector.extract_strided_slice %32 {offsets = [0, 8], sizes = [2, 1], strides = [1, 1]} : vector<2x24xf32> to vector<2x1xf32>
    %646 = vector.extract_strided_slice %36 {offsets = [0, 8], sizes = [2, 1], strides = [1, 1]} : vector<2x24xf32> to vector<2x1xf32>
    %647 = vector.extract_strided_slice %40 {offsets = [0, 8], sizes = [2, 1], strides = [1, 1]} : vector<2x24xf32> to vector<2x1xf32>
    %648 = vector.extract_strided_slice %43 {offsets = [0, 8], sizes = [2, 1], strides = [1, 1]} : vector<2x24xf32> to vector<2x1xf32>
    %649 = vector.extract_strided_slice %47 {offsets = [0, 8], sizes = [2, 1], strides = [1, 1]} : vector<2x24xf32> to vector<2x1xf32>
    %650 = vector.extract_strided_slice %51 {offsets = [0, 8], sizes = [2, 1], strides = [1, 1]} : vector<2x24xf32> to vector<2x1xf32>
    %651 = vector.extract_strided_slice %55 {offsets = [0, 8], sizes = [2, 1], strides = [1, 1]} : vector<2x24xf32> to vector<2x1xf32>
    %652 = vector.extract_strided_slice %58 {offsets = [0, 8], sizes = [2, 1], strides = [1, 1]} : vector<2x24xf32> to vector<2x1xf32>
    %653 = arith.mulf %414, %644 : vector<2x1xf32>
    %654 = arith.mulf %419, %647 : vector<2x1xf32>
    %655 = arith.addf %653, %654 : vector<2x1xf32>
    %656 = arith.mulf %424, %650 : vector<2x1xf32>
    %657 = arith.addf %655, %656 : vector<2x1xf32>
    %658 = arith.mulf %414, %645 : vector<2x1xf32>
    %659 = arith.mulf %419, %648 : vector<2x1xf32>
    %660 = arith.addf %658, %659 : vector<2x1xf32>
    %661 = arith.mulf %424, %651 : vector<2x1xf32>
    %662 = arith.addf %660, %661 : vector<2x1xf32>
    %663 = arith.mulf %414, %646 : vector<2x1xf32>
    %664 = arith.mulf %419, %649 : vector<2x1xf32>
    %665 = arith.addf %663, %664 : vector<2x1xf32>
    %666 = arith.mulf %424, %652 : vector<2x1xf32>
    %667 = arith.addf %665, %666 : vector<2x1xf32>
    %668 = arith.mulf %429, %644 : vector<2x1xf32>
    %669 = arith.mulf %434, %647 : vector<2x1xf32>
    %670 = arith.addf %668, %669 : vector<2x1xf32>
    %671 = arith.mulf %439, %650 : vector<2x1xf32>
    %672 = arith.addf %670, %671 : vector<2x1xf32>
    %673 = arith.mulf %429, %645 : vector<2x1xf32>
    %674 = arith.mulf %434, %648 : vector<2x1xf32>
    %675 = arith.addf %673, %674 : vector<2x1xf32>
    %676 = arith.mulf %439, %651 : vector<2x1xf32>
    %677 = arith.addf %675, %676 : vector<2x1xf32>
    %678 = arith.mulf %429, %646 : vector<2x1xf32>
    %679 = arith.mulf %434, %649 : vector<2x1xf32>
    %680 = arith.addf %678, %679 : vector<2x1xf32>
    %681 = arith.mulf %439, %652 : vector<2x1xf32>
    %682 = arith.addf %680, %681 : vector<2x1xf32>
    %683 = arith.mulf %444, %644 : vector<2x1xf32>
    %684 = arith.mulf %449, %647 : vector<2x1xf32>
    %685 = arith.addf %683, %684 : vector<2x1xf32>
    %686 = arith.mulf %454, %650 : vector<2x1xf32>
    %687 = arith.addf %685, %686 : vector<2x1xf32>
    %688 = arith.mulf %444, %645 : vector<2x1xf32>
    %689 = arith.mulf %449, %648 : vector<2x1xf32>
    %690 = arith.addf %688, %689 : vector<2x1xf32>
    %691 = arith.mulf %454, %651 : vector<2x1xf32>
    %692 = arith.addf %690, %691 : vector<2x1xf32>
    %693 = arith.mulf %444, %646 : vector<2x1xf32>
    %694 = arith.mulf %449, %649 : vector<2x1xf32>
    %695 = arith.addf %693, %694 : vector<2x1xf32>
    %696 = arith.mulf %454, %652 : vector<2x1xf32>
    %697 = arith.addf %695, %696 : vector<2x1xf32>
    %698 = vector.extract_strided_slice %3 {offsets = [0, 8], sizes = [2, 1], strides = [1, 1]} : vector<2x24xf32> to vector<2x1xf32>
    %699 = vector.extract_strided_slice %3 {offsets = [0, 5], sizes = [2, 1], strides = [1, 1]} : vector<2x24xf32> to vector<2x1xf32>
    %700 = arith.subf %698, %699 : vector<2x1xf32>
    %701 = vector.extract_strided_slice %4 {offsets = [0, 8], sizes = [2, 1], strides = [1, 1]} : vector<2x24xf32> to vector<2x1xf32>
    %702 = vector.extract_strided_slice %4 {offsets = [0, 5], sizes = [2, 1], strides = [1, 1]} : vector<2x24xf32> to vector<2x1xf32>
    %703 = arith.subf %701, %702 : vector<2x1xf32>
    %704 = vector.extract_strided_slice %5 {offsets = [0, 8], sizes = [2, 1], strides = [1, 1]} : vector<2x24xf32> to vector<2x1xf32>
    %705 = vector.extract_strided_slice %5 {offsets = [0, 5], sizes = [2, 1], strides = [1, 1]} : vector<2x24xf32> to vector<2x1xf32>
    %706 = arith.subf %704, %705 : vector<2x1xf32>
    %707 = arith.mulf %414, %700 : vector<2x1xf32>
    %708 = arith.mulf %419, %703 : vector<2x1xf32>
    %709 = arith.addf %707, %708 : vector<2x1xf32>
    %710 = arith.mulf %424, %706 : vector<2x1xf32>
    %711 = arith.addf %709, %710 : vector<2x1xf32>
    %712 = arith.addf %711, %469 : vector<2x1xf32>
    %713 = arith.mulf %429, %700 : vector<2x1xf32>
    %714 = arith.mulf %434, %703 : vector<2x1xf32>
    %715 = arith.addf %713, %714 : vector<2x1xf32>
    %716 = arith.mulf %439, %706 : vector<2x1xf32>
    %717 = arith.addf %715, %716 : vector<2x1xf32>
    %718 = arith.addf %717, %475 : vector<2x1xf32>
    %719 = arith.mulf %444, %700 : vector<2x1xf32>
    %720 = arith.mulf %449, %703 : vector<2x1xf32>
    %721 = arith.addf %719, %720 : vector<2x1xf32>
    %722 = arith.mulf %454, %706 : vector<2x1xf32>
    %723 = arith.addf %721, %722 : vector<2x1xf32>
    %724 = arith.addf %723, %481 : vector<2x1xf32>
    %725 = vector.extract_strided_slice %28 {offsets = [0, 9], sizes = [2, 1], strides = [1, 1]} : vector<2x24xf32> to vector<2x1xf32>
    %726 = vector.extract_strided_slice %32 {offsets = [0, 9], sizes = [2, 1], strides = [1, 1]} : vector<2x24xf32> to vector<2x1xf32>
    %727 = vector.extract_strided_slice %36 {offsets = [0, 9], sizes = [2, 1], strides = [1, 1]} : vector<2x24xf32> to vector<2x1xf32>
    %728 = vector.extract_strided_slice %40 {offsets = [0, 9], sizes = [2, 1], strides = [1, 1]} : vector<2x24xf32> to vector<2x1xf32>
    %729 = vector.extract_strided_slice %43 {offsets = [0, 9], sizes = [2, 1], strides = [1, 1]} : vector<2x24xf32> to vector<2x1xf32>
    %730 = vector.extract_strided_slice %47 {offsets = [0, 9], sizes = [2, 1], strides = [1, 1]} : vector<2x24xf32> to vector<2x1xf32>
    %731 = vector.extract_strided_slice %51 {offsets = [0, 9], sizes = [2, 1], strides = [1, 1]} : vector<2x24xf32> to vector<2x1xf32>
    %732 = vector.extract_strided_slice %55 {offsets = [0, 9], sizes = [2, 1], strides = [1, 1]} : vector<2x24xf32> to vector<2x1xf32>
    %733 = vector.extract_strided_slice %58 {offsets = [0, 9], sizes = [2, 1], strides = [1, 1]} : vector<2x24xf32> to vector<2x1xf32>
    %734 = arith.mulf %495, %725 : vector<2x1xf32>
    %735 = arith.mulf %500, %728 : vector<2x1xf32>
    %736 = arith.addf %734, %735 : vector<2x1xf32>
    %737 = arith.mulf %505, %731 : vector<2x1xf32>
    %738 = arith.addf %736, %737 : vector<2x1xf32>
    %739 = arith.mulf %495, %726 : vector<2x1xf32>
    %740 = arith.mulf %500, %729 : vector<2x1xf32>
    %741 = arith.addf %739, %740 : vector<2x1xf32>
    %742 = arith.mulf %505, %732 : vector<2x1xf32>
    %743 = arith.addf %741, %742 : vector<2x1xf32>
    %744 = arith.mulf %495, %727 : vector<2x1xf32>
    %745 = arith.mulf %500, %730 : vector<2x1xf32>
    %746 = arith.addf %744, %745 : vector<2x1xf32>
    %747 = arith.mulf %505, %733 : vector<2x1xf32>
    %748 = arith.addf %746, %747 : vector<2x1xf32>
    %749 = arith.mulf %510, %725 : vector<2x1xf32>
    %750 = arith.mulf %515, %728 : vector<2x1xf32>
    %751 = arith.addf %749, %750 : vector<2x1xf32>
    %752 = arith.mulf %520, %731 : vector<2x1xf32>
    %753 = arith.addf %751, %752 : vector<2x1xf32>
    %754 = arith.mulf %510, %726 : vector<2x1xf32>
    %755 = arith.mulf %515, %729 : vector<2x1xf32>
    %756 = arith.addf %754, %755 : vector<2x1xf32>
    %757 = arith.mulf %520, %732 : vector<2x1xf32>
    %758 = arith.addf %756, %757 : vector<2x1xf32>
    %759 = arith.mulf %510, %727 : vector<2x1xf32>
    %760 = arith.mulf %515, %730 : vector<2x1xf32>
    %761 = arith.addf %759, %760 : vector<2x1xf32>
    %762 = arith.mulf %520, %733 : vector<2x1xf32>
    %763 = arith.addf %761, %762 : vector<2x1xf32>
    %764 = arith.mulf %525, %725 : vector<2x1xf32>
    %765 = arith.mulf %530, %728 : vector<2x1xf32>
    %766 = arith.addf %764, %765 : vector<2x1xf32>
    %767 = arith.mulf %535, %731 : vector<2x1xf32>
    %768 = arith.addf %766, %767 : vector<2x1xf32>
    %769 = arith.mulf %525, %726 : vector<2x1xf32>
    %770 = arith.mulf %530, %729 : vector<2x1xf32>
    %771 = arith.addf %769, %770 : vector<2x1xf32>
    %772 = arith.mulf %535, %732 : vector<2x1xf32>
    %773 = arith.addf %771, %772 : vector<2x1xf32>
    %774 = arith.mulf %525, %727 : vector<2x1xf32>
    %775 = arith.mulf %530, %730 : vector<2x1xf32>
    %776 = arith.addf %774, %775 : vector<2x1xf32>
    %777 = arith.mulf %535, %733 : vector<2x1xf32>
    %778 = arith.addf %776, %777 : vector<2x1xf32>
    %779 = vector.extract_strided_slice %3 {offsets = [0, 9], sizes = [2, 1], strides = [1, 1]} : vector<2x24xf32> to vector<2x1xf32>
    %780 = vector.extract_strided_slice %3 {offsets = [0, 6], sizes = [2, 1], strides = [1, 1]} : vector<2x24xf32> to vector<2x1xf32>
    %781 = arith.subf %779, %780 : vector<2x1xf32>
    %782 = vector.extract_strided_slice %4 {offsets = [0, 9], sizes = [2, 1], strides = [1, 1]} : vector<2x24xf32> to vector<2x1xf32>
    %783 = vector.extract_strided_slice %4 {offsets = [0, 6], sizes = [2, 1], strides = [1, 1]} : vector<2x24xf32> to vector<2x1xf32>
    %784 = arith.subf %782, %783 : vector<2x1xf32>
    %785 = vector.extract_strided_slice %5 {offsets = [0, 9], sizes = [2, 1], strides = [1, 1]} : vector<2x24xf32> to vector<2x1xf32>
    %786 = vector.extract_strided_slice %5 {offsets = [0, 6], sizes = [2, 1], strides = [1, 1]} : vector<2x24xf32> to vector<2x1xf32>
    %787 = arith.subf %785, %786 : vector<2x1xf32>
    %788 = arith.mulf %495, %781 : vector<2x1xf32>
    %789 = arith.mulf %500, %784 : vector<2x1xf32>
    %790 = arith.addf %788, %789 : vector<2x1xf32>
    %791 = arith.mulf %505, %787 : vector<2x1xf32>
    %792 = arith.addf %790, %791 : vector<2x1xf32>
    %793 = arith.addf %792, %550 : vector<2x1xf32>
    %794 = arith.mulf %510, %781 : vector<2x1xf32>
    %795 = arith.mulf %515, %784 : vector<2x1xf32>
    %796 = arith.addf %794, %795 : vector<2x1xf32>
    %797 = arith.mulf %520, %787 : vector<2x1xf32>
    %798 = arith.addf %796, %797 : vector<2x1xf32>
    %799 = arith.addf %798, %556 : vector<2x1xf32>
    %800 = arith.mulf %525, %781 : vector<2x1xf32>
    %801 = arith.mulf %530, %784 : vector<2x1xf32>
    %802 = arith.addf %800, %801 : vector<2x1xf32>
    %803 = arith.mulf %535, %787 : vector<2x1xf32>
    %804 = arith.addf %802, %803 : vector<2x1xf32>
    %805 = arith.addf %804, %562 : vector<2x1xf32>
    %806 = vector.extract_strided_slice %3 {offsets = [0, 10], sizes = [2, 1], strides = [1, 1]} : vector<2x24xf32> to vector<2x1xf32>
    %807 = vector.extract_strided_slice %3 {offsets = [0, 7], sizes = [2, 1], strides = [1, 1]} : vector<2x24xf32> to vector<2x1xf32>
    %808 = arith.subf %806, %807 : vector<2x1xf32>
    %809 = vector.extract_strided_slice %4 {offsets = [0, 10], sizes = [2, 1], strides = [1, 1]} : vector<2x24xf32> to vector<2x1xf32>
    %810 = vector.extract_strided_slice %4 {offsets = [0, 7], sizes = [2, 1], strides = [1, 1]} : vector<2x24xf32> to vector<2x1xf32>
    %811 = arith.subf %809, %810 : vector<2x1xf32>
    %812 = vector.extract_strided_slice %5 {offsets = [0, 10], sizes = [2, 1], strides = [1, 1]} : vector<2x24xf32> to vector<2x1xf32>
    %813 = vector.extract_strided_slice %5 {offsets = [0, 7], sizes = [2, 1], strides = [1, 1]} : vector<2x24xf32> to vector<2x1xf32>
    %814 = arith.subf %812, %813 : vector<2x1xf32>
    %815 = arith.mulf %576, %808 : vector<2x1xf32>
    %816 = arith.mulf %581, %811 : vector<2x1xf32>
    %817 = arith.addf %815, %816 : vector<2x1xf32>
    %818 = arith.mulf %586, %814 : vector<2x1xf32>
    %819 = arith.addf %817, %818 : vector<2x1xf32>
    %820 = arith.addf %819, %631 : vector<2x1xf32>
    %821 = arith.mulf %591, %808 : vector<2x1xf32>
    %822 = arith.mulf %596, %811 : vector<2x1xf32>
    %823 = arith.addf %821, %822 : vector<2x1xf32>
    %824 = arith.mulf %601, %814 : vector<2x1xf32>
    %825 = arith.addf %823, %824 : vector<2x1xf32>
    %826 = arith.addf %825, %637 : vector<2x1xf32>
    %827 = arith.mulf %606, %808 : vector<2x1xf32>
    %828 = arith.mulf %611, %811 : vector<2x1xf32>
    %829 = arith.addf %827, %828 : vector<2x1xf32>
    %830 = arith.mulf %616, %814 : vector<2x1xf32>
    %831 = arith.addf %829, %830 : vector<2x1xf32>
    %832 = arith.addf %831, %643 : vector<2x1xf32>
    %833 = vector.extract_strided_slice %3 {offsets = [0, 11], sizes = [2, 1], strides = [1, 1]} : vector<2x24xf32> to vector<2x1xf32>
    %834 = vector.extract_strided_slice %3 {offsets = [0, 8], sizes = [2, 1], strides = [1, 1]} : vector<2x24xf32> to vector<2x1xf32>
    %835 = arith.subf %833, %834 : vector<2x1xf32>
    %836 = vector.extract_strided_slice %4 {offsets = [0, 11], sizes = [2, 1], strides = [1, 1]} : vector<2x24xf32> to vector<2x1xf32>
    %837 = vector.extract_strided_slice %4 {offsets = [0, 8], sizes = [2, 1], strides = [1, 1]} : vector<2x24xf32> to vector<2x1xf32>
    %838 = arith.subf %836, %837 : vector<2x1xf32>
    %839 = vector.extract_strided_slice %5 {offsets = [0, 11], sizes = [2, 1], strides = [1, 1]} : vector<2x24xf32> to vector<2x1xf32>
    %840 = vector.extract_strided_slice %5 {offsets = [0, 8], sizes = [2, 1], strides = [1, 1]} : vector<2x24xf32> to vector<2x1xf32>
    %841 = arith.subf %839, %840 : vector<2x1xf32>
    %842 = arith.mulf %657, %835 : vector<2x1xf32>
    %843 = arith.mulf %662, %838 : vector<2x1xf32>
    %844 = arith.addf %842, %843 : vector<2x1xf32>
    %845 = arith.mulf %667, %841 : vector<2x1xf32>
    %846 = arith.addf %844, %845 : vector<2x1xf32>
    %847 = arith.addf %846, %712 : vector<2x1xf32>
    %848 = arith.mulf %672, %835 : vector<2x1xf32>
    %849 = arith.mulf %677, %838 : vector<2x1xf32>
    %850 = arith.addf %848, %849 : vector<2x1xf32>
    %851 = arith.mulf %682, %841 : vector<2x1xf32>
    %852 = arith.addf %850, %851 : vector<2x1xf32>
    %853 = arith.addf %852, %718 : vector<2x1xf32>
    %854 = arith.mulf %687, %835 : vector<2x1xf32>
    %855 = arith.mulf %692, %838 : vector<2x1xf32>
    %856 = arith.addf %854, %855 : vector<2x1xf32>
    %857 = arith.mulf %697, %841 : vector<2x1xf32>
    %858 = arith.addf %856, %857 : vector<2x1xf32>
    %859 = arith.addf %858, %724 : vector<2x1xf32>
    %860 = vector.extract_strided_slice %28 {offsets = [0, 12], sizes = [2, 1], strides = [1, 1]} : vector<2x24xf32> to vector<2x1xf32>
    %861 = vector.extract_strided_slice %32 {offsets = [0, 12], sizes = [2, 1], strides = [1, 1]} : vector<2x24xf32> to vector<2x1xf32>
    %862 = vector.extract_strided_slice %36 {offsets = [0, 12], sizes = [2, 1], strides = [1, 1]} : vector<2x24xf32> to vector<2x1xf32>
    %863 = vector.extract_strided_slice %40 {offsets = [0, 12], sizes = [2, 1], strides = [1, 1]} : vector<2x24xf32> to vector<2x1xf32>
    %864 = vector.extract_strided_slice %43 {offsets = [0, 12], sizes = [2, 1], strides = [1, 1]} : vector<2x24xf32> to vector<2x1xf32>
    %865 = vector.extract_strided_slice %47 {offsets = [0, 12], sizes = [2, 1], strides = [1, 1]} : vector<2x24xf32> to vector<2x1xf32>
    %866 = vector.extract_strided_slice %51 {offsets = [0, 12], sizes = [2, 1], strides = [1, 1]} : vector<2x24xf32> to vector<2x1xf32>
    %867 = vector.extract_strided_slice %55 {offsets = [0, 12], sizes = [2, 1], strides = [1, 1]} : vector<2x24xf32> to vector<2x1xf32>
    %868 = vector.extract_strided_slice %58 {offsets = [0, 12], sizes = [2, 1], strides = [1, 1]} : vector<2x24xf32> to vector<2x1xf32>
    %869 = arith.mulf %738, %860 : vector<2x1xf32>
    %870 = arith.mulf %743, %863 : vector<2x1xf32>
    %871 = arith.addf %869, %870 : vector<2x1xf32>
    %872 = arith.mulf %748, %866 : vector<2x1xf32>
    %873 = arith.addf %871, %872 : vector<2x1xf32>
    %874 = arith.mulf %738, %861 : vector<2x1xf32>
    %875 = arith.mulf %743, %864 : vector<2x1xf32>
    %876 = arith.addf %874, %875 : vector<2x1xf32>
    %877 = arith.mulf %748, %867 : vector<2x1xf32>
    %878 = arith.addf %876, %877 : vector<2x1xf32>
    %879 = arith.mulf %738, %862 : vector<2x1xf32>
    %880 = arith.mulf %743, %865 : vector<2x1xf32>
    %881 = arith.addf %879, %880 : vector<2x1xf32>
    %882 = arith.mulf %748, %868 : vector<2x1xf32>
    %883 = arith.addf %881, %882 : vector<2x1xf32>
    %884 = arith.mulf %753, %860 : vector<2x1xf32>
    %885 = arith.mulf %758, %863 : vector<2x1xf32>
    %886 = arith.addf %884, %885 : vector<2x1xf32>
    %887 = arith.mulf %763, %866 : vector<2x1xf32>
    %888 = arith.addf %886, %887 : vector<2x1xf32>
    %889 = arith.mulf %753, %861 : vector<2x1xf32>
    %890 = arith.mulf %758, %864 : vector<2x1xf32>
    %891 = arith.addf %889, %890 : vector<2x1xf32>
    %892 = arith.mulf %763, %867 : vector<2x1xf32>
    %893 = arith.addf %891, %892 : vector<2x1xf32>
    %894 = arith.mulf %753, %862 : vector<2x1xf32>
    %895 = arith.mulf %758, %865 : vector<2x1xf32>
    %896 = arith.addf %894, %895 : vector<2x1xf32>
    %897 = arith.mulf %763, %868 : vector<2x1xf32>
    %898 = arith.addf %896, %897 : vector<2x1xf32>
    %899 = arith.mulf %768, %860 : vector<2x1xf32>
    %900 = arith.mulf %773, %863 : vector<2x1xf32>
    %901 = arith.addf %899, %900 : vector<2x1xf32>
    %902 = arith.mulf %778, %866 : vector<2x1xf32>
    %903 = arith.addf %901, %902 : vector<2x1xf32>
    %904 = arith.mulf %768, %861 : vector<2x1xf32>
    %905 = arith.mulf %773, %864 : vector<2x1xf32>
    %906 = arith.addf %904, %905 : vector<2x1xf32>
    %907 = arith.mulf %778, %867 : vector<2x1xf32>
    %908 = arith.addf %906, %907 : vector<2x1xf32>
    %909 = arith.mulf %768, %862 : vector<2x1xf32>
    %910 = arith.mulf %773, %865 : vector<2x1xf32>
    %911 = arith.addf %909, %910 : vector<2x1xf32>
    %912 = arith.mulf %778, %868 : vector<2x1xf32>
    %913 = arith.addf %911, %912 : vector<2x1xf32>
    %914 = vector.extract_strided_slice %3 {offsets = [0, 12], sizes = [2, 1], strides = [1, 1]} : vector<2x24xf32> to vector<2x1xf32>
    %915 = vector.extract_strided_slice %3 {offsets = [0, 9], sizes = [2, 1], strides = [1, 1]} : vector<2x24xf32> to vector<2x1xf32>
    %916 = arith.subf %914, %915 : vector<2x1xf32>
    %917 = vector.extract_strided_slice %4 {offsets = [0, 12], sizes = [2, 1], strides = [1, 1]} : vector<2x24xf32> to vector<2x1xf32>
    %918 = vector.extract_strided_slice %4 {offsets = [0, 9], sizes = [2, 1], strides = [1, 1]} : vector<2x24xf32> to vector<2x1xf32>
    %919 = arith.subf %917, %918 : vector<2x1xf32>
    %920 = vector.extract_strided_slice %5 {offsets = [0, 12], sizes = [2, 1], strides = [1, 1]} : vector<2x24xf32> to vector<2x1xf32>
    %921 = vector.extract_strided_slice %5 {offsets = [0, 9], sizes = [2, 1], strides = [1, 1]} : vector<2x24xf32> to vector<2x1xf32>
    %922 = arith.subf %920, %921 : vector<2x1xf32>
    %923 = arith.mulf %738, %916 : vector<2x1xf32>
    %924 = arith.mulf %743, %919 : vector<2x1xf32>
    %925 = arith.addf %923, %924 : vector<2x1xf32>
    %926 = arith.mulf %748, %922 : vector<2x1xf32>
    %927 = arith.addf %925, %926 : vector<2x1xf32>
    %928 = arith.addf %927, %793 : vector<2x1xf32>
    %929 = arith.mulf %753, %916 : vector<2x1xf32>
    %930 = arith.mulf %758, %919 : vector<2x1xf32>
    %931 = arith.addf %929, %930 : vector<2x1xf32>
    %932 = arith.mulf %763, %922 : vector<2x1xf32>
    %933 = arith.addf %931, %932 : vector<2x1xf32>
    %934 = arith.addf %933, %799 : vector<2x1xf32>
    %935 = arith.mulf %768, %916 : vector<2x1xf32>
    %936 = arith.mulf %773, %919 : vector<2x1xf32>
    %937 = arith.addf %935, %936 : vector<2x1xf32>
    %938 = arith.mulf %778, %922 : vector<2x1xf32>
    %939 = arith.addf %937, %938 : vector<2x1xf32>
    %940 = arith.addf %939, %805 : vector<2x1xf32>
    %941 = vector.extract_strided_slice %28 {offsets = [0, 13], sizes = [2, 1], strides = [1, 1]} : vector<2x24xf32> to vector<2x1xf32>
    %942 = vector.extract_strided_slice %32 {offsets = [0, 13], sizes = [2, 1], strides = [1, 1]} : vector<2x24xf32> to vector<2x1xf32>
    %943 = vector.extract_strided_slice %36 {offsets = [0, 13], sizes = [2, 1], strides = [1, 1]} : vector<2x24xf32> to vector<2x1xf32>
    %944 = vector.extract_strided_slice %40 {offsets = [0, 13], sizes = [2, 1], strides = [1, 1]} : vector<2x24xf32> to vector<2x1xf32>
    %945 = vector.extract_strided_slice %43 {offsets = [0, 13], sizes = [2, 1], strides = [1, 1]} : vector<2x24xf32> to vector<2x1xf32>
    %946 = vector.extract_strided_slice %47 {offsets = [0, 13], sizes = [2, 1], strides = [1, 1]} : vector<2x24xf32> to vector<2x1xf32>
    %947 = vector.extract_strided_slice %51 {offsets = [0, 13], sizes = [2, 1], strides = [1, 1]} : vector<2x24xf32> to vector<2x1xf32>
    %948 = vector.extract_strided_slice %55 {offsets = [0, 13], sizes = [2, 1], strides = [1, 1]} : vector<2x24xf32> to vector<2x1xf32>
    %949 = vector.extract_strided_slice %58 {offsets = [0, 13], sizes = [2, 1], strides = [1, 1]} : vector<2x24xf32> to vector<2x1xf32>
    %950 = arith.mulf %738, %941 : vector<2x1xf32>
    %951 = arith.mulf %743, %944 : vector<2x1xf32>
    %952 = arith.addf %950, %951 : vector<2x1xf32>
    %953 = arith.mulf %748, %947 : vector<2x1xf32>
    %954 = arith.addf %952, %953 : vector<2x1xf32>
    %955 = arith.mulf %738, %942 : vector<2x1xf32>
    %956 = arith.mulf %743, %945 : vector<2x1xf32>
    %957 = arith.addf %955, %956 : vector<2x1xf32>
    %958 = arith.mulf %748, %948 : vector<2x1xf32>
    %959 = arith.addf %957, %958 : vector<2x1xf32>
    %960 = arith.mulf %738, %943 : vector<2x1xf32>
    %961 = arith.mulf %743, %946 : vector<2x1xf32>
    %962 = arith.addf %960, %961 : vector<2x1xf32>
    %963 = arith.mulf %748, %949 : vector<2x1xf32>
    %964 = arith.addf %962, %963 : vector<2x1xf32>
    %965 = arith.mulf %753, %941 : vector<2x1xf32>
    %966 = arith.mulf %758, %944 : vector<2x1xf32>
    %967 = arith.addf %965, %966 : vector<2x1xf32>
    %968 = arith.mulf %763, %947 : vector<2x1xf32>
    %969 = arith.addf %967, %968 : vector<2x1xf32>
    %970 = arith.mulf %753, %942 : vector<2x1xf32>
    %971 = arith.mulf %758, %945 : vector<2x1xf32>
    %972 = arith.addf %970, %971 : vector<2x1xf32>
    %973 = arith.mulf %763, %948 : vector<2x1xf32>
    %974 = arith.addf %972, %973 : vector<2x1xf32>
    %975 = arith.mulf %753, %943 : vector<2x1xf32>
    %976 = arith.mulf %758, %946 : vector<2x1xf32>
    %977 = arith.addf %975, %976 : vector<2x1xf32>
    %978 = arith.mulf %763, %949 : vector<2x1xf32>
    %979 = arith.addf %977, %978 : vector<2x1xf32>
    %980 = arith.mulf %768, %941 : vector<2x1xf32>
    %981 = arith.mulf %773, %944 : vector<2x1xf32>
    %982 = arith.addf %980, %981 : vector<2x1xf32>
    %983 = arith.mulf %778, %947 : vector<2x1xf32>
    %984 = arith.addf %982, %983 : vector<2x1xf32>
    %985 = arith.mulf %768, %942 : vector<2x1xf32>
    %986 = arith.mulf %773, %945 : vector<2x1xf32>
    %987 = arith.addf %985, %986 : vector<2x1xf32>
    %988 = arith.mulf %778, %948 : vector<2x1xf32>
    %989 = arith.addf %987, %988 : vector<2x1xf32>
    %990 = arith.mulf %768, %943 : vector<2x1xf32>
    %991 = arith.mulf %773, %946 : vector<2x1xf32>
    %992 = arith.addf %990, %991 : vector<2x1xf32>
    %993 = arith.mulf %778, %949 : vector<2x1xf32>
    %994 = arith.addf %992, %993 : vector<2x1xf32>
    %995 = vector.extract_strided_slice %3 {offsets = [0, 13], sizes = [2, 1], strides = [1, 1]} : vector<2x24xf32> to vector<2x1xf32>
    %996 = vector.extract_strided_slice %3 {offsets = [0, 9], sizes = [2, 1], strides = [1, 1]} : vector<2x24xf32> to vector<2x1xf32>
    %997 = arith.subf %995, %996 : vector<2x1xf32>
    %998 = vector.extract_strided_slice %4 {offsets = [0, 13], sizes = [2, 1], strides = [1, 1]} : vector<2x24xf32> to vector<2x1xf32>
    %999 = vector.extract_strided_slice %4 {offsets = [0, 9], sizes = [2, 1], strides = [1, 1]} : vector<2x24xf32> to vector<2x1xf32>
    %1000 = arith.subf %998, %999 : vector<2x1xf32>
    %1001 = vector.extract_strided_slice %5 {offsets = [0, 13], sizes = [2, 1], strides = [1, 1]} : vector<2x24xf32> to vector<2x1xf32>
    %1002 = vector.extract_strided_slice %5 {offsets = [0, 9], sizes = [2, 1], strides = [1, 1]} : vector<2x24xf32> to vector<2x1xf32>
    %1003 = arith.subf %1001, %1002 : vector<2x1xf32>
    %1004 = arith.mulf %738, %997 : vector<2x1xf32>
    %1005 = arith.mulf %743, %1000 : vector<2x1xf32>
    %1006 = arith.addf %1004, %1005 : vector<2x1xf32>
    %1007 = arith.mulf %748, %1003 : vector<2x1xf32>
    %1008 = arith.addf %1006, %1007 : vector<2x1xf32>
    %1009 = arith.addf %1008, %793 : vector<2x1xf32>
    %1010 = arith.mulf %753, %997 : vector<2x1xf32>
    %1011 = arith.mulf %758, %1000 : vector<2x1xf32>
    %1012 = arith.addf %1010, %1011 : vector<2x1xf32>
    %1013 = arith.mulf %763, %1003 : vector<2x1xf32>
    %1014 = arith.addf %1012, %1013 : vector<2x1xf32>
    %1015 = arith.addf %1014, %799 : vector<2x1xf32>
    %1016 = arith.mulf %768, %997 : vector<2x1xf32>
    %1017 = arith.mulf %773, %1000 : vector<2x1xf32>
    %1018 = arith.addf %1016, %1017 : vector<2x1xf32>
    %1019 = arith.mulf %778, %1003 : vector<2x1xf32>
    %1020 = arith.addf %1018, %1019 : vector<2x1xf32>
    %1021 = arith.addf %1020, %805 : vector<2x1xf32>
    %1022 = vector.extract_strided_slice %28 {offsets = [0, 14], sizes = [2, 1], strides = [1, 1]} : vector<2x24xf32> to vector<2x1xf32>
    %1023 = vector.extract_strided_slice %32 {offsets = [0, 14], sizes = [2, 1], strides = [1, 1]} : vector<2x24xf32> to vector<2x1xf32>
    %1024 = vector.extract_strided_slice %36 {offsets = [0, 14], sizes = [2, 1], strides = [1, 1]} : vector<2x24xf32> to vector<2x1xf32>
    %1025 = vector.extract_strided_slice %40 {offsets = [0, 14], sizes = [2, 1], strides = [1, 1]} : vector<2x24xf32> to vector<2x1xf32>
    %1026 = vector.extract_strided_slice %43 {offsets = [0, 14], sizes = [2, 1], strides = [1, 1]} : vector<2x24xf32> to vector<2x1xf32>
    %1027 = vector.extract_strided_slice %47 {offsets = [0, 14], sizes = [2, 1], strides = [1, 1]} : vector<2x24xf32> to vector<2x1xf32>
    %1028 = vector.extract_strided_slice %51 {offsets = [0, 14], sizes = [2, 1], strides = [1, 1]} : vector<2x24xf32> to vector<2x1xf32>
    %1029 = vector.extract_strided_slice %55 {offsets = [0, 14], sizes = [2, 1], strides = [1, 1]} : vector<2x24xf32> to vector<2x1xf32>
    %1030 = vector.extract_strided_slice %58 {offsets = [0, 14], sizes = [2, 1], strides = [1, 1]} : vector<2x24xf32> to vector<2x1xf32>
    %1031 = arith.mulf %738, %1022 : vector<2x1xf32>
    %1032 = arith.mulf %743, %1025 : vector<2x1xf32>
    %1033 = arith.addf %1031, %1032 : vector<2x1xf32>
    %1034 = arith.mulf %748, %1028 : vector<2x1xf32>
    %1035 = arith.addf %1033, %1034 : vector<2x1xf32>
    %1036 = arith.mulf %738, %1023 : vector<2x1xf32>
    %1037 = arith.mulf %743, %1026 : vector<2x1xf32>
    %1038 = arith.addf %1036, %1037 : vector<2x1xf32>
    %1039 = arith.mulf %748, %1029 : vector<2x1xf32>
    %1040 = arith.addf %1038, %1039 : vector<2x1xf32>
    %1041 = arith.mulf %738, %1024 : vector<2x1xf32>
    %1042 = arith.mulf %743, %1027 : vector<2x1xf32>
    %1043 = arith.addf %1041, %1042 : vector<2x1xf32>
    %1044 = arith.mulf %748, %1030 : vector<2x1xf32>
    %1045 = arith.addf %1043, %1044 : vector<2x1xf32>
    %1046 = arith.mulf %753, %1022 : vector<2x1xf32>
    %1047 = arith.mulf %758, %1025 : vector<2x1xf32>
    %1048 = arith.addf %1046, %1047 : vector<2x1xf32>
    %1049 = arith.mulf %763, %1028 : vector<2x1xf32>
    %1050 = arith.addf %1048, %1049 : vector<2x1xf32>
    %1051 = arith.mulf %753, %1023 : vector<2x1xf32>
    %1052 = arith.mulf %758, %1026 : vector<2x1xf32>
    %1053 = arith.addf %1051, %1052 : vector<2x1xf32>
    %1054 = arith.mulf %763, %1029 : vector<2x1xf32>
    %1055 = arith.addf %1053, %1054 : vector<2x1xf32>
    %1056 = arith.mulf %753, %1024 : vector<2x1xf32>
    %1057 = arith.mulf %758, %1027 : vector<2x1xf32>
    %1058 = arith.addf %1056, %1057 : vector<2x1xf32>
    %1059 = arith.mulf %763, %1030 : vector<2x1xf32>
    %1060 = arith.addf %1058, %1059 : vector<2x1xf32>
    %1061 = arith.mulf %768, %1022 : vector<2x1xf32>
    %1062 = arith.mulf %773, %1025 : vector<2x1xf32>
    %1063 = arith.addf %1061, %1062 : vector<2x1xf32>
    %1064 = arith.mulf %778, %1028 : vector<2x1xf32>
    %1065 = arith.addf %1063, %1064 : vector<2x1xf32>
    %1066 = arith.mulf %768, %1023 : vector<2x1xf32>
    %1067 = arith.mulf %773, %1026 : vector<2x1xf32>
    %1068 = arith.addf %1066, %1067 : vector<2x1xf32>
    %1069 = arith.mulf %778, %1029 : vector<2x1xf32>
    %1070 = arith.addf %1068, %1069 : vector<2x1xf32>
    %1071 = arith.mulf %768, %1024 : vector<2x1xf32>
    %1072 = arith.mulf %773, %1027 : vector<2x1xf32>
    %1073 = arith.addf %1071, %1072 : vector<2x1xf32>
    %1074 = arith.mulf %778, %1030 : vector<2x1xf32>
    %1075 = arith.addf %1073, %1074 : vector<2x1xf32>
    %1076 = vector.extract_strided_slice %3 {offsets = [0, 14], sizes = [2, 1], strides = [1, 1]} : vector<2x24xf32> to vector<2x1xf32>
    %1077 = vector.extract_strided_slice %3 {offsets = [0, 9], sizes = [2, 1], strides = [1, 1]} : vector<2x24xf32> to vector<2x1xf32>
    %1078 = arith.subf %1076, %1077 : vector<2x1xf32>
    %1079 = vector.extract_strided_slice %4 {offsets = [0, 14], sizes = [2, 1], strides = [1, 1]} : vector<2x24xf32> to vector<2x1xf32>
    %1080 = vector.extract_strided_slice %4 {offsets = [0, 9], sizes = [2, 1], strides = [1, 1]} : vector<2x24xf32> to vector<2x1xf32>
    %1081 = arith.subf %1079, %1080 : vector<2x1xf32>
    %1082 = vector.extract_strided_slice %5 {offsets = [0, 14], sizes = [2, 1], strides = [1, 1]} : vector<2x24xf32> to vector<2x1xf32>
    %1083 = vector.extract_strided_slice %5 {offsets = [0, 9], sizes = [2, 1], strides = [1, 1]} : vector<2x24xf32> to vector<2x1xf32>
    %1084 = arith.subf %1082, %1083 : vector<2x1xf32>
    %1085 = arith.mulf %738, %1078 : vector<2x1xf32>
    %1086 = arith.mulf %743, %1081 : vector<2x1xf32>
    %1087 = arith.addf %1085, %1086 : vector<2x1xf32>
    %1088 = arith.mulf %748, %1084 : vector<2x1xf32>
    %1089 = arith.addf %1087, %1088 : vector<2x1xf32>
    %1090 = arith.addf %1089, %793 : vector<2x1xf32>
    %1091 = arith.mulf %753, %1078 : vector<2x1xf32>
    %1092 = arith.mulf %758, %1081 : vector<2x1xf32>
    %1093 = arith.addf %1091, %1092 : vector<2x1xf32>
    %1094 = arith.mulf %763, %1084 : vector<2x1xf32>
    %1095 = arith.addf %1093, %1094 : vector<2x1xf32>
    %1096 = arith.addf %1095, %799 : vector<2x1xf32>
    %1097 = arith.mulf %768, %1078 : vector<2x1xf32>
    %1098 = arith.mulf %773, %1081 : vector<2x1xf32>
    %1099 = arith.addf %1097, %1098 : vector<2x1xf32>
    %1100 = arith.mulf %778, %1084 : vector<2x1xf32>
    %1101 = arith.addf %1099, %1100 : vector<2x1xf32>
    %1102 = arith.addf %1101, %805 : vector<2x1xf32>
    %1103 = vector.extract_strided_slice %3 {offsets = [0, 15], sizes = [2, 1], strides = [1, 1]} : vector<2x24xf32> to vector<2x1xf32>
    %1104 = vector.extract_strided_slice %3 {offsets = [0, 12], sizes = [2, 1], strides = [1, 1]} : vector<2x24xf32> to vector<2x1xf32>
    %1105 = arith.subf %1103, %1104 : vector<2x1xf32>
    %1106 = vector.extract_strided_slice %4 {offsets = [0, 15], sizes = [2, 1], strides = [1, 1]} : vector<2x24xf32> to vector<2x1xf32>
    %1107 = vector.extract_strided_slice %4 {offsets = [0, 12], sizes = [2, 1], strides = [1, 1]} : vector<2x24xf32> to vector<2x1xf32>
    %1108 = arith.subf %1106, %1107 : vector<2x1xf32>
    %1109 = vector.extract_strided_slice %5 {offsets = [0, 15], sizes = [2, 1], strides = [1, 1]} : vector<2x24xf32> to vector<2x1xf32>
    %1110 = vector.extract_strided_slice %5 {offsets = [0, 12], sizes = [2, 1], strides = [1, 1]} : vector<2x24xf32> to vector<2x1xf32>
    %1111 = arith.subf %1109, %1110 : vector<2x1xf32>
    %1112 = arith.mulf %873, %1105 : vector<2x1xf32>
    %1113 = arith.mulf %878, %1108 : vector<2x1xf32>
    %1114 = arith.addf %1112, %1113 : vector<2x1xf32>
    %1115 = arith.mulf %883, %1111 : vector<2x1xf32>
    %1116 = arith.addf %1114, %1115 : vector<2x1xf32>
    %1117 = arith.addf %1116, %928 : vector<2x1xf32>
    %1118 = arith.mulf %888, %1105 : vector<2x1xf32>
    %1119 = arith.mulf %893, %1108 : vector<2x1xf32>
    %1120 = arith.addf %1118, %1119 : vector<2x1xf32>
    %1121 = arith.mulf %898, %1111 : vector<2x1xf32>
    %1122 = arith.addf %1120, %1121 : vector<2x1xf32>
    %1123 = arith.addf %1122, %934 : vector<2x1xf32>
    %1124 = arith.mulf %903, %1105 : vector<2x1xf32>
    %1125 = arith.mulf %908, %1108 : vector<2x1xf32>
    %1126 = arith.addf %1124, %1125 : vector<2x1xf32>
    %1127 = arith.mulf %913, %1111 : vector<2x1xf32>
    %1128 = arith.addf %1126, %1127 : vector<2x1xf32>
    %1129 = arith.addf %1128, %940 : vector<2x1xf32>
    %1130 = vector.extract_strided_slice %28 {offsets = [0, 16], sizes = [2, 1], strides = [1, 1]} : vector<2x24xf32> to vector<2x1xf32>
    %1131 = vector.extract_strided_slice %32 {offsets = [0, 16], sizes = [2, 1], strides = [1, 1]} : vector<2x24xf32> to vector<2x1xf32>
    %1132 = vector.extract_strided_slice %36 {offsets = [0, 16], sizes = [2, 1], strides = [1, 1]} : vector<2x24xf32> to vector<2x1xf32>
    %1133 = vector.extract_strided_slice %40 {offsets = [0, 16], sizes = [2, 1], strides = [1, 1]} : vector<2x24xf32> to vector<2x1xf32>
    %1134 = vector.extract_strided_slice %43 {offsets = [0, 16], sizes = [2, 1], strides = [1, 1]} : vector<2x24xf32> to vector<2x1xf32>
    %1135 = vector.extract_strided_slice %47 {offsets = [0, 16], sizes = [2, 1], strides = [1, 1]} : vector<2x24xf32> to vector<2x1xf32>
    %1136 = vector.extract_strided_slice %51 {offsets = [0, 16], sizes = [2, 1], strides = [1, 1]} : vector<2x24xf32> to vector<2x1xf32>
    %1137 = vector.extract_strided_slice %55 {offsets = [0, 16], sizes = [2, 1], strides = [1, 1]} : vector<2x24xf32> to vector<2x1xf32>
    %1138 = vector.extract_strided_slice %58 {offsets = [0, 16], sizes = [2, 1], strides = [1, 1]} : vector<2x24xf32> to vector<2x1xf32>
    %1139 = arith.mulf %954, %1130 : vector<2x1xf32>
    %1140 = arith.mulf %959, %1133 : vector<2x1xf32>
    %1141 = arith.addf %1139, %1140 : vector<2x1xf32>
    %1142 = arith.mulf %964, %1136 : vector<2x1xf32>
    %1143 = arith.addf %1141, %1142 : vector<2x1xf32>
    %1144 = arith.mulf %954, %1131 : vector<2x1xf32>
    %1145 = arith.mulf %959, %1134 : vector<2x1xf32>
    %1146 = arith.addf %1144, %1145 : vector<2x1xf32>
    %1147 = arith.mulf %964, %1137 : vector<2x1xf32>
    %1148 = arith.addf %1146, %1147 : vector<2x1xf32>
    %1149 = arith.mulf %954, %1132 : vector<2x1xf32>
    %1150 = arith.mulf %959, %1135 : vector<2x1xf32>
    %1151 = arith.addf %1149, %1150 : vector<2x1xf32>
    %1152 = arith.mulf %964, %1138 : vector<2x1xf32>
    %1153 = arith.addf %1151, %1152 : vector<2x1xf32>
    %1154 = arith.mulf %969, %1130 : vector<2x1xf32>
    %1155 = arith.mulf %974, %1133 : vector<2x1xf32>
    %1156 = arith.addf %1154, %1155 : vector<2x1xf32>
    %1157 = arith.mulf %979, %1136 : vector<2x1xf32>
    %1158 = arith.addf %1156, %1157 : vector<2x1xf32>
    %1159 = arith.mulf %969, %1131 : vector<2x1xf32>
    %1160 = arith.mulf %974, %1134 : vector<2x1xf32>
    %1161 = arith.addf %1159, %1160 : vector<2x1xf32>
    %1162 = arith.mulf %979, %1137 : vector<2x1xf32>
    %1163 = arith.addf %1161, %1162 : vector<2x1xf32>
    %1164 = arith.mulf %969, %1132 : vector<2x1xf32>
    %1165 = arith.mulf %974, %1135 : vector<2x1xf32>
    %1166 = arith.addf %1164, %1165 : vector<2x1xf32>
    %1167 = arith.mulf %979, %1138 : vector<2x1xf32>
    %1168 = arith.addf %1166, %1167 : vector<2x1xf32>
    %1169 = arith.mulf %984, %1130 : vector<2x1xf32>
    %1170 = arith.mulf %989, %1133 : vector<2x1xf32>
    %1171 = arith.addf %1169, %1170 : vector<2x1xf32>
    %1172 = arith.mulf %994, %1136 : vector<2x1xf32>
    %1173 = arith.addf %1171, %1172 : vector<2x1xf32>
    %1174 = arith.mulf %984, %1131 : vector<2x1xf32>
    %1175 = arith.mulf %989, %1134 : vector<2x1xf32>
    %1176 = arith.addf %1174, %1175 : vector<2x1xf32>
    %1177 = arith.mulf %994, %1137 : vector<2x1xf32>
    %1178 = arith.addf %1176, %1177 : vector<2x1xf32>
    %1179 = arith.mulf %984, %1132 : vector<2x1xf32>
    %1180 = arith.mulf %989, %1135 : vector<2x1xf32>
    %1181 = arith.addf %1179, %1180 : vector<2x1xf32>
    %1182 = arith.mulf %994, %1138 : vector<2x1xf32>
    %1183 = arith.addf %1181, %1182 : vector<2x1xf32>
    %1184 = vector.extract_strided_slice %3 {offsets = [0, 16], sizes = [2, 1], strides = [1, 1]} : vector<2x24xf32> to vector<2x1xf32>
    %1185 = vector.extract_strided_slice %3 {offsets = [0, 13], sizes = [2, 1], strides = [1, 1]} : vector<2x24xf32> to vector<2x1xf32>
    %1186 = arith.subf %1184, %1185 : vector<2x1xf32>
    %1187 = vector.extract_strided_slice %4 {offsets = [0, 16], sizes = [2, 1], strides = [1, 1]} : vector<2x24xf32> to vector<2x1xf32>
    %1188 = vector.extract_strided_slice %4 {offsets = [0, 13], sizes = [2, 1], strides = [1, 1]} : vector<2x24xf32> to vector<2x1xf32>
    %1189 = arith.subf %1187, %1188 : vector<2x1xf32>
    %1190 = vector.extract_strided_slice %5 {offsets = [0, 16], sizes = [2, 1], strides = [1, 1]} : vector<2x24xf32> to vector<2x1xf32>
    %1191 = vector.extract_strided_slice %5 {offsets = [0, 13], sizes = [2, 1], strides = [1, 1]} : vector<2x24xf32> to vector<2x1xf32>
    %1192 = arith.subf %1190, %1191 : vector<2x1xf32>
    %1193 = arith.mulf %954, %1186 : vector<2x1xf32>
    %1194 = arith.mulf %959, %1189 : vector<2x1xf32>
    %1195 = arith.addf %1193, %1194 : vector<2x1xf32>
    %1196 = arith.mulf %964, %1192 : vector<2x1xf32>
    %1197 = arith.addf %1195, %1196 : vector<2x1xf32>
    %1198 = arith.addf %1197, %1009 : vector<2x1xf32>
    %1199 = arith.mulf %969, %1186 : vector<2x1xf32>
    %1200 = arith.mulf %974, %1189 : vector<2x1xf32>
    %1201 = arith.addf %1199, %1200 : vector<2x1xf32>
    %1202 = arith.mulf %979, %1192 : vector<2x1xf32>
    %1203 = arith.addf %1201, %1202 : vector<2x1xf32>
    %1204 = arith.addf %1203, %1015 : vector<2x1xf32>
    %1205 = arith.mulf %984, %1186 : vector<2x1xf32>
    %1206 = arith.mulf %989, %1189 : vector<2x1xf32>
    %1207 = arith.addf %1205, %1206 : vector<2x1xf32>
    %1208 = arith.mulf %994, %1192 : vector<2x1xf32>
    %1209 = arith.addf %1207, %1208 : vector<2x1xf32>
    %1210 = arith.addf %1209, %1021 : vector<2x1xf32>
    %1211 = vector.extract_strided_slice %28 {offsets = [0, 17], sizes = [2, 1], strides = [1, 1]} : vector<2x24xf32> to vector<2x1xf32>
    %1212 = vector.extract_strided_slice %32 {offsets = [0, 17], sizes = [2, 1], strides = [1, 1]} : vector<2x24xf32> to vector<2x1xf32>
    %1213 = vector.extract_strided_slice %36 {offsets = [0, 17], sizes = [2, 1], strides = [1, 1]} : vector<2x24xf32> to vector<2x1xf32>
    %1214 = vector.extract_strided_slice %40 {offsets = [0, 17], sizes = [2, 1], strides = [1, 1]} : vector<2x24xf32> to vector<2x1xf32>
    %1215 = vector.extract_strided_slice %43 {offsets = [0, 17], sizes = [2, 1], strides = [1, 1]} : vector<2x24xf32> to vector<2x1xf32>
    %1216 = vector.extract_strided_slice %47 {offsets = [0, 17], sizes = [2, 1], strides = [1, 1]} : vector<2x24xf32> to vector<2x1xf32>
    %1217 = vector.extract_strided_slice %51 {offsets = [0, 17], sizes = [2, 1], strides = [1, 1]} : vector<2x24xf32> to vector<2x1xf32>
    %1218 = vector.extract_strided_slice %55 {offsets = [0, 17], sizes = [2, 1], strides = [1, 1]} : vector<2x24xf32> to vector<2x1xf32>
    %1219 = vector.extract_strided_slice %58 {offsets = [0, 17], sizes = [2, 1], strides = [1, 1]} : vector<2x24xf32> to vector<2x1xf32>
    %1220 = arith.mulf %1035, %1211 : vector<2x1xf32>
    %1221 = arith.mulf %1040, %1214 : vector<2x1xf32>
    %1222 = arith.addf %1220, %1221 : vector<2x1xf32>
    %1223 = arith.mulf %1045, %1217 : vector<2x1xf32>
    %1224 = arith.addf %1222, %1223 : vector<2x1xf32>
    %1225 = arith.mulf %1035, %1212 : vector<2x1xf32>
    %1226 = arith.mulf %1040, %1215 : vector<2x1xf32>
    %1227 = arith.addf %1225, %1226 : vector<2x1xf32>
    %1228 = arith.mulf %1045, %1218 : vector<2x1xf32>
    %1229 = arith.addf %1227, %1228 : vector<2x1xf32>
    %1230 = arith.mulf %1035, %1213 : vector<2x1xf32>
    %1231 = arith.mulf %1040, %1216 : vector<2x1xf32>
    %1232 = arith.addf %1230, %1231 : vector<2x1xf32>
    %1233 = arith.mulf %1045, %1219 : vector<2x1xf32>
    %1234 = arith.addf %1232, %1233 : vector<2x1xf32>
    %1235 = arith.mulf %1050, %1211 : vector<2x1xf32>
    %1236 = arith.mulf %1055, %1214 : vector<2x1xf32>
    %1237 = arith.addf %1235, %1236 : vector<2x1xf32>
    %1238 = arith.mulf %1060, %1217 : vector<2x1xf32>
    %1239 = arith.addf %1237, %1238 : vector<2x1xf32>
    %1240 = arith.mulf %1050, %1212 : vector<2x1xf32>
    %1241 = arith.mulf %1055, %1215 : vector<2x1xf32>
    %1242 = arith.addf %1240, %1241 : vector<2x1xf32>
    %1243 = arith.mulf %1060, %1218 : vector<2x1xf32>
    %1244 = arith.addf %1242, %1243 : vector<2x1xf32>
    %1245 = arith.mulf %1050, %1213 : vector<2x1xf32>
    %1246 = arith.mulf %1055, %1216 : vector<2x1xf32>
    %1247 = arith.addf %1245, %1246 : vector<2x1xf32>
    %1248 = arith.mulf %1060, %1219 : vector<2x1xf32>
    %1249 = arith.addf %1247, %1248 : vector<2x1xf32>
    %1250 = arith.mulf %1065, %1211 : vector<2x1xf32>
    %1251 = arith.mulf %1070, %1214 : vector<2x1xf32>
    %1252 = arith.addf %1250, %1251 : vector<2x1xf32>
    %1253 = arith.mulf %1075, %1217 : vector<2x1xf32>
    %1254 = arith.addf %1252, %1253 : vector<2x1xf32>
    %1255 = arith.mulf %1065, %1212 : vector<2x1xf32>
    %1256 = arith.mulf %1070, %1215 : vector<2x1xf32>
    %1257 = arith.addf %1255, %1256 : vector<2x1xf32>
    %1258 = arith.mulf %1075, %1218 : vector<2x1xf32>
    %1259 = arith.addf %1257, %1258 : vector<2x1xf32>
    %1260 = arith.mulf %1065, %1213 : vector<2x1xf32>
    %1261 = arith.mulf %1070, %1216 : vector<2x1xf32>
    %1262 = arith.addf %1260, %1261 : vector<2x1xf32>
    %1263 = arith.mulf %1075, %1219 : vector<2x1xf32>
    %1264 = arith.addf %1262, %1263 : vector<2x1xf32>
    %1265 = vector.extract_strided_slice %3 {offsets = [0, 17], sizes = [2, 1], strides = [1, 1]} : vector<2x24xf32> to vector<2x1xf32>
    %1266 = vector.extract_strided_slice %3 {offsets = [0, 14], sizes = [2, 1], strides = [1, 1]} : vector<2x24xf32> to vector<2x1xf32>
    %1267 = arith.subf %1265, %1266 : vector<2x1xf32>
    %1268 = vector.extract_strided_slice %4 {offsets = [0, 17], sizes = [2, 1], strides = [1, 1]} : vector<2x24xf32> to vector<2x1xf32>
    %1269 = vector.extract_strided_slice %4 {offsets = [0, 14], sizes = [2, 1], strides = [1, 1]} : vector<2x24xf32> to vector<2x1xf32>
    %1270 = arith.subf %1268, %1269 : vector<2x1xf32>
    %1271 = vector.extract_strided_slice %5 {offsets = [0, 17], sizes = [2, 1], strides = [1, 1]} : vector<2x24xf32> to vector<2x1xf32>
    %1272 = vector.extract_strided_slice %5 {offsets = [0, 14], sizes = [2, 1], strides = [1, 1]} : vector<2x24xf32> to vector<2x1xf32>
    %1273 = arith.subf %1271, %1272 : vector<2x1xf32>
    %1274 = arith.mulf %1035, %1267 : vector<2x1xf32>
    %1275 = arith.mulf %1040, %1270 : vector<2x1xf32>
    %1276 = arith.addf %1274, %1275 : vector<2x1xf32>
    %1277 = arith.mulf %1045, %1273 : vector<2x1xf32>
    %1278 = arith.addf %1276, %1277 : vector<2x1xf32>
    %1279 = arith.addf %1278, %1090 : vector<2x1xf32>
    %1280 = arith.mulf %1050, %1267 : vector<2x1xf32>
    %1281 = arith.mulf %1055, %1270 : vector<2x1xf32>
    %1282 = arith.addf %1280, %1281 : vector<2x1xf32>
    %1283 = arith.mulf %1060, %1273 : vector<2x1xf32>
    %1284 = arith.addf %1282, %1283 : vector<2x1xf32>
    %1285 = arith.addf %1284, %1096 : vector<2x1xf32>
    %1286 = arith.mulf %1065, %1267 : vector<2x1xf32>
    %1287 = arith.mulf %1070, %1270 : vector<2x1xf32>
    %1288 = arith.addf %1286, %1287 : vector<2x1xf32>
    %1289 = arith.mulf %1075, %1273 : vector<2x1xf32>
    %1290 = arith.addf %1288, %1289 : vector<2x1xf32>
    %1291 = arith.addf %1290, %1102 : vector<2x1xf32>
    %1292 = vector.extract_strided_slice %28 {offsets = [0, 18], sizes = [2, 1], strides = [1, 1]} : vector<2x24xf32> to vector<2x1xf32>
    %1293 = vector.extract_strided_slice %32 {offsets = [0, 18], sizes = [2, 1], strides = [1, 1]} : vector<2x24xf32> to vector<2x1xf32>
    %1294 = vector.extract_strided_slice %36 {offsets = [0, 18], sizes = [2, 1], strides = [1, 1]} : vector<2x24xf32> to vector<2x1xf32>
    %1295 = vector.extract_strided_slice %40 {offsets = [0, 18], sizes = [2, 1], strides = [1, 1]} : vector<2x24xf32> to vector<2x1xf32>
    %1296 = vector.extract_strided_slice %43 {offsets = [0, 18], sizes = [2, 1], strides = [1, 1]} : vector<2x24xf32> to vector<2x1xf32>
    %1297 = vector.extract_strided_slice %47 {offsets = [0, 18], sizes = [2, 1], strides = [1, 1]} : vector<2x24xf32> to vector<2x1xf32>
    %1298 = vector.extract_strided_slice %51 {offsets = [0, 18], sizes = [2, 1], strides = [1, 1]} : vector<2x24xf32> to vector<2x1xf32>
    %1299 = vector.extract_strided_slice %55 {offsets = [0, 18], sizes = [2, 1], strides = [1, 1]} : vector<2x24xf32> to vector<2x1xf32>
    %1300 = vector.extract_strided_slice %58 {offsets = [0, 18], sizes = [2, 1], strides = [1, 1]} : vector<2x24xf32> to vector<2x1xf32>
    %1301 = arith.mulf %1143, %1292 : vector<2x1xf32>
    %1302 = arith.mulf %1148, %1295 : vector<2x1xf32>
    %1303 = arith.addf %1301, %1302 : vector<2x1xf32>
    %1304 = arith.mulf %1153, %1298 : vector<2x1xf32>
    %1305 = arith.addf %1303, %1304 : vector<2x1xf32>
    %1306 = arith.mulf %1143, %1293 : vector<2x1xf32>
    %1307 = arith.mulf %1148, %1296 : vector<2x1xf32>
    %1308 = arith.addf %1306, %1307 : vector<2x1xf32>
    %1309 = arith.mulf %1153, %1299 : vector<2x1xf32>
    %1310 = arith.addf %1308, %1309 : vector<2x1xf32>
    %1311 = arith.mulf %1143, %1294 : vector<2x1xf32>
    %1312 = arith.mulf %1148, %1297 : vector<2x1xf32>
    %1313 = arith.addf %1311, %1312 : vector<2x1xf32>
    %1314 = arith.mulf %1153, %1300 : vector<2x1xf32>
    %1315 = arith.addf %1313, %1314 : vector<2x1xf32>
    %1316 = arith.mulf %1158, %1292 : vector<2x1xf32>
    %1317 = arith.mulf %1163, %1295 : vector<2x1xf32>
    %1318 = arith.addf %1316, %1317 : vector<2x1xf32>
    %1319 = arith.mulf %1168, %1298 : vector<2x1xf32>
    %1320 = arith.addf %1318, %1319 : vector<2x1xf32>
    %1321 = arith.mulf %1158, %1293 : vector<2x1xf32>
    %1322 = arith.mulf %1163, %1296 : vector<2x1xf32>
    %1323 = arith.addf %1321, %1322 : vector<2x1xf32>
    %1324 = arith.mulf %1168, %1299 : vector<2x1xf32>
    %1325 = arith.addf %1323, %1324 : vector<2x1xf32>
    %1326 = arith.mulf %1158, %1294 : vector<2x1xf32>
    %1327 = arith.mulf %1163, %1297 : vector<2x1xf32>
    %1328 = arith.addf %1326, %1327 : vector<2x1xf32>
    %1329 = arith.mulf %1168, %1300 : vector<2x1xf32>
    %1330 = arith.addf %1328, %1329 : vector<2x1xf32>
    %1331 = arith.mulf %1173, %1292 : vector<2x1xf32>
    %1332 = arith.mulf %1178, %1295 : vector<2x1xf32>
    %1333 = arith.addf %1331, %1332 : vector<2x1xf32>
    %1334 = arith.mulf %1183, %1298 : vector<2x1xf32>
    %1335 = arith.addf %1333, %1334 : vector<2x1xf32>
    %1336 = arith.mulf %1173, %1293 : vector<2x1xf32>
    %1337 = arith.mulf %1178, %1296 : vector<2x1xf32>
    %1338 = arith.addf %1336, %1337 : vector<2x1xf32>
    %1339 = arith.mulf %1183, %1299 : vector<2x1xf32>
    %1340 = arith.addf %1338, %1339 : vector<2x1xf32>
    %1341 = arith.mulf %1173, %1294 : vector<2x1xf32>
    %1342 = arith.mulf %1178, %1297 : vector<2x1xf32>
    %1343 = arith.addf %1341, %1342 : vector<2x1xf32>
    %1344 = arith.mulf %1183, %1300 : vector<2x1xf32>
    %1345 = arith.addf %1343, %1344 : vector<2x1xf32>
    %1346 = vector.extract_strided_slice %3 {offsets = [0, 18], sizes = [2, 1], strides = [1, 1]} : vector<2x24xf32> to vector<2x1xf32>
    %1347 = vector.extract_strided_slice %3 {offsets = [0, 16], sizes = [2, 1], strides = [1, 1]} : vector<2x24xf32> to vector<2x1xf32>
    %1348 = arith.subf %1346, %1347 : vector<2x1xf32>
    %1349 = vector.extract_strided_slice %4 {offsets = [0, 18], sizes = [2, 1], strides = [1, 1]} : vector<2x24xf32> to vector<2x1xf32>
    %1350 = vector.extract_strided_slice %4 {offsets = [0, 16], sizes = [2, 1], strides = [1, 1]} : vector<2x24xf32> to vector<2x1xf32>
    %1351 = arith.subf %1349, %1350 : vector<2x1xf32>
    %1352 = vector.extract_strided_slice %5 {offsets = [0, 18], sizes = [2, 1], strides = [1, 1]} : vector<2x24xf32> to vector<2x1xf32>
    %1353 = vector.extract_strided_slice %5 {offsets = [0, 16], sizes = [2, 1], strides = [1, 1]} : vector<2x24xf32> to vector<2x1xf32>
    %1354 = arith.subf %1352, %1353 : vector<2x1xf32>
    %1355 = arith.mulf %1143, %1348 : vector<2x1xf32>
    %1356 = arith.mulf %1148, %1351 : vector<2x1xf32>
    %1357 = arith.addf %1355, %1356 : vector<2x1xf32>
    %1358 = arith.mulf %1153, %1354 : vector<2x1xf32>
    %1359 = arith.addf %1357, %1358 : vector<2x1xf32>
    %1360 = arith.addf %1359, %1198 : vector<2x1xf32>
    %1361 = arith.mulf %1158, %1348 : vector<2x1xf32>
    %1362 = arith.mulf %1163, %1351 : vector<2x1xf32>
    %1363 = arith.addf %1361, %1362 : vector<2x1xf32>
    %1364 = arith.mulf %1168, %1354 : vector<2x1xf32>
    %1365 = arith.addf %1363, %1364 : vector<2x1xf32>
    %1366 = arith.addf %1365, %1204 : vector<2x1xf32>
    %1367 = arith.mulf %1173, %1348 : vector<2x1xf32>
    %1368 = arith.mulf %1178, %1351 : vector<2x1xf32>
    %1369 = arith.addf %1367, %1368 : vector<2x1xf32>
    %1370 = arith.mulf %1183, %1354 : vector<2x1xf32>
    %1371 = arith.addf %1369, %1370 : vector<2x1xf32>
    %1372 = arith.addf %1371, %1210 : vector<2x1xf32>
    %1373 = vector.extract_strided_slice %28 {offsets = [0, 19], sizes = [2, 1], strides = [1, 1]} : vector<2x24xf32> to vector<2x1xf32>
    %1374 = vector.extract_strided_slice %32 {offsets = [0, 19], sizes = [2, 1], strides = [1, 1]} : vector<2x24xf32> to vector<2x1xf32>
    %1375 = vector.extract_strided_slice %36 {offsets = [0, 19], sizes = [2, 1], strides = [1, 1]} : vector<2x24xf32> to vector<2x1xf32>
    %1376 = vector.extract_strided_slice %40 {offsets = [0, 19], sizes = [2, 1], strides = [1, 1]} : vector<2x24xf32> to vector<2x1xf32>
    %1377 = vector.extract_strided_slice %43 {offsets = [0, 19], sizes = [2, 1], strides = [1, 1]} : vector<2x24xf32> to vector<2x1xf32>
    %1378 = vector.extract_strided_slice %47 {offsets = [0, 19], sizes = [2, 1], strides = [1, 1]} : vector<2x24xf32> to vector<2x1xf32>
    %1379 = vector.extract_strided_slice %51 {offsets = [0, 19], sizes = [2, 1], strides = [1, 1]} : vector<2x24xf32> to vector<2x1xf32>
    %1380 = vector.extract_strided_slice %55 {offsets = [0, 19], sizes = [2, 1], strides = [1, 1]} : vector<2x24xf32> to vector<2x1xf32>
    %1381 = vector.extract_strided_slice %58 {offsets = [0, 19], sizes = [2, 1], strides = [1, 1]} : vector<2x24xf32> to vector<2x1xf32>
    %1382 = arith.mulf %1224, %1373 : vector<2x1xf32>
    %1383 = arith.mulf %1229, %1376 : vector<2x1xf32>
    %1384 = arith.addf %1382, %1383 : vector<2x1xf32>
    %1385 = arith.mulf %1234, %1379 : vector<2x1xf32>
    %1386 = arith.addf %1384, %1385 : vector<2x1xf32>
    %1387 = arith.mulf %1224, %1374 : vector<2x1xf32>
    %1388 = arith.mulf %1229, %1377 : vector<2x1xf32>
    %1389 = arith.addf %1387, %1388 : vector<2x1xf32>
    %1390 = arith.mulf %1234, %1380 : vector<2x1xf32>
    %1391 = arith.addf %1389, %1390 : vector<2x1xf32>
    %1392 = arith.mulf %1224, %1375 : vector<2x1xf32>
    %1393 = arith.mulf %1229, %1378 : vector<2x1xf32>
    %1394 = arith.addf %1392, %1393 : vector<2x1xf32>
    %1395 = arith.mulf %1234, %1381 : vector<2x1xf32>
    %1396 = arith.addf %1394, %1395 : vector<2x1xf32>
    %1397 = arith.mulf %1239, %1373 : vector<2x1xf32>
    %1398 = arith.mulf %1244, %1376 : vector<2x1xf32>
    %1399 = arith.addf %1397, %1398 : vector<2x1xf32>
    %1400 = arith.mulf %1249, %1379 : vector<2x1xf32>
    %1401 = arith.addf %1399, %1400 : vector<2x1xf32>
    %1402 = arith.mulf %1239, %1374 : vector<2x1xf32>
    %1403 = arith.mulf %1244, %1377 : vector<2x1xf32>
    %1404 = arith.addf %1402, %1403 : vector<2x1xf32>
    %1405 = arith.mulf %1249, %1380 : vector<2x1xf32>
    %1406 = arith.addf %1404, %1405 : vector<2x1xf32>
    %1407 = arith.mulf %1239, %1375 : vector<2x1xf32>
    %1408 = arith.mulf %1244, %1378 : vector<2x1xf32>
    %1409 = arith.addf %1407, %1408 : vector<2x1xf32>
    %1410 = arith.mulf %1249, %1381 : vector<2x1xf32>
    %1411 = arith.addf %1409, %1410 : vector<2x1xf32>
    %1412 = arith.mulf %1254, %1373 : vector<2x1xf32>
    %1413 = arith.mulf %1259, %1376 : vector<2x1xf32>
    %1414 = arith.addf %1412, %1413 : vector<2x1xf32>
    %1415 = arith.mulf %1264, %1379 : vector<2x1xf32>
    %1416 = arith.addf %1414, %1415 : vector<2x1xf32>
    %1417 = arith.mulf %1254, %1374 : vector<2x1xf32>
    %1418 = arith.mulf %1259, %1377 : vector<2x1xf32>
    %1419 = arith.addf %1417, %1418 : vector<2x1xf32>
    %1420 = arith.mulf %1264, %1380 : vector<2x1xf32>
    %1421 = arith.addf %1419, %1420 : vector<2x1xf32>
    %1422 = arith.mulf %1254, %1375 : vector<2x1xf32>
    %1423 = arith.mulf %1259, %1378 : vector<2x1xf32>
    %1424 = arith.addf %1422, %1423 : vector<2x1xf32>
    %1425 = arith.mulf %1264, %1381 : vector<2x1xf32>
    %1426 = arith.addf %1424, %1425 : vector<2x1xf32>
    %1427 = vector.extract_strided_slice %3 {offsets = [0, 19], sizes = [2, 1], strides = [1, 1]} : vector<2x24xf32> to vector<2x1xf32>
    %1428 = vector.extract_strided_slice %3 {offsets = [0, 17], sizes = [2, 1], strides = [1, 1]} : vector<2x24xf32> to vector<2x1xf32>
    %1429 = arith.subf %1427, %1428 : vector<2x1xf32>
    %1430 = vector.extract_strided_slice %4 {offsets = [0, 19], sizes = [2, 1], strides = [1, 1]} : vector<2x24xf32> to vector<2x1xf32>
    %1431 = vector.extract_strided_slice %4 {offsets = [0, 17], sizes = [2, 1], strides = [1, 1]} : vector<2x24xf32> to vector<2x1xf32>
    %1432 = arith.subf %1430, %1431 : vector<2x1xf32>
    %1433 = vector.extract_strided_slice %5 {offsets = [0, 19], sizes = [2, 1], strides = [1, 1]} : vector<2x24xf32> to vector<2x1xf32>
    %1434 = vector.extract_strided_slice %5 {offsets = [0, 17], sizes = [2, 1], strides = [1, 1]} : vector<2x24xf32> to vector<2x1xf32>
    %1435 = arith.subf %1433, %1434 : vector<2x1xf32>
    %1436 = arith.mulf %1224, %1429 : vector<2x1xf32>
    %1437 = arith.mulf %1229, %1432 : vector<2x1xf32>
    %1438 = arith.addf %1436, %1437 : vector<2x1xf32>
    %1439 = arith.mulf %1234, %1435 : vector<2x1xf32>
    %1440 = arith.addf %1438, %1439 : vector<2x1xf32>
    %1441 = arith.addf %1440, %1279 : vector<2x1xf32>
    %1442 = arith.mulf %1239, %1429 : vector<2x1xf32>
    %1443 = arith.mulf %1244, %1432 : vector<2x1xf32>
    %1444 = arith.addf %1442, %1443 : vector<2x1xf32>
    %1445 = arith.mulf %1249, %1435 : vector<2x1xf32>
    %1446 = arith.addf %1444, %1445 : vector<2x1xf32>
    %1447 = arith.addf %1446, %1285 : vector<2x1xf32>
    %1448 = arith.mulf %1254, %1429 : vector<2x1xf32>
    %1449 = arith.mulf %1259, %1432 : vector<2x1xf32>
    %1450 = arith.addf %1448, %1449 : vector<2x1xf32>
    %1451 = arith.mulf %1264, %1435 : vector<2x1xf32>
    %1452 = arith.addf %1450, %1451 : vector<2x1xf32>
    %1453 = arith.addf %1452, %1291 : vector<2x1xf32>
    %1454 = vector.extract_strided_slice %28 {offsets = [0, 20], sizes = [2, 1], strides = [1, 1]} : vector<2x24xf32> to vector<2x1xf32>
    %1455 = vector.extract_strided_slice %32 {offsets = [0, 20], sizes = [2, 1], strides = [1, 1]} : vector<2x24xf32> to vector<2x1xf32>
    %1456 = vector.extract_strided_slice %36 {offsets = [0, 20], sizes = [2, 1], strides = [1, 1]} : vector<2x24xf32> to vector<2x1xf32>
    %1457 = vector.extract_strided_slice %40 {offsets = [0, 20], sizes = [2, 1], strides = [1, 1]} : vector<2x24xf32> to vector<2x1xf32>
    %1458 = vector.extract_strided_slice %43 {offsets = [0, 20], sizes = [2, 1], strides = [1, 1]} : vector<2x24xf32> to vector<2x1xf32>
    %1459 = vector.extract_strided_slice %47 {offsets = [0, 20], sizes = [2, 1], strides = [1, 1]} : vector<2x24xf32> to vector<2x1xf32>
    %1460 = vector.extract_strided_slice %51 {offsets = [0, 20], sizes = [2, 1], strides = [1, 1]} : vector<2x24xf32> to vector<2x1xf32>
    %1461 = vector.extract_strided_slice %55 {offsets = [0, 20], sizes = [2, 1], strides = [1, 1]} : vector<2x24xf32> to vector<2x1xf32>
    %1462 = vector.extract_strided_slice %58 {offsets = [0, 20], sizes = [2, 1], strides = [1, 1]} : vector<2x24xf32> to vector<2x1xf32>
    %1463 = arith.mulf %1305, %1454 : vector<2x1xf32>
    %1464 = arith.mulf %1310, %1457 : vector<2x1xf32>
    %1465 = arith.addf %1463, %1464 : vector<2x1xf32>
    %1466 = arith.mulf %1315, %1460 : vector<2x1xf32>
    %1467 = arith.addf %1465, %1466 : vector<2x1xf32>
    %1468 = arith.mulf %1305, %1455 : vector<2x1xf32>
    %1469 = arith.mulf %1310, %1458 : vector<2x1xf32>
    %1470 = arith.addf %1468, %1469 : vector<2x1xf32>
    %1471 = arith.mulf %1315, %1461 : vector<2x1xf32>
    %1472 = arith.addf %1470, %1471 : vector<2x1xf32>
    %1473 = arith.mulf %1305, %1456 : vector<2x1xf32>
    %1474 = arith.mulf %1310, %1459 : vector<2x1xf32>
    %1475 = arith.addf %1473, %1474 : vector<2x1xf32>
    %1476 = arith.mulf %1315, %1462 : vector<2x1xf32>
    %1477 = arith.addf %1475, %1476 : vector<2x1xf32>
    %1478 = arith.mulf %1320, %1454 : vector<2x1xf32>
    %1479 = arith.mulf %1325, %1457 : vector<2x1xf32>
    %1480 = arith.addf %1478, %1479 : vector<2x1xf32>
    %1481 = arith.mulf %1330, %1460 : vector<2x1xf32>
    %1482 = arith.addf %1480, %1481 : vector<2x1xf32>
    %1483 = arith.mulf %1320, %1455 : vector<2x1xf32>
    %1484 = arith.mulf %1325, %1458 : vector<2x1xf32>
    %1485 = arith.addf %1483, %1484 : vector<2x1xf32>
    %1486 = arith.mulf %1330, %1461 : vector<2x1xf32>
    %1487 = arith.addf %1485, %1486 : vector<2x1xf32>
    %1488 = arith.mulf %1320, %1456 : vector<2x1xf32>
    %1489 = arith.mulf %1325, %1459 : vector<2x1xf32>
    %1490 = arith.addf %1488, %1489 : vector<2x1xf32>
    %1491 = arith.mulf %1330, %1462 : vector<2x1xf32>
    %1492 = arith.addf %1490, %1491 : vector<2x1xf32>
    %1493 = arith.mulf %1335, %1454 : vector<2x1xf32>
    %1494 = arith.mulf %1340, %1457 : vector<2x1xf32>
    %1495 = arith.addf %1493, %1494 : vector<2x1xf32>
    %1496 = arith.mulf %1345, %1460 : vector<2x1xf32>
    %1497 = arith.addf %1495, %1496 : vector<2x1xf32>
    %1498 = arith.mulf %1335, %1455 : vector<2x1xf32>
    %1499 = arith.mulf %1340, %1458 : vector<2x1xf32>
    %1500 = arith.addf %1498, %1499 : vector<2x1xf32>
    %1501 = arith.mulf %1345, %1461 : vector<2x1xf32>
    %1502 = arith.addf %1500, %1501 : vector<2x1xf32>
    %1503 = arith.mulf %1335, %1456 : vector<2x1xf32>
    %1504 = arith.mulf %1340, %1459 : vector<2x1xf32>
    %1505 = arith.addf %1503, %1504 : vector<2x1xf32>
    %1506 = arith.mulf %1345, %1462 : vector<2x1xf32>
    %1507 = arith.addf %1505, %1506 : vector<2x1xf32>
    %1508 = vector.extract_strided_slice %3 {offsets = [0, 20], sizes = [2, 1], strides = [1, 1]} : vector<2x24xf32> to vector<2x1xf32>
    %1509 = vector.extract_strided_slice %3 {offsets = [0, 18], sizes = [2, 1], strides = [1, 1]} : vector<2x24xf32> to vector<2x1xf32>
    %1510 = arith.subf %1508, %1509 : vector<2x1xf32>
    %1511 = vector.extract_strided_slice %4 {offsets = [0, 20], sizes = [2, 1], strides = [1, 1]} : vector<2x24xf32> to vector<2x1xf32>
    %1512 = vector.extract_strided_slice %4 {offsets = [0, 18], sizes = [2, 1], strides = [1, 1]} : vector<2x24xf32> to vector<2x1xf32>
    %1513 = arith.subf %1511, %1512 : vector<2x1xf32>
    %1514 = vector.extract_strided_slice %5 {offsets = [0, 20], sizes = [2, 1], strides = [1, 1]} : vector<2x24xf32> to vector<2x1xf32>
    %1515 = vector.extract_strided_slice %5 {offsets = [0, 18], sizes = [2, 1], strides = [1, 1]} : vector<2x24xf32> to vector<2x1xf32>
    %1516 = arith.subf %1514, %1515 : vector<2x1xf32>
    %1517 = arith.mulf %1305, %1510 : vector<2x1xf32>
    %1518 = arith.mulf %1310, %1513 : vector<2x1xf32>
    %1519 = arith.addf %1517, %1518 : vector<2x1xf32>
    %1520 = arith.mulf %1315, %1516 : vector<2x1xf32>
    %1521 = arith.addf %1519, %1520 : vector<2x1xf32>
    %1522 = arith.addf %1521, %1360 : vector<2x1xf32>
    %1523 = arith.mulf %1320, %1510 : vector<2x1xf32>
    %1524 = arith.mulf %1325, %1513 : vector<2x1xf32>
    %1525 = arith.addf %1523, %1524 : vector<2x1xf32>
    %1526 = arith.mulf %1330, %1516 : vector<2x1xf32>
    %1527 = arith.addf %1525, %1526 : vector<2x1xf32>
    %1528 = arith.addf %1527, %1366 : vector<2x1xf32>
    %1529 = arith.mulf %1335, %1510 : vector<2x1xf32>
    %1530 = arith.mulf %1340, %1513 : vector<2x1xf32>
    %1531 = arith.addf %1529, %1530 : vector<2x1xf32>
    %1532 = arith.mulf %1345, %1516 : vector<2x1xf32>
    %1533 = arith.addf %1531, %1532 : vector<2x1xf32>
    %1534 = arith.addf %1533, %1372 : vector<2x1xf32>
    %1535 = vector.extract_strided_slice %28 {offsets = [0, 21], sizes = [2, 1], strides = [1, 1]} : vector<2x24xf32> to vector<2x1xf32>
    %1536 = vector.extract_strided_slice %32 {offsets = [0, 21], sizes = [2, 1], strides = [1, 1]} : vector<2x24xf32> to vector<2x1xf32>
    %1537 = vector.extract_strided_slice %36 {offsets = [0, 21], sizes = [2, 1], strides = [1, 1]} : vector<2x24xf32> to vector<2x1xf32>
    %1538 = vector.extract_strided_slice %40 {offsets = [0, 21], sizes = [2, 1], strides = [1, 1]} : vector<2x24xf32> to vector<2x1xf32>
    %1539 = vector.extract_strided_slice %43 {offsets = [0, 21], sizes = [2, 1], strides = [1, 1]} : vector<2x24xf32> to vector<2x1xf32>
    %1540 = vector.extract_strided_slice %47 {offsets = [0, 21], sizes = [2, 1], strides = [1, 1]} : vector<2x24xf32> to vector<2x1xf32>
    %1541 = vector.extract_strided_slice %51 {offsets = [0, 21], sizes = [2, 1], strides = [1, 1]} : vector<2x24xf32> to vector<2x1xf32>
    %1542 = vector.extract_strided_slice %55 {offsets = [0, 21], sizes = [2, 1], strides = [1, 1]} : vector<2x24xf32> to vector<2x1xf32>
    %1543 = vector.extract_strided_slice %58 {offsets = [0, 21], sizes = [2, 1], strides = [1, 1]} : vector<2x24xf32> to vector<2x1xf32>
    %1544 = arith.mulf %1386, %1535 : vector<2x1xf32>
    %1545 = arith.mulf %1391, %1538 : vector<2x1xf32>
    %1546 = arith.addf %1544, %1545 : vector<2x1xf32>
    %1547 = arith.mulf %1396, %1541 : vector<2x1xf32>
    %1548 = arith.addf %1546, %1547 : vector<2x1xf32>
    %1549 = arith.mulf %1386, %1536 : vector<2x1xf32>
    %1550 = arith.mulf %1391, %1539 : vector<2x1xf32>
    %1551 = arith.addf %1549, %1550 : vector<2x1xf32>
    %1552 = arith.mulf %1396, %1542 : vector<2x1xf32>
    %1553 = arith.addf %1551, %1552 : vector<2x1xf32>
    %1554 = arith.mulf %1386, %1537 : vector<2x1xf32>
    %1555 = arith.mulf %1391, %1540 : vector<2x1xf32>
    %1556 = arith.addf %1554, %1555 : vector<2x1xf32>
    %1557 = arith.mulf %1396, %1543 : vector<2x1xf32>
    %1558 = arith.addf %1556, %1557 : vector<2x1xf32>
    %1559 = arith.mulf %1401, %1535 : vector<2x1xf32>
    %1560 = arith.mulf %1406, %1538 : vector<2x1xf32>
    %1561 = arith.addf %1559, %1560 : vector<2x1xf32>
    %1562 = arith.mulf %1411, %1541 : vector<2x1xf32>
    %1563 = arith.addf %1561, %1562 : vector<2x1xf32>
    %1564 = arith.mulf %1401, %1536 : vector<2x1xf32>
    %1565 = arith.mulf %1406, %1539 : vector<2x1xf32>
    %1566 = arith.addf %1564, %1565 : vector<2x1xf32>
    %1567 = arith.mulf %1411, %1542 : vector<2x1xf32>
    %1568 = arith.addf %1566, %1567 : vector<2x1xf32>
    %1569 = arith.mulf %1401, %1537 : vector<2x1xf32>
    %1570 = arith.mulf %1406, %1540 : vector<2x1xf32>
    %1571 = arith.addf %1569, %1570 : vector<2x1xf32>
    %1572 = arith.mulf %1411, %1543 : vector<2x1xf32>
    %1573 = arith.addf %1571, %1572 : vector<2x1xf32>
    %1574 = arith.mulf %1416, %1535 : vector<2x1xf32>
    %1575 = arith.mulf %1421, %1538 : vector<2x1xf32>
    %1576 = arith.addf %1574, %1575 : vector<2x1xf32>
    %1577 = arith.mulf %1426, %1541 : vector<2x1xf32>
    %1578 = arith.addf %1576, %1577 : vector<2x1xf32>
    %1579 = arith.mulf %1416, %1536 : vector<2x1xf32>
    %1580 = arith.mulf %1421, %1539 : vector<2x1xf32>
    %1581 = arith.addf %1579, %1580 : vector<2x1xf32>
    %1582 = arith.mulf %1426, %1542 : vector<2x1xf32>
    %1583 = arith.addf %1581, %1582 : vector<2x1xf32>
    %1584 = arith.mulf %1416, %1537 : vector<2x1xf32>
    %1585 = arith.mulf %1421, %1540 : vector<2x1xf32>
    %1586 = arith.addf %1584, %1585 : vector<2x1xf32>
    %1587 = arith.mulf %1426, %1543 : vector<2x1xf32>
    %1588 = arith.addf %1586, %1587 : vector<2x1xf32>
    %1589 = vector.extract_strided_slice %3 {offsets = [0, 21], sizes = [2, 1], strides = [1, 1]} : vector<2x24xf32> to vector<2x1xf32>
    %1590 = vector.extract_strided_slice %3 {offsets = [0, 19], sizes = [2, 1], strides = [1, 1]} : vector<2x24xf32> to vector<2x1xf32>
    %1591 = arith.subf %1589, %1590 : vector<2x1xf32>
    %1592 = vector.extract_strided_slice %4 {offsets = [0, 21], sizes = [2, 1], strides = [1, 1]} : vector<2x24xf32> to vector<2x1xf32>
    %1593 = vector.extract_strided_slice %4 {offsets = [0, 19], sizes = [2, 1], strides = [1, 1]} : vector<2x24xf32> to vector<2x1xf32>
    %1594 = arith.subf %1592, %1593 : vector<2x1xf32>
    %1595 = vector.extract_strided_slice %5 {offsets = [0, 21], sizes = [2, 1], strides = [1, 1]} : vector<2x24xf32> to vector<2x1xf32>
    %1596 = vector.extract_strided_slice %5 {offsets = [0, 19], sizes = [2, 1], strides = [1, 1]} : vector<2x24xf32> to vector<2x1xf32>
    %1597 = arith.subf %1595, %1596 : vector<2x1xf32>
    %1598 = arith.mulf %1386, %1591 : vector<2x1xf32>
    %1599 = arith.mulf %1391, %1594 : vector<2x1xf32>
    %1600 = arith.addf %1598, %1599 : vector<2x1xf32>
    %1601 = arith.mulf %1396, %1597 : vector<2x1xf32>
    %1602 = arith.addf %1600, %1601 : vector<2x1xf32>
    %1603 = arith.addf %1602, %1441 : vector<2x1xf32>
    %1604 = arith.mulf %1401, %1591 : vector<2x1xf32>
    %1605 = arith.mulf %1406, %1594 : vector<2x1xf32>
    %1606 = arith.addf %1604, %1605 : vector<2x1xf32>
    %1607 = arith.mulf %1411, %1597 : vector<2x1xf32>
    %1608 = arith.addf %1606, %1607 : vector<2x1xf32>
    %1609 = arith.addf %1608, %1447 : vector<2x1xf32>
    %1610 = arith.mulf %1416, %1591 : vector<2x1xf32>
    %1611 = arith.mulf %1421, %1594 : vector<2x1xf32>
    %1612 = arith.addf %1610, %1611 : vector<2x1xf32>
    %1613 = arith.mulf %1426, %1597 : vector<2x1xf32>
    %1614 = arith.addf %1612, %1613 : vector<2x1xf32>
    %1615 = arith.addf %1614, %1453 : vector<2x1xf32>
    %1616 = vector.extract_strided_slice %3 {offsets = [0, 22], sizes = [2, 1], strides = [1, 1]} : vector<2x24xf32> to vector<2x1xf32>
    %1617 = vector.extract_strided_slice %3 {offsets = [0, 20], sizes = [2, 1], strides = [1, 1]} : vector<2x24xf32> to vector<2x1xf32>
    %1618 = arith.subf %1616, %1617 : vector<2x1xf32>
    %1619 = vector.extract_strided_slice %4 {offsets = [0, 22], sizes = [2, 1], strides = [1, 1]} : vector<2x24xf32> to vector<2x1xf32>
    %1620 = vector.extract_strided_slice %4 {offsets = [0, 20], sizes = [2, 1], strides = [1, 1]} : vector<2x24xf32> to vector<2x1xf32>
    %1621 = arith.subf %1619, %1620 : vector<2x1xf32>
    %1622 = vector.extract_strided_slice %5 {offsets = [0, 22], sizes = [2, 1], strides = [1, 1]} : vector<2x24xf32> to vector<2x1xf32>
    %1623 = vector.extract_strided_slice %5 {offsets = [0, 20], sizes = [2, 1], strides = [1, 1]} : vector<2x24xf32> to vector<2x1xf32>
    %1624 = arith.subf %1622, %1623 : vector<2x1xf32>
    %1625 = arith.mulf %1467, %1618 : vector<2x1xf32>
    %1626 = arith.mulf %1472, %1621 : vector<2x1xf32>
    %1627 = arith.addf %1625, %1626 : vector<2x1xf32>
    %1628 = arith.mulf %1477, %1624 : vector<2x1xf32>
    %1629 = arith.addf %1627, %1628 : vector<2x1xf32>
    %1630 = arith.addf %1629, %1522 : vector<2x1xf32>
    %1631 = arith.mulf %1482, %1618 : vector<2x1xf32>
    %1632 = arith.mulf %1487, %1621 : vector<2x1xf32>
    %1633 = arith.addf %1631, %1632 : vector<2x1xf32>
    %1634 = arith.mulf %1492, %1624 : vector<2x1xf32>
    %1635 = arith.addf %1633, %1634 : vector<2x1xf32>
    %1636 = arith.addf %1635, %1528 : vector<2x1xf32>
    %1637 = arith.mulf %1497, %1618 : vector<2x1xf32>
    %1638 = arith.mulf %1502, %1621 : vector<2x1xf32>
    %1639 = arith.addf %1637, %1638 : vector<2x1xf32>
    %1640 = arith.mulf %1507, %1624 : vector<2x1xf32>
    %1641 = arith.addf %1639, %1640 : vector<2x1xf32>
    %1642 = arith.addf %1641, %1534 : vector<2x1xf32>
    %1643 = vector.extract_strided_slice %3 {offsets = [0, 23], sizes = [2, 1], strides = [1, 1]} : vector<2x24xf32> to vector<2x1xf32>
    %1644 = vector.extract_strided_slice %3 {offsets = [0, 21], sizes = [2, 1], strides = [1, 1]} : vector<2x24xf32> to vector<2x1xf32>
    %1645 = arith.subf %1643, %1644 : vector<2x1xf32>
    %1646 = vector.extract_strided_slice %4 {offsets = [0, 23], sizes = [2, 1], strides = [1, 1]} : vector<2x24xf32> to vector<2x1xf32>
    %1647 = vector.extract_strided_slice %4 {offsets = [0, 21], sizes = [2, 1], strides = [1, 1]} : vector<2x24xf32> to vector<2x1xf32>
    %1648 = arith.subf %1646, %1647 : vector<2x1xf32>
    %1649 = vector.extract_strided_slice %5 {offsets = [0, 23], sizes = [2, 1], strides = [1, 1]} : vector<2x24xf32> to vector<2x1xf32>
    %1650 = vector.extract_strided_slice %5 {offsets = [0, 21], sizes = [2, 1], strides = [1, 1]} : vector<2x24xf32> to vector<2x1xf32>
    %1651 = arith.subf %1649, %1650 : vector<2x1xf32>
    %1652 = arith.mulf %1548, %1645 : vector<2x1xf32>
    %1653 = arith.mulf %1553, %1648 : vector<2x1xf32>
    %1654 = arith.addf %1652, %1653 : vector<2x1xf32>
    %1655 = arith.mulf %1558, %1651 : vector<2x1xf32>
    %1656 = arith.addf %1654, %1655 : vector<2x1xf32>
    %1657 = arith.addf %1656, %1603 : vector<2x1xf32>
    %1658 = arith.mulf %1563, %1645 : vector<2x1xf32>
    %1659 = arith.mulf %1568, %1648 : vector<2x1xf32>
    %1660 = arith.addf %1658, %1659 : vector<2x1xf32>
    %1661 = arith.mulf %1573, %1651 : vector<2x1xf32>
    %1662 = arith.addf %1660, %1661 : vector<2x1xf32>
    %1663 = arith.addf %1662, %1609 : vector<2x1xf32>
    %1664 = arith.mulf %1578, %1645 : vector<2x1xf32>
    %1665 = arith.mulf %1583, %1648 : vector<2x1xf32>
    %1666 = arith.addf %1664, %1665 : vector<2x1xf32>
    %1667 = arith.mulf %1588, %1651 : vector<2x1xf32>
    %1668 = arith.addf %1666, %1667 : vector<2x1xf32>
    %1669 = arith.addf %1668, %1615 : vector<2x1xf32>
    %cst_14 = arith.constant 0.000000e+00 : f32
    %1670 = vector.broadcast %cst_14 : f32 to vector<2x128xf32>
    %c0_15 = arith.constant 0 : index
    %c0_16 = arith.constant 0 : index
    %1671 = vector.load %arg4[%c0_15, %c0_16] : memref<2x128xf32, #tpu.memory_space<vmem>>, vector<2x128xf32>
    tpu.vector_store %arg4[%c0_15, %c0_16], %1670 {strides = array<i32>} : memref<2x128xf32, #tpu.memory_space<vmem>>, vector<2x128xf32>,
    %c0_17 = arith.constant 0 : index
    %c0_18 = arith.constant 0 : index
    %1672 = vector.load %arg4[%c0_17, %c0_18] : memref<2x128xf32, #tpu.memory_space<vmem>>, vector<2x1xf32>
    tpu.vector_store %arg4[%c0_17, %c0_18], %72 {strides = array<i32>} : memref<2x128xf32, #tpu.memory_space<vmem>>, vector<2x1xf32>,
    %c0_19 = arith.constant 0 : index
    %c24_20 = arith.constant 24 : index
    %1673 = vector.load %arg4[%c0_19, %c24_20] : memref<2x128xf32, #tpu.memory_space<vmem>>, vector<2x1xf32>
    tpu.vector_store %arg4[%c0_19, %c24_20], %74 {strides = array<i32>} : memref<2x128xf32, #tpu.memory_space<vmem>>, vector<2x1xf32>,
    %c0_21 = arith.constant 0 : index
    %c48_22 = arith.constant 48 : index
    %1674 = vector.load %arg4[%c0_21, %c48_22] : memref<2x128xf32, #tpu.memory_space<vmem>>, vector<2x1xf32>
    tpu.vector_store %arg4[%c0_21, %c48_22], %76 {strides = array<i32>} : memref<2x128xf32, #tpu.memory_space<vmem>>, vector<2x1xf32>,
    %c0_23 = arith.constant 0 : index
    %c1_24 = arith.constant 1 : index
    %1675 = vector.load %arg4[%c0_23, %c1_24] : memref<2x128xf32, #tpu.memory_space<vmem>>, vector<2x1xf32>
    tpu.vector_store %arg4[%c0_23, %c1_24], %145 {strides = array<i32>} : memref<2x128xf32, #tpu.memory_space<vmem>>, vector<2x1xf32>,
    %c0_25 = arith.constant 0 : index
    %c25 = arith.constant 25 : index
    %1676 = vector.load %arg4[%c0_25, %c25] : memref<2x128xf32, #tpu.memory_space<vmem>>, vector<2x1xf32>
    tpu.vector_store %arg4[%c0_25, %c25], %151 {strides = array<i32>} : memref<2x128xf32, #tpu.memory_space<vmem>>, vector<2x1xf32>,
    %c0_26 = arith.constant 0 : index
    %c49 = arith.constant 49 : index
    %1677 = vector.load %arg4[%c0_26, %c49] : memref<2x128xf32, #tpu.memory_space<vmem>>, vector<2x1xf32>
    tpu.vector_store %arg4[%c0_26, %c49], %157 {strides = array<i32>} : memref<2x128xf32, #tpu.memory_space<vmem>>, vector<2x1xf32>,
    %c0_27 = arith.constant 0 : index
    %c2_28 = arith.constant 2 : index
    %1678 = vector.load %arg4[%c0_27, %c2_28] : memref<2x128xf32, #tpu.memory_space<vmem>>, vector<2x1xf32>
    tpu.vector_store %arg4[%c0_27, %c2_28], %226 {strides = array<i32>} : memref<2x128xf32, #tpu.memory_space<vmem>>, vector<2x1xf32>,
    %c0_29 = arith.constant 0 : index
    %c26 = arith.constant 26 : index
    %1679 = vector.load %arg4[%c0_29, %c26] : memref<2x128xf32, #tpu.memory_space<vmem>>, vector<2x1xf32>
    tpu.vector_store %arg4[%c0_29, %c26], %232 {strides = array<i32>} : memref<2x128xf32, #tpu.memory_space<vmem>>, vector<2x1xf32>,
    %c0_30 = arith.constant 0 : index
    %c50 = arith.constant 50 : index
    %1680 = vector.load %arg4[%c0_30, %c50] : memref<2x128xf32, #tpu.memory_space<vmem>>, vector<2x1xf32>
    tpu.vector_store %arg4[%c0_30, %c50], %238 {strides = array<i32>} : memref<2x128xf32, #tpu.memory_space<vmem>>, vector<2x1xf32>,
    %c0_31 = arith.constant 0 : index
    %c3 = arith.constant 3 : index
    %1681 = vector.load %arg4[%c0_31, %c3] : memref<2x128xf32, #tpu.memory_space<vmem>>, vector<2x1xf32>
    tpu.vector_store %arg4[%c0_31, %c3], %307 {strides = array<i32>} : memref<2x128xf32, #tpu.memory_space<vmem>>, vector<2x1xf32>,
    %c0_32 = arith.constant 0 : index
    %c27 = arith.constant 27 : index
    %1682 = vector.load %arg4[%c0_32, %c27] : memref<2x128xf32, #tpu.memory_space<vmem>>, vector<2x1xf32>
    tpu.vector_store %arg4[%c0_32, %c27], %313 {strides = array<i32>} : memref<2x128xf32, #tpu.memory_space<vmem>>, vector<2x1xf32>,
    %c0_33 = arith.constant 0 : index
    %c51 = arith.constant 51 : index
    %1683 = vector.load %arg4[%c0_33, %c51] : memref<2x128xf32, #tpu.memory_space<vmem>>, vector<2x1xf32>
    tpu.vector_store %arg4[%c0_33, %c51], %319 {strides = array<i32>} : memref<2x128xf32, #tpu.memory_space<vmem>>, vector<2x1xf32>,
    %c0_34 = arith.constant 0 : index
    %c4 = arith.constant 4 : index
    %1684 = vector.load %arg4[%c0_34, %c4] : memref<2x128xf32, #tpu.memory_space<vmem>>, vector<2x1xf32>
    tpu.vector_store %arg4[%c0_34, %c4], %388 {strides = array<i32>} : memref<2x128xf32, #tpu.memory_space<vmem>>, vector<2x1xf32>,
    %c0_35 = arith.constant 0 : index
    %c28 = arith.constant 28 : index
    %1685 = vector.load %arg4[%c0_35, %c28] : memref<2x128xf32, #tpu.memory_space<vmem>>, vector<2x1xf32>
    tpu.vector_store %arg4[%c0_35, %c28], %394 {strides = array<i32>} : memref<2x128xf32, #tpu.memory_space<vmem>>, vector<2x1xf32>,
    %c0_36 = arith.constant 0 : index
    %c52 = arith.constant 52 : index
    %1686 = vector.load %arg4[%c0_36, %c52] : memref<2x128xf32, #tpu.memory_space<vmem>>, vector<2x1xf32>
    tpu.vector_store %arg4[%c0_36, %c52], %400 {strides = array<i32>} : memref<2x128xf32, #tpu.memory_space<vmem>>, vector<2x1xf32>,
    %c0_37 = arith.constant 0 : index
    %c5 = arith.constant 5 : index
    %1687 = vector.load %arg4[%c0_37, %c5] : memref<2x128xf32, #tpu.memory_space<vmem>>, vector<2x1xf32>
    tpu.vector_store %arg4[%c0_37, %c5], %469 {strides = array<i32>} : memref<2x128xf32, #tpu.memory_space<vmem>>, vector<2x1xf32>,
    %c0_38 = arith.constant 0 : index
    %c29 = arith.constant 29 : index
    %1688 = vector.load %arg4[%c0_38, %c29] : memref<2x128xf32, #tpu.memory_space<vmem>>, vector<2x1xf32>
    tpu.vector_store %arg4[%c0_38, %c29], %475 {strides = array<i32>} : memref<2x128xf32, #tpu.memory_space<vmem>>, vector<2x1xf32>,
    %c0_39 = arith.constant 0 : index
    %c53 = arith.constant 53 : index
    %1689 = vector.load %arg4[%c0_39, %c53] : memref<2x128xf32, #tpu.memory_space<vmem>>, vector<2x1xf32>
    tpu.vector_store %arg4[%c0_39, %c53], %481 {strides = array<i32>} : memref<2x128xf32, #tpu.memory_space<vmem>>, vector<2x1xf32>,
    %c0_40 = arith.constant 0 : index
    %c6 = arith.constant 6 : index
    %1690 = vector.load %arg4[%c0_40, %c6] : memref<2x128xf32, #tpu.memory_space<vmem>>, vector<2x1xf32>
    tpu.vector_store %arg4[%c0_40, %c6], %550 {strides = array<i32>} : memref<2x128xf32, #tpu.memory_space<vmem>>, vector<2x1xf32>,
    %c0_41 = arith.constant 0 : index
    %c30 = arith.constant 30 : index
    %1691 = vector.load %arg4[%c0_41, %c30] : memref<2x128xf32, #tpu.memory_space<vmem>>, vector<2x1xf32>
    tpu.vector_store %arg4[%c0_41, %c30], %556 {strides = array<i32>} : memref<2x128xf32, #tpu.memory_space<vmem>>, vector<2x1xf32>,
    %c0_42 = arith.constant 0 : index
    %c54 = arith.constant 54 : index
    %1692 = vector.load %arg4[%c0_42, %c54] : memref<2x128xf32, #tpu.memory_space<vmem>>, vector<2x1xf32>
    tpu.vector_store %arg4[%c0_42, %c54], %562 {strides = array<i32>} : memref<2x128xf32, #tpu.memory_space<vmem>>, vector<2x1xf32>,
    %c0_43 = arith.constant 0 : index
    %c7 = arith.constant 7 : index
    %1693 = vector.load %arg4[%c0_43, %c7] : memref<2x128xf32, #tpu.memory_space<vmem>>, vector<2x1xf32>
    tpu.vector_store %arg4[%c0_43, %c7], %631 {strides = array<i32>} : memref<2x128xf32, #tpu.memory_space<vmem>>, vector<2x1xf32>,
    %c0_44 = arith.constant 0 : index
    %c31 = arith.constant 31 : index
    %1694 = vector.load %arg4[%c0_44, %c31] : memref<2x128xf32, #tpu.memory_space<vmem>>, vector<2x1xf32>
    tpu.vector_store %arg4[%c0_44, %c31], %637 {strides = array<i32>} : memref<2x128xf32, #tpu.memory_space<vmem>>, vector<2x1xf32>,
    %c0_45 = arith.constant 0 : index
    %c55 = arith.constant 55 : index
    %1695 = vector.load %arg4[%c0_45, %c55] : memref<2x128xf32, #tpu.memory_space<vmem>>, vector<2x1xf32>
    tpu.vector_store %arg4[%c0_45, %c55], %643 {strides = array<i32>} : memref<2x128xf32, #tpu.memory_space<vmem>>, vector<2x1xf32>,
    %c0_46 = arith.constant 0 : index
    %c8 = arith.constant 8 : index
    %1696 = vector.load %arg4[%c0_46, %c8] : memref<2x128xf32, #tpu.memory_space<vmem>>, vector<2x1xf32>
    tpu.vector_store %arg4[%c0_46, %c8], %712 {strides = array<i32>} : memref<2x128xf32, #tpu.memory_space<vmem>>, vector<2x1xf32>,
    %c0_47 = arith.constant 0 : index
    %c32 = arith.constant 32 : index
    %1697 = vector.load %arg4[%c0_47, %c32] : memref<2x128xf32, #tpu.memory_space<vmem>>, vector<2x1xf32>
    tpu.vector_store %arg4[%c0_47, %c32], %718 {strides = array<i32>} : memref<2x128xf32, #tpu.memory_space<vmem>>, vector<2x1xf32>,
    %c0_48 = arith.constant 0 : index
    %c56 = arith.constant 56 : index
    %1698 = vector.load %arg4[%c0_48, %c56] : memref<2x128xf32, #tpu.memory_space<vmem>>, vector<2x1xf32>
    tpu.vector_store %arg4[%c0_48, %c56], %724 {strides = array<i32>} : memref<2x128xf32, #tpu.memory_space<vmem>>, vector<2x1xf32>,
    %c0_49 = arith.constant 0 : index
    %c9 = arith.constant 9 : index
    %1699 = vector.load %arg4[%c0_49, %c9] : memref<2x128xf32, #tpu.memory_space<vmem>>, vector<2x1xf32>
    tpu.vector_store %arg4[%c0_49, %c9], %793 {strides = array<i32>} : memref<2x128xf32, #tpu.memory_space<vmem>>, vector<2x1xf32>,
    %c0_50 = arith.constant 0 : index
    %c33 = arith.constant 33 : index
    %1700 = vector.load %arg4[%c0_50, %c33] : memref<2x128xf32, #tpu.memory_space<vmem>>, vector<2x1xf32>
    tpu.vector_store %arg4[%c0_50, %c33], %799 {strides = array<i32>} : memref<2x128xf32, #tpu.memory_space<vmem>>, vector<2x1xf32>,
    %c0_51 = arith.constant 0 : index
    %c57 = arith.constant 57 : index
    %1701 = vector.load %arg4[%c0_51, %c57] : memref<2x128xf32, #tpu.memory_space<vmem>>, vector<2x1xf32>
    tpu.vector_store %arg4[%c0_51, %c57], %805 {strides = array<i32>} : memref<2x128xf32, #tpu.memory_space<vmem>>, vector<2x1xf32>,
    %c0_52 = arith.constant 0 : index
    %c10 = arith.constant 10 : index
    %1702 = vector.load %arg4[%c0_52, %c10] : memref<2x128xf32, #tpu.memory_space<vmem>>, vector<2x1xf32>
    tpu.vector_store %arg4[%c0_52, %c10], %820 {strides = array<i32>} : memref<2x128xf32, #tpu.memory_space<vmem>>, vector<2x1xf32>,
    %c0_53 = arith.constant 0 : index
    %c34 = arith.constant 34 : index
    %1703 = vector.load %arg4[%c0_53, %c34] : memref<2x128xf32, #tpu.memory_space<vmem>>, vector<2x1xf32>
    tpu.vector_store %arg4[%c0_53, %c34], %826 {strides = array<i32>} : memref<2x128xf32, #tpu.memory_space<vmem>>, vector<2x1xf32>,
    %c0_54 = arith.constant 0 : index
    %c58 = arith.constant 58 : index
    %1704 = vector.load %arg4[%c0_54, %c58] : memref<2x128xf32, #tpu.memory_space<vmem>>, vector<2x1xf32>
    tpu.vector_store %arg4[%c0_54, %c58], %832 {strides = array<i32>} : memref<2x128xf32, #tpu.memory_space<vmem>>, vector<2x1xf32>,
    %c0_55 = arith.constant 0 : index
    %c11 = arith.constant 11 : index
    %1705 = vector.load %arg4[%c0_55, %c11] : memref<2x128xf32, #tpu.memory_space<vmem>>, vector<2x1xf32>
    tpu.vector_store %arg4[%c0_55, %c11], %847 {strides = array<i32>} : memref<2x128xf32, #tpu.memory_space<vmem>>, vector<2x1xf32>,
    %c0_56 = arith.constant 0 : index
    %c35 = arith.constant 35 : index
    %1706 = vector.load %arg4[%c0_56, %c35] : memref<2x128xf32, #tpu.memory_space<vmem>>, vector<2x1xf32>
    tpu.vector_store %arg4[%c0_56, %c35], %853 {strides = array<i32>} : memref<2x128xf32, #tpu.memory_space<vmem>>, vector<2x1xf32>,
    %c0_57 = arith.constant 0 : index
    %c59 = arith.constant 59 : index
    %1707 = vector.load %arg4[%c0_57, %c59] : memref<2x128xf32, #tpu.memory_space<vmem>>, vector<2x1xf32>
    tpu.vector_store %arg4[%c0_57, %c59], %859 {strides = array<i32>} : memref<2x128xf32, #tpu.memory_space<vmem>>, vector<2x1xf32>,
    %c0_58 = arith.constant 0 : index
    %c12 = arith.constant 12 : index
    %1708 = vector.load %arg4[%c0_58, %c12] : memref<2x128xf32, #tpu.memory_space<vmem>>, vector<2x1xf32>
    tpu.vector_store %arg4[%c0_58, %c12], %928 {strides = array<i32>} : memref<2x128xf32, #tpu.memory_space<vmem>>, vector<2x1xf32>,
    %c0_59 = arith.constant 0 : index
    %c36 = arith.constant 36 : index
    %1709 = vector.load %arg4[%c0_59, %c36] : memref<2x128xf32, #tpu.memory_space<vmem>>, vector<2x1xf32>
    tpu.vector_store %arg4[%c0_59, %c36], %934 {strides = array<i32>} : memref<2x128xf32, #tpu.memory_space<vmem>>, vector<2x1xf32>,
    %c0_60 = arith.constant 0 : index
    %c60 = arith.constant 60 : index
    %1710 = vector.load %arg4[%c0_60, %c60] : memref<2x128xf32, #tpu.memory_space<vmem>>, vector<2x1xf32>
    tpu.vector_store %arg4[%c0_60, %c60], %940 {strides = array<i32>} : memref<2x128xf32, #tpu.memory_space<vmem>>, vector<2x1xf32>,
    %c0_61 = arith.constant 0 : index
    %c13 = arith.constant 13 : index
    %1711 = vector.load %arg4[%c0_61, %c13] : memref<2x128xf32, #tpu.memory_space<vmem>>, vector<2x1xf32>
    tpu.vector_store %arg4[%c0_61, %c13], %1009 {strides = array<i32>} : memref<2x128xf32, #tpu.memory_space<vmem>>, vector<2x1xf32>,
    %c0_62 = arith.constant 0 : index
    %c37 = arith.constant 37 : index
    %1712 = vector.load %arg4[%c0_62, %c37] : memref<2x128xf32, #tpu.memory_space<vmem>>, vector<2x1xf32>
    tpu.vector_store %arg4[%c0_62, %c37], %1015 {strides = array<i32>} : memref<2x128xf32, #tpu.memory_space<vmem>>, vector<2x1xf32>,
    %c0_63 = arith.constant 0 : index
    %c61 = arith.constant 61 : index
    %1713 = vector.load %arg4[%c0_63, %c61] : memref<2x128xf32, #tpu.memory_space<vmem>>, vector<2x1xf32>
    tpu.vector_store %arg4[%c0_63, %c61], %1021 {strides = array<i32>} : memref<2x128xf32, #tpu.memory_space<vmem>>, vector<2x1xf32>,
    %c0_64 = arith.constant 0 : index
    %c14 = arith.constant 14 : index
    %1714 = vector.load %arg4[%c0_64, %c14] : memref<2x128xf32, #tpu.memory_space<vmem>>, vector<2x1xf32>
    tpu.vector_store %arg4[%c0_64, %c14], %1090 {strides = array<i32>} : memref<2x128xf32, #tpu.memory_space<vmem>>, vector<2x1xf32>,
    %c0_65 = arith.constant 0 : index
    %c38 = arith.constant 38 : index
    %1715 = vector.load %arg4[%c0_65, %c38] : memref<2x128xf32, #tpu.memory_space<vmem>>, vector<2x1xf32>
    tpu.vector_store %arg4[%c0_65, %c38], %1096 {strides = array<i32>} : memref<2x128xf32, #tpu.memory_space<vmem>>, vector<2x1xf32>,
    %c0_66 = arith.constant 0 : index
    %c62 = arith.constant 62 : index
    %1716 = vector.load %arg4[%c0_66, %c62] : memref<2x128xf32, #tpu.memory_space<vmem>>, vector<2x1xf32>
    tpu.vector_store %arg4[%c0_66, %c62], %1102 {strides = array<i32>} : memref<2x128xf32, #tpu.memory_space<vmem>>, vector<2x1xf32>,
    %c0_67 = arith.constant 0 : index
    %c15 = arith.constant 15 : index
    %1717 = vector.load %arg4[%c0_67, %c15] : memref<2x128xf32, #tpu.memory_space<vmem>>, vector<2x1xf32>
    tpu.vector_store %arg4[%c0_67, %c15], %1117 {strides = array<i32>} : memref<2x128xf32, #tpu.memory_space<vmem>>, vector<2x1xf32>,
    %c0_68 = arith.constant 0 : index
    %c39 = arith.constant 39 : index
    %1718 = vector.load %arg4[%c0_68, %c39] : memref<2x128xf32, #tpu.memory_space<vmem>>, vector<2x1xf32>
    tpu.vector_store %arg4[%c0_68, %c39], %1123 {strides = array<i32>} : memref<2x128xf32, #tpu.memory_space<vmem>>, vector<2x1xf32>,
    %c0_69 = arith.constant 0 : index
    %c63 = arith.constant 63 : index
    %1719 = vector.load %arg4[%c0_69, %c63] : memref<2x128xf32, #tpu.memory_space<vmem>>, vector<2x1xf32>
    tpu.vector_store %arg4[%c0_69, %c63], %1129 {strides = array<i32>} : memref<2x128xf32, #tpu.memory_space<vmem>>, vector<2x1xf32>,
    %c0_70 = arith.constant 0 : index
    %c16 = arith.constant 16 : index
    %1720 = vector.load %arg4[%c0_70, %c16] : memref<2x128xf32, #tpu.memory_space<vmem>>, vector<2x1xf32>
    tpu.vector_store %arg4[%c0_70, %c16], %1198 {strides = array<i32>} : memref<2x128xf32, #tpu.memory_space<vmem>>, vector<2x1xf32>,
    %c0_71 = arith.constant 0 : index
    %c40 = arith.constant 40 : index
    %1721 = vector.load %arg4[%c0_71, %c40] : memref<2x128xf32, #tpu.memory_space<vmem>>, vector<2x1xf32>
    tpu.vector_store %arg4[%c0_71, %c40], %1204 {strides = array<i32>} : memref<2x128xf32, #tpu.memory_space<vmem>>, vector<2x1xf32>,
    %c0_72 = arith.constant 0 : index
    %c64 = arith.constant 64 : index
    %1722 = vector.load %arg4[%c0_72, %c64] : memref<2x128xf32, #tpu.memory_space<vmem>>, vector<2x1xf32>
    tpu.vector_store %arg4[%c0_72, %c64], %1210 {strides = array<i32>} : memref<2x128xf32, #tpu.memory_space<vmem>>, vector<2x1xf32>,
    %c0_73 = arith.constant 0 : index
    %c17 = arith.constant 17 : index
    %1723 = vector.load %arg4[%c0_73, %c17] : memref<2x128xf32, #tpu.memory_space<vmem>>, vector<2x1xf32>
    tpu.vector_store %arg4[%c0_73, %c17], %1279 {strides = array<i32>} : memref<2x128xf32, #tpu.memory_space<vmem>>, vector<2x1xf32>,
    %c0_74 = arith.constant 0 : index
    %c41 = arith.constant 41 : index
    %1724 = vector.load %arg4[%c0_74, %c41] : memref<2x128xf32, #tpu.memory_space<vmem>>, vector<2x1xf32>
    tpu.vector_store %arg4[%c0_74, %c41], %1285 {strides = array<i32>} : memref<2x128xf32, #tpu.memory_space<vmem>>, vector<2x1xf32>,
    %c0_75 = arith.constant 0 : index
    %c65 = arith.constant 65 : index
    %1725 = vector.load %arg4[%c0_75, %c65] : memref<2x128xf32, #tpu.memory_space<vmem>>, vector<2x1xf32>
    tpu.vector_store %arg4[%c0_75, %c65], %1291 {strides = array<i32>} : memref<2x128xf32, #tpu.memory_space<vmem>>, vector<2x1xf32>,
    %c0_76 = arith.constant 0 : index
    %c18 = arith.constant 18 : index
    %1726 = vector.load %arg4[%c0_76, %c18] : memref<2x128xf32, #tpu.memory_space<vmem>>, vector<2x1xf32>
    tpu.vector_store %arg4[%c0_76, %c18], %1360 {strides = array<i32>} : memref<2x128xf32, #tpu.memory_space<vmem>>, vector<2x1xf32>,
    %c0_77 = arith.constant 0 : index
    %c42 = arith.constant 42 : index
    %1727 = vector.load %arg4[%c0_77, %c42] : memref<2x128xf32, #tpu.memory_space<vmem>>, vector<2x1xf32>
    tpu.vector_store %arg4[%c0_77, %c42], %1366 {strides = array<i32>} : memref<2x128xf32, #tpu.memory_space<vmem>>, vector<2x1xf32>,
    %c0_78 = arith.constant 0 : index
    %c66 = arith.constant 66 : index
    %1728 = vector.load %arg4[%c0_78, %c66] : memref<2x128xf32, #tpu.memory_space<vmem>>, vector<2x1xf32>
    tpu.vector_store %arg4[%c0_78, %c66], %1372 {strides = array<i32>} : memref<2x128xf32, #tpu.memory_space<vmem>>, vector<2x1xf32>,
    %c0_79 = arith.constant 0 : index
    %c19 = arith.constant 19 : index
    %1729 = vector.load %arg4[%c0_79, %c19] : memref<2x128xf32, #tpu.memory_space<vmem>>, vector<2x1xf32>
    tpu.vector_store %arg4[%c0_79, %c19], %1441 {strides = array<i32>} : memref<2x128xf32, #tpu.memory_space<vmem>>, vector<2x1xf32>,
    %c0_80 = arith.constant 0 : index
    %c43 = arith.constant 43 : index
    %1730 = vector.load %arg4[%c0_80, %c43] : memref<2x128xf32, #tpu.memory_space<vmem>>, vector<2x1xf32>
    tpu.vector_store %arg4[%c0_80, %c43], %1447 {strides = array<i32>} : memref<2x128xf32, #tpu.memory_space<vmem>>, vector<2x1xf32>,
    %c0_81 = arith.constant 0 : index
    %c67 = arith.constant 67 : index
    %1731 = vector.load %arg4[%c0_81, %c67] : memref<2x128xf32, #tpu.memory_space<vmem>>, vector<2x1xf32>
    tpu.vector_store %arg4[%c0_81, %c67], %1453 {strides = array<i32>} : memref<2x128xf32, #tpu.memory_space<vmem>>, vector<2x1xf32>,
    %c0_82 = arith.constant 0 : index
    %c20 = arith.constant 20 : index
    %1732 = vector.load %arg4[%c0_82, %c20] : memref<2x128xf32, #tpu.memory_space<vmem>>, vector<2x1xf32>
    tpu.vector_store %arg4[%c0_82, %c20], %1522 {strides = array<i32>} : memref<2x128xf32, #tpu.memory_space<vmem>>, vector<2x1xf32>,
    %c0_83 = arith.constant 0 : index
    %c44 = arith.constant 44 : index
    %1733 = vector.load %arg4[%c0_83, %c44] : memref<2x128xf32, #tpu.memory_space<vmem>>, vector<2x1xf32>
    tpu.vector_store %arg4[%c0_83, %c44], %1528 {strides = array<i32>} : memref<2x128xf32, #tpu.memory_space<vmem>>, vector<2x1xf32>,
    %c0_84 = arith.constant 0 : index
    %c68 = arith.constant 68 : index
    %1734 = vector.load %arg4[%c0_84, %c68] : memref<2x128xf32, #tpu.memory_space<vmem>>, vector<2x1xf32>
    tpu.vector_store %arg4[%c0_84, %c68], %1534 {strides = array<i32>} : memref<2x128xf32, #tpu.memory_space<vmem>>, vector<2x1xf32>,
    %c0_85 = arith.constant 0 : index
    %c21 = arith.constant 21 : index
    %1735 = vector.load %arg4[%c0_85, %c21] : memref<2x128xf32, #tpu.memory_space<vmem>>, vector<2x1xf32>
    tpu.vector_store %arg4[%c0_85, %c21], %1603 {strides = array<i32>} : memref<2x128xf32, #tpu.memory_space<vmem>>, vector<2x1xf32>,
    %c0_86 = arith.constant 0 : index
    %c45 = arith.constant 45 : index
    %1736 = vector.load %arg4[%c0_86, %c45] : memref<2x128xf32, #tpu.memory_space<vmem>>, vector<2x1xf32>
    tpu.vector_store %arg4[%c0_86, %c45], %1609 {strides = array<i32>} : memref<2x128xf32, #tpu.memory_space<vmem>>, vector<2x1xf32>,
    %c0_87 = arith.constant 0 : index
    %c69 = arith.constant 69 : index
    %1737 = vector.load %arg4[%c0_87, %c69] : memref<2x128xf32, #tpu.memory_space<vmem>>, vector<2x1xf32>
    tpu.vector_store %arg4[%c0_87, %c69], %1615 {strides = array<i32>} : memref<2x128xf32, #tpu.memory_space<vmem>>, vector<2x1xf32>,
    %c0_88 = arith.constant 0 : index
    %c22 = arith.constant 22 : index
    %1738 = vector.load %arg4[%c0_88, %c22] : memref<2x128xf32, #tpu.memory_space<vmem>>, vector<2x1xf32>
    tpu.vector_store %arg4[%c0_88, %c22], %1630 {strides = array<i32>} : memref<2x128xf32, #tpu.memory_space<vmem>>, vector<2x1xf32>,
    %c0_89 = arith.constant 0 : index
    %c46 = arith.constant 46 : index
    %1739 = vector.load %arg4[%c0_89, %c46] : memref<2x128xf32, #tpu.memory_space<vmem>>, vector<2x1xf32>
    tpu.vector_store %arg4[%c0_89, %c46], %1636 {strides = array<i32>} : memref<2x128xf32, #tpu.memory_space<vmem>>, vector<2x1xf32>,
    %c0_90 = arith.constant 0 : index
    %c70 = arith.constant 70 : index
    %1740 = vector.load %arg4[%c0_90, %c70] : memref<2x128xf32, #tpu.memory_space<vmem>>, vector<2x1xf32>
    tpu.vector_store %arg4[%c0_90, %c70], %1642 {strides = array<i32>} : memref<2x128xf32, #tpu.memory_space<vmem>>, vector<2x1xf32>,
    %c0_91 = arith.constant 0 : index
    %c23 = arith.constant 23 : index
    %1741 = vector.load %arg4[%c0_91, %c23] : memref<2x128xf32, #tpu.memory_space<vmem>>, vector<2x1xf32>
    tpu.vector_store %arg4[%c0_91, %c23], %1657 {strides = array<i32>} : memref<2x128xf32, #tpu.memory_space<vmem>>, vector<2x1xf32>,
    %c0_92 = arith.constant 0 : index
    %c47 = arith.constant 47 : index
    %1742 = vector.load %arg4[%c0_92, %c47] : memref<2x128xf32, #tpu.memory_space<vmem>>, vector<2x1xf32>
    tpu.vector_store %arg4[%c0_92, %c47], %1663 {strides = array<i32>} : memref<2x128xf32, #tpu.memory_space<vmem>>, vector<2x1xf32>,
    %c0_93 = arith.constant 0 : index
    %c71 = arith.constant 71 : index
    %1743 = vector.load %arg4[%c0_93, %c71] : memref<2x128xf32, #tpu.memory_space<vmem>>, vector<2x1xf32>
    tpu.vector_store %arg4[%c0_93, %c71], %1669 {strides = array<i32>} : memref<2x128xf32, #tpu.memory_space<vmem>>, vector<2x1xf32>,
    return
  }
}

</mosaic_0001>

<llo_original>
// kernel: tpu_custom_call.1
$region0: #{tpu_custom_call.1}
  #allocation0 [shape = 'u32[]', space=smem, size = 0x4, offset = 0x4, fixed_abs, tag = 'smem constant byte address 0x4 - core index']
  #allocation1 [shape = 'u32[144,128]{1,0:T(1,128)}', space=vmem, size = 0x12000, scoped, tag = 'internal scratch']
  %s0 = inlined_call_operand.hbm [shape: f32[2,17], index: 0, kind: input, shape index: {}]
  %s1 = inlined_call_operand.hbm [shape: f32[17,128], index: 1, kind: input, shape index: {}]
  %s2 = inlined_call_operand.vmem [shape: f32[2,72], index: 2, kind: input, shape index: {}]
  %s3 = inlined_call_operand.vmem [shape: f32[2,3], index: 3, kind: input, shape index: {}]
  %s4 = inlined_call_operand.hbm [shape: f32[2,128], index: 4, kind: output, shape index: {}]
  %s5 = sld [smem:[#allocation0]]
  $region34: #{tpu_custom_call.1} parent=0
    _
  %s7 = ssub.s32 1, %s5
  %s8 = scalar_select 0, %s7, %s5
  $region1: #{tpu_custom_call.1} parent=0
    #allocation2 [shape = 'u8[1024]{0}', space=vmem, size = 0x400, scoped, tag = 'input window, operand 0, single buffered']
    #allocation3 [shape = 's32[1]{0}', space=sflag, size = 0x4, scoped, tag = 'scoped memory for tpu_custom_call.1']
    #allocation4 [shape = 's32[1]{0}', space=sflag, size = 0x4, scoped, tag = 'scoped memory for tpu_custom_call.1']
    #allocation5 [shape = 'u8[12288]{0}', space=vmem, size = 0x3000, scoped, tag = 'input window, operand 1, single buffered']
    #allocation6 [shape = 's32[1]{0}', space=sflag, size = 0x4, scoped, tag = 'scoped memory for tpu_custom_call.1']
    #allocation7 [shape = 'u8[1024]{0}', space=vmem, size = 0x400, scoped, tag = 'output window, operand 0, single buffered']
    %9 = vsyncpa [#allocation3], 0
    %10 = vsyncpa [#allocation6], 0
    %11 = vsyncpa [#allocation4], 0
    // Predicated region
    $region2: #{tpu_custom_call.1} parent=1 // pred_check
      _
    $region3: #{tpu_custom_call.1} parent=1 // pred_check_branch
      %13 = sbr.rel (0) target = $region5
    $region4: #{tpu_custom_call.1} parent=1 // pred_region
      %s15 = ssub.s32 32, 32
      %16 = vsyncadd [#allocation3], %s15
      %s18 = sshll.u32 [#allocation2], 4
      %s19 = int_to_ptr.vmem [resolvable:$true] %s18
      %21 = dma.hbm_to_vmem [thread:$0]  %s0, 32, %s19, [#allocation3]
    $region5: #{tpu_custom_call.1} parent=1 // pred_fallthru
      _
    // Predicated region
    $region6: #{tpu_custom_call.1} parent=1 // pred_check
      _
    $region7: #{tpu_custom_call.1} parent=1 // pred_check_branch
      %23 = sbr.rel (0) target = $region9
    $region8: #{tpu_custom_call.1} parent=1 // pred_region
      %s25 = ssub.s32 384, 384
      %26 = vsyncadd [#allocation6], %s25
      %s27 = sshll.u32 [#allocation5], 4
      %s28 = int_to_ptr.vmem [resolvable:$true] %s27
      %33 = dma.hbm_to_vmem [thread:$0]  %s1, 384, %s28, [#allocation6], 128, 128, 8
    $region9: #{tpu_custom_call.1} parent=1 // pred_fallthru
      _
    // Predicated region
    $region10: #{tpu_custom_call.1} parent=1 // pred_check
      _
    $region11: #{tpu_custom_call.1} parent=1 // pred_check_branch
      %35 = sbr.rel (0) target = $region13
    $region12: #{tpu_custom_call.1} parent=1 // pred_region
      _
    $region13: #{tpu_custom_call.1} parent=1 // pred_fallthru
      _
    // Predicated region
    $region14: #{tpu_custom_call.1} parent=1 // pred_check
      _
    $region15: #{tpu_custom_call.1} parent=1 // pred_check_branch
      %37 = sbr.rel (0) target = $region17
    $region16: #{tpu_custom_call.1} parent=1 // pred_region
      _
    $region17: #{tpu_custom_call.1} parent=1 // pred_fallthru
      _
    // Predicated region
    $region18: #{tpu_custom_call.1} parent=1 // pred_check
      _
    $region19: #{tpu_custom_call.1} parent=1 // pred_check_branch
      %39 = sbr.rel (0) target = $region21
    $region20: #{tpu_custom_call.1} parent=1 // pred_region
      %40 = dma.done [#allocation3], 32
    $region21: #{tpu_custom_call.1} parent=1 // pred_fallthru
      _
    // Predicated region
    $region22: #{tpu_custom_call.1} parent=1 // pred_check
      _
    $region23: #{tpu_custom_call.1} parent=1 // pred_check_branch
      %42 = sbr.rel (0) target = $region25
    $region24: #{tpu_custom_call.1} parent=1 // pred_region
      %43 = dma.done [#allocation6], 384
    $region25: #{tpu_custom_call.1} parent=1 // pred_fallthru
      _
    %v44 = vld [vmem:[#allocation2] sm:$0x3]
    %v45 = vld [vmem:[#allocation5] sm:$0xff]
    %v46 = vld [vmem:[#allocation5 + $0x8] sm:$0xff]
    %v47 = vld [vmem:[#allocation5 + $0x10] sm:$0x1]
    %vm48 = vcmask 138240
    %v50 = vsel %vm48, %v44, 0
    %vm52 = vcmask 1040384
    %v54 = vsel %vm52, %v47, 0
    %56 = vmatprep.subr.mxu0 0.0
    %57 = vmatpush1.msra.mxu0 0.0
    %58 = vmatprep.subr.mxu0 0.0
    %59 = vmatpush1.msra.mxu0 0.0
    %60 = vmatprep.subr.mxu0 0.0
    %61 = vmatpush1.msra.mxu0 0.0
    %62 = vmatprep.subr.mxu0 0.0
    %63 = vmatpush1.msra.mxu0 0.0
    %64 = vmatprep.subr.mxu0 0.0
    %65 = vmatpush1.msra.mxu0 0.0
    %66 = vmatprep.subr.mxu0 0.0
    %67 = vmatpush1.msra.mxu0 0.0
    %68 = vmatprep.subr.mxu0 0.0
    %69 = vmatpush1.msra.mxu0 0.0
    %70 = vmatprep.subr.mxu0 0.0
    %71 = vmatpush1.msra.mxu0 0.0
    %72 = vmatprep.subr.mxu0 0.0
    %73 = vmatpush1.msra.mxu0 0.0
    %74 = vmatprep.subr.mxu0 0.0
    %75 = vmatpush1.msra.mxu0 0.0
    %76 = vmatprep.subr.mxu0 0.0
    %77 = vmatpush1.msra.mxu0 0.0
    %78 = vmatprep.subr.mxu0 0.0
    %79 = vmatpush1.msra.mxu0 0.0
    %80 = vmatprep.subr.mxu0 0.0
    %81 = vmatpush1.msra.mxu0 0.0
    %82 = vmatprep.subr.mxu0 0.0
    %83 = vmatpush1.msra.mxu0 %v54
    %84 = vmatprep.subr.mxu0 0.0
    %85 = vmatpush1.msra.mxu0 %v46
    %86 = vmatprep.subr.mxu0 0.0
    %87 = vmatpush1.msra.mxu0 %v45
    %88 = vmatprep.subr.mxu0 0.0
    %89 = vmatpush2.msra.mxu0 0.0
    %90 = vmatprep.subr.mxu0 0.0
    %91 = vmatpush2.msra.mxu0 0.0
    %92 = vmatprep.subr.mxu0 0.0
    %93 = vmatpush2.msra.mxu0 0.0
    %94 = vmatprep.subr.mxu0 0.0
    %95 = vmatpush2.msra.mxu0 0.0
    %96 = vmatprep.subr.mxu0 0.0
    %97 = vmatpush2.msra.mxu0 0.0
    %98 = vmatprep.subr.mxu0 0.0
    %99 = vmatpush2.msra.mxu0 0.0
    %100 = vmatprep.subr.mxu0 0.0
    %101 = vmatpush2.msra.mxu0 0.0
    %102 = vmatprep.subr.mxu0 0.0
    %103 = vmatpush2.msra.mxu0 0.0
    %104 = vmatprep.subr.mxu0 0.0
    %105 = vmatpush2.msra.mxu0 0.0
    %106 = vmatprep.subr.mxu0 0.0
    %107 = vmatpush2.msra.mxu0 0.0
    %108 = vmatprep.subr.mxu0 0.0
    %109 = vmatpush2.msra.mxu0 0.0
    %110 = vmatprep.subr.mxu0 0.0
    %111 = vmatpush2.msra.mxu0 0.0
    %112 = vmatprep.subr.mxu0 0.0
    %113 = vmatpush2.msra.mxu0 0.0
    %114 = vmatprep.subr.mxu0 0.0
    %115 = vmatpush2.msra.mxu0 0.0
    %116 = vmatprep.subr.mxu0 0.0
    %117 = vmatpush2.msra.mxu0 0.0
    %118 = vmatprep.subr.mxu0 0.0
    %119 = vmatpush2.msra.mxu0 0.0
    %120 = vmatprep.mubr.f32.mxu0 0.0
    %121 = vmatmul.mubr.f32.gmra.mxu0 %v50
    %v122 = vpop.f32.mrf.mxu0
    %v123 = vadd.f32 0.0, %v122
    %v124 = vpop.f32.mrf.mxu0
    %125 = vdwg.mxu0
    %v126 = vld [vmem:[%s2] sm:$0x3]
    %v127 = vmul.f32 %v126, %v126
    %129 = vrot.lane.b32.xlu0 %v127, 104
    %v130 = vpop.permute.xlu0 %129
    %v132 = vadd.f32 %v127, %v130
    %133 = vrot.lane.b32.xlu0 %v127, 80
    %v134 = vpop.permute.xlu0 %133
    %v136 = vadd.f32 %v132, %v134
    %v137 = vadd.f32 %v136, 1e-12
    %v138 = vrsqrt.pop %v137
    %v139 = vmul.f32 %v137, %v138
    %vm140 = vcmp.eq.f32.partialorder %v137, inf
    %v141 = vsel %vm140, %v137, %v139
    %vm142 = vcmp.eq.f32.partialorder %v137, 0.0
    %v143 = vand.u32 %v137, 2147483648
    %v144 = vsel %vm142, %v143, %v141
    %v145 = vrcp.pop %v144
    %v146 = vmul.f32 1.0, %v145
    %v147 = vmul.f32 %v126, %v146
    %149 = vrot.lane.b32.xlu0 %v146, 24
    %v150 = vpop.permute.xlu0 %149
    %v152 = vmul.f32 %v126, %v150
    %153 = vrot.lane.b32.xlu0 %v146, 48
    %v154 = vpop.permute.xlu0 %153
    %v156 = vmul.f32 %v126, %v154
    %v157 = vand.u32 2147483647, %v144
    %vm158 = vcmp.le.f32.partialorder %v157, 0.7853982
    %vm159 = vcmp.lt.s32.totalorder %v144, 0
    %v160 = vand.u32 %v144, 2139095040
    %v161 = vshrl.u32 %v160, 23
    %v162 = vsub.s32 %v161, 127
    %v163 = vand.u32 2147483647, %v144
    %v164 = vand.u32 %v163, 8388607
    %v165 = vor.u32 %v164, 8388608
    %v166 = vsub.s32 0, %v165
    %v167 = vadd.s32 %v162, 1
    %vm168 = vcmp.gt.s32.totalorder %v167, 0
    %v169 = vsel %vm168, %v167, 0
    %v170 = vshrl.u32 %v169, 5
    %v171 = vand.u32 %v169, 31
    %v172 = vsub.s32 32, %v171
    %v173 = vshrl.u32 683565275, %v172
    %v174 = vshll.u32 683565275, %v171
    %v175 = vshrl.u32 2475754826, %v172
    %v176 = vor.u32 %v174, %v175
    %v177 = vshll.u32 2475754826, %v171
    %v178 = vshrl.u32 2131351028, %v172
    %v179 = vor.u32 %v177, %v178
    %v180 = vshll.u32 2131351028, %v171
    %v181 = vshrl.u32 2102212464, %v172
    %v182 = vor.u32 %v180, %v181
    %v183 = vshll.u32 2102212464, %v171
    %v184 = vshrl.u32 920167782, %v172
    %v185 = vor.u32 %v183, %v184
    %v186 = vshll.u32 920167782, %v171
    %v187 = vshrl.u32 1326507024, %v172
    %v188 = vor.u32 %v186, %v187
    %vm189 = vcmp.lt.s32.totalorder %v170, 1
    %vm190 = vcmp.lt.s32.totalorder %v170, 2
    %vm191 = vcmp.lt.s32.totalorder %v170, 3
    %vm192 = vcmp.lt.s32.totalorder %v170, 4
    %v193 = vsel %vm189, %v173, %v176
    %v194 = vsel %vm192, %v182, 2102212464
    %v195 = vsel %vm191, %v179, %v194
    %v196 = vsel %vm190, %v193, %v195
    %v197 = vsel %vm189, %v176, %v179
    %v198 = vsel %vm192, %v185, 920167782
    %v199 = vsel %vm191, %v182, %v198
    %v200 = vsel %vm190, %v197, %v199
    %v201 = vsel %vm189, %v179, %v182
    %v202 = vsel %vm192, %v188, 1326507024
    %v203 = vsel %vm191, %v185, %v202
    %v204 = vsel %vm190, %v201, %v203
    %v205 = vshll.u32 %v165, 8
    %v206 = vmul.u32.u64.compose %v205, %v204
    %v207 = vextract.low.u32 %v206
    %v208 = vextract.high.u32 %v206
    %v209 = vmul.u32.u64.compose %v205, %v200
    %v210 = vextract.low.u32 %v209
    %v211 = vextract.high.u32 %v209
    %v212 = vmul.u32 %v205, %v196
    %v213 = vadd.s32 %v208, %v210
    %vm214 = vc.u32 %v208, %v210
    %v215 = vadd.s32 %v211, 1
    %v216 = vsel %vm214, %v215, %v211
    %v217 = vadd.s32 %v212, %v216
    %v218 = vadd.s32 %v217, 536870912
    %v219 = vshrl.u32 %v218, 30
    %v220 = vshll.u32 %v219, 30
    %v221 = vsub.s32 %v217, %v220
    %vm222 = vcmp.lt.s32.totalorder %v221, 0
    %v223 = vsub.s32 0, %v221
    %v224 = vsel %vm222, %v223, %v221
    %v225 = vclz %v224
    %v226 = vsub.s32 %v225, 2
    %vm227 = vcmp.gt.s32.totalorder 0, %v226
    %v228 = vsel %vm227, 0, %v226
    %v229 = vsub.s32 32, %v228
    %v230 = vshll.u32 %v221, %v228
    %v231 = vshrl.u32 %v213, %v229
    %v232 = vor.u32 %v230, %v231
    %v233 = vsub.s32 4294967266, %v228
    %v234 = vadd.s32 %v233, 127
    %v235 = vshll.u32 %v234, 23
    %v236 = vor.u32 4788187, %v235
    %v237 = vand.u32 2147483647, %v236
    %v239 = vcvt.s32.f32 %v232
    %v240 = vmul.f32 %v239, %v237
    %v241 = vxor.u32 %v240, 2147483648
    %v242 = vsel %vm159, %v241, %v240
    %v243 = vsub.s32 4, %v219
    %v244 = vsel %vm159, %v243, %v219
    %v245 = vsel %vm158, %v144, %v242
    %v246 = vsel %vm158, 0, %v244
    %v247 = vcosq.f32.pop %v245
    %v248 = vsinq.f32.pop %v245
    %vm249 = vweird.f32 %v144
    %v250 = vand.u32 %v246, 3
    %vm251 = vcmp.lt.s32.totalorder %v250, 2
    %vm252 = vcmp.eq.s32.totalorder %v250, 0
    %v253 = vxor.u32 %v248, 2147483648
    %v254 = vsel %vm252, %v247, %v253
    %vm255 = vcmp.eq.s32.totalorder %v250, 2
    %v256 = vxor.u32 %v247, 2147483648
    %v257 = vsel %vm255, %v256, %v248
    %v258 = vsel %vm251, %v254, %v257
    %v259 = vsel %vm249, nan, %v258
    %v260 = vand.u32 2147483647, %v144
    %vm261 = vcmp.le.f32.partialorder %v260, 0.7853982
    %vm262 = vcmp.lt.s32.totalorder %v144, 0
    %v263 = vand.u32 %v144, 2139095040
    %v264 = vshrl.u32 %v263, 23
    %v265 = vsub.s32 %v264, 127
    %v266 = vand.u32 2147483647, %v144
    %v267 = vand.u32 %v266, 8388607
    %v268 = vor.u32 %v267, 8388608
    %v269 = vsub.s32 0, %v268
    %v270 = vadd.s32 %v265, 1
    %vm271 = vcmp.gt.s32.totalorder %v270, 0
    %v272 = vsel %vm271, %v270, 0
    %v273 = vshrl.u32 %v272, 5
    %v274 = vand.u32 %v272, 31
    %v275 = vsub.s32 32, %v274
    %v276 = vshrl.u32 683565275, %v275
    %v277 = vshll.u32 683565275, %v274
    %v278 = vshrl.u32 2475754826, %v275
    %v279 = vor.u32 %v277, %v278
    %v280 = vshll.u32 2475754826, %v274
    %v281 = vshrl.u32 2131351028, %v275
    %v282 = vor.u32 %v280, %v281
    %v283 = vshll.u32 2131351028, %v274
    %v284 = vshrl.u32 2102212464, %v275
    %v285 = vor.u32 %v283, %v284
    %v286 = vshll.u32 2102212464, %v274
    %v287 = vshrl.u32 920167782, %v275
    %v288 = vor.u32 %v286, %v287
    %v289 = vshll.u32 920167782, %v274
    %v290 = vshrl.u32 1326507024, %v275
    %v291 = vor.u32 %v289, %v290
    %vm292 = vcmp.lt.s32.totalorder %v273, 1
    %vm293 = vcmp.lt.s32.totalorder %v273, 2
    %vm294 = vcmp.lt.s32.totalorder %v273, 3
    %vm295 = vcmp.lt.s32.totalorder %v273, 4
    %v296 = vsel %vm292, %v276, %v279
    %v297 = vsel %vm295, %v285, 2102212464
    %v298 = vsel %vm294, %v282, %v297
    %v299 = vsel %vm293, %v296, %v298
    %v300 = vsel %vm292, %v279, %v282
    %v301 = vsel %vm295, %v288, 920167782
    %v302 = vsel %vm294, %v285, %v301
    %v303 = vsel %vm293, %v300, %v302
    %v304 = vsel %vm292, %v282, %v285
    %v305 = vsel %vm295, %v291, 1326507024
    %v306 = vsel %vm294, %v288, %v305
    %v307 = vsel %vm293, %v304, %v306
    %v308 = vshll.u32 %v268, 8
    %v309 = vmul.u32.u64.compose %v308, %v307
    %v310 = vextract.low.u32 %v309
    %v311 = vextract.high.u32 %v309
    %v312 = vmul.u32.u64.compose %v308, %v303
    %v313 = vextract.low.u32 %v312
    %v314 = vextract.high.u32 %v312
    %v315 = vmul.u32 %v308, %v299
    %v316 = vadd.s32 %v311, %v313
    %vm317 = vc.u32 %v311, %v313
    %v318 = vadd.s32 %v314, 1
    %v319 = vsel %vm317, %v318, %v314
    %v320 = vadd.s32 %v315, %v319
    %v321 = vadd.s32 %v320, 536870912
    %v322 = vshrl.u32 %v321, 30
    %v323 = vshll.u32 %v322, 30
    %v324 = vsub.s32 %v320, %v323
    %vm325 = vcmp.lt.s32.totalorder %v324, 0
    %v326 = vsub.s32 0, %v324
    %v327 = vsel %vm325, %v326, %v324
    %v328 = vclz %v327
    %v329 = vsub.s32 %v328, 2
    %vm330 = vcmp.gt.s32.totalorder 0, %v329
    %v331 = vsel %vm330, 0, %v329
    %v332 = vsub.s32 32, %v331
    %v333 = vshll.u32 %v324, %v331
    %v334 = vshrl.u32 %v316, %v332
    %v335 = vor.u32 %v333, %v334
    %v336 = vsub.s32 4294967266, %v331
    %v337 = vadd.s32 %v336, 127
    %v338 = vshll.u32 %v337, 23
    %v339 = vor.u32 4788187, %v338
    %v340 = vand.u32 2147483647, %v339
    %v342 = vcvt.s32.f32 %v335
    %v343 = vmul.f32 %v342, %v340
    %v344 = vxor.u32 %v343, 2147483648
    %v345 = vsel %vm262, %v344, %v343
    %v346 = vsub.s32 4, %v322
    %v347 = vsel %vm262, %v346, %v322
    %v348 = vsel %vm261, %v144, %v345
    %v349 = vsel %vm261, 0, %v347
    %v350 = vcosq.f32.pop %v348
    %v351 = vsinq.f32.pop %v348
    %vm352 = vweird.f32 %v144
    %v353 = vadd.s32 %v349, 3
    %v354 = vand.u32 %v353, 3
    %vm355 = vcmp.lt.s32.totalorder %v354, 2
    %vm356 = vcmp.eq.s32.totalorder %v354, 0
    %v357 = vxor.u32 %v351, 2147483648
    %v358 = vsel %vm356, %v350, %v357
    %vm359 = vcmp.eq.s32.totalorder %v354, 2
    %v360 = vxor.u32 %v350, 2147483648
    %v361 = vsel %vm359, %v360, %v351
    %v362 = vsel %vm355, %v358, %v361
    %v363 = vsel %vm352, nan, %v362
    %v364 = vsub.f32 1.0, %v259
    %v365 = vmul.f32 %v364, %v147
    %v366 = vmul.f32 %v365, %v147
    %v367 = vadd.f32 %v259, %v366
    %369 = vrot.lane.b32.xlu0 %v152, 104
    %v370 = vpop.permute.xlu0 %369
    %v372 = vmul.f32 %v365, %v370
    %374 = vrot.lane.b32.xlu0 %v156, 80
    %v375 = vpop.permute.xlu0 %374
    %v377 = vmul.f32 %v363, %v375
    %v378 = vsub.f32 %v372, %v377
    %v379 = vmul.f32 %v365, %v375
    %v380 = vmul.f32 %v363, %v370
    %v381 = vadd.f32 %v379, %v380
    %v382 = vmul.f32 %v364, %v370
    %v383 = vmul.f32 %v382, %v147
    %v384 = vadd.f32 %v383, %v377
    %v385 = vmul.f32 %v382, %v370
    %v386 = vadd.f32 %v259, %v385
    %v387 = vmul.f32 %v382, %v375
    %v388 = vmul.f32 %v363, %v147
    %v389 = vsub.f32 %v387, %v388
    %v390 = vmul.f32 %v364, %v375
    %v391 = vmul.f32 %v390, %v147
    %v392 = vsub.f32 %v391, %v380
    %v393 = vmul.f32 %v390, %v370
    %v394 = vadd.f32 %v393, %v388
    %v395 = vmul.f32 %v390, %v375
    %v396 = vadd.f32 %v259, %v395
    %v397 = vld [vmem:[%s3] sm:$0x3]
    %v398 = vadd.f32 %v123, %v397
    %400 = vrot.lane.b32.xlu0 %v397, 23
    %v401 = vpop.permute.xlu0 %400
    %v403 = vadd.f32 %v123, %v401
    %404 = vrot.lane.b32.xlu0 %v397, 46
    %v405 = vpop.permute.xlu0 %404
    %v407 = vadd.f32 %v123, %v405
    %409 = vrot.lane.b32.xlu0 %v367, 127
    %v410 = vpop.permute.xlu0 %409
    %v412 = vmul.f32 %v367, %v410
    %414 = vrot.lane.b32.xlu0 %v384, 127
    %v415 = vpop.permute.xlu0 %414
    %v417 = vmul.f32 %v378, %v415
    %v418 = vadd.f32 %v412, %v417
    %420 = vrot.lane.b32.xlu0 %v392, 127
    %v421 = vpop.permute.xlu0 %420
    %v423 = vmul.f32 %v381, %v421
    %v424 = vadd.f32 %v418, %v423
    %426 = vrot.lane.b32.xlu0 %v378, 127
    %v427 = vpop.permute.xlu0 %426
    %v429 = vmul.f32 %v367, %v427
    %431 = vrot.lane.b32.xlu0 %v386, 127
    %v432 = vpop.permute.xlu0 %431
    %v434 = vmul.f32 %v378, %v432
    %v435 = vadd.f32 %v429, %v434
    %437 = vrot.lane.b32.xlu0 %v394, 127
    %v438 = vpop.permute.xlu0 %437
    %v440 = vmul.f32 %v381, %v438
    %v441 = vadd.f32 %v435, %v440
    %443 = vrot.lane.b32.xlu0 %v381, 127
    %v444 = vpop.permute.xlu0 %443
    %v446 = vmul.f32 %v367, %v444
    %448 = vrot.lane.b32.xlu0 %v389, 127
    %v449 = vpop.permute.xlu0 %448
    %v451 = vmul.f32 %v378, %v449
    %v452 = vadd.f32 %v446, %v451
    %454 = vrot.lane.b32.xlu0 %v396, 127
    %v455 = vpop.permute.xlu0 %454
    %v457 = vmul.f32 %v381, %v455
    %v458 = vadd.f32 %v452, %v457
    %v459 = vmul.f32 %v384, %v410
    %v460 = vmul.f32 %v386, %v415
    %v461 = vadd.f32 %v459, %v460
    %v462 = vmul.f32 %v389, %v421
    %v463 = vadd.f32 %v461, %v462
    %v464 = vmul.f32 %v384, %v427
    %v465 = vmul.f32 %v386, %v432
    %v466 = vadd.f32 %v464, %v465
    %v467 = vmul.f32 %v389, %v438
    %v468 = vadd.f32 %v466, %v467
    %v469 = vmul.f32 %v384, %v444
    %v470 = vmul.f32 %v386, %v449
    %v471 = vadd.f32 %v469, %v470
    %v472 = vmul.f32 %v389, %v455
    %v473 = vadd.f32 %v471, %v472
    %v474 = vmul.f32 %v392, %v410
    %v475 = vmul.f32 %v394, %v415
    %v476 = vadd.f32 %v474, %v475
    %v477 = vmul.f32 %v396, %v421
    %v478 = vadd.f32 %v476, %v477
    %v479 = vmul.f32 %v392, %v427
    %v480 = vmul.f32 %v394, %v432
    %v481 = vadd.f32 %v479, %v480
    %v482 = vmul.f32 %v396, %v438
    %v483 = vadd.f32 %v481, %v482
    %v484 = vmul.f32 %v392, %v444
    %v485 = vmul.f32 %v394, %v449
    %v486 = vadd.f32 %v484, %v485
    %v487 = vmul.f32 %v396, %v455
    %v488 = vadd.f32 %v486, %v487
    %490 = vrot.lane.b32.xlu0 %v123, 1
    %v491 = vpop.permute.xlu0 %490
    %v493 = vsub.f32 %v123, %v491
    %495 = vrot.lane.b32.xlu0 %v493, 127
    %v496 = vpop.permute.xlu0 %495
    %v498 = vmul.f32 %v367, %v496
    %499 = vrot.lane.b32.xlu0 %v493, 103
    %v500 = vpop.permute.xlu0 %499
    %v502 = vmul.f32 %v378, %v500
    %v503 = vadd.f32 %v498, %v502
    %504 = vrot.lane.b32.xlu0 %v493, 79
    %v505 = vpop.permute.xlu0 %504
    %v507 = vmul.f32 %v381, %v505
    %v508 = vadd.f32 %v503, %v507
    %v509 = vadd.f32 %v508, %v398
    %v510 = vmul.f32 %v384, %v496
    %v511 = vmul.f32 %v386, %v500
    %v512 = vadd.f32 %v510, %v511
    %v513 = vmul.f32 %v389, %v505
    %v514 = vadd.f32 %v512, %v513
    %516 = vrot.lane.b32.xlu0 %v403, 104
    %v517 = vpop.permute.xlu0 %516
    %v519 = vadd.f32 %v514, %v517
    %v520 = vmul.f32 %v392, %v496
    %v521 = vmul.f32 %v394, %v500
    %v522 = vadd.f32 %v520, %v521
    %v523 = vmul.f32 %v396, %v505
    %v524 = vadd.f32 %v522, %v523
    %526 = vrot.lane.b32.xlu0 %v407, 80
    %v527 = vpop.permute.xlu0 %526
    %v529 = vadd.f32 %v524, %v527
    %530 = vrot.lane.b32.xlu0 %v367, 126
    %v531 = vpop.permute.xlu0 %530
    %v533 = vmul.f32 %v367, %v531
    %534 = vrot.lane.b32.xlu0 %v384, 126
    %v535 = vpop.permute.xlu0 %534
    %v537 = vmul.f32 %v378, %v535
    %v538 = vadd.f32 %v533, %v537
    %539 = vrot.lane.b32.xlu0 %v392, 126
    %v540 = vpop.permute.xlu0 %539
    %v542 = vmul.f32 %v381, %v540
    %v543 = vadd.f32 %v538, %v542
    %544 = vrot.lane.b32.xlu0 %v378, 126
    %v545 = vpop.permute.xlu0 %544
    %v547 = vmul.f32 %v367, %v545
    %548 = vrot.lane.b32.xlu0 %v386, 126
    %v549 = vpop.permute.xlu0 %548
    %v551 = vmul.f32 %v378, %v549
    %v552 = vadd.f32 %v547, %v551
    %553 = vrot.lane.b32.xlu0 %v394, 126
    %v554 = vpop.permute.xlu0 %553
    %v556 = vmul.f32 %v381, %v554
    %v557 = vadd.f32 %v552, %v556
    %558 = vrot.lane.b32.xlu0 %v381, 126
    %v559 = vpop.permute.xlu0 %558
    %v561 = vmul.f32 %v367, %v559
    %562 = vrot.lane.b32.xlu0 %v389, 126
    %v563 = vpop.permute.xlu0 %562
    %v565 = vmul.f32 %v378, %v563
    %v566 = vadd.f32 %v561, %v565
    %567 = vrot.lane.b32.xlu0 %v396, 126
    %v568 = vpop.permute.xlu0 %567
    %v570 = vmul.f32 %v381, %v568
    %v571 = vadd.f32 %v566, %v570
    %v572 = vmul.f32 %v384, %v531
    %v573 = vmul.f32 %v386, %v535
    %v574 = vadd.f32 %v572, %v573
    %v575 = vmul.f32 %v389, %v540
    %v576 = vadd.f32 %v574, %v575
    %v577 = vmul.f32 %v384, %v545
    %v578 = vmul.f32 %v386, %v549
    %v579 = vadd.f32 %v577, %v578
    %v580 = vmul.f32 %v389, %v554
    %v581 = vadd.f32 %v579, %v580
    %v582 = vmul.f32 %v384, %v559
    %v583 = vmul.f32 %v386, %v563
    %v584 = vadd.f32 %v582, %v583
    %v585 = vmul.f32 %v389, %v568
    %v586 = vadd.f32 %v584, %v585
    %v587 = vmul.f32 %v392, %v531
    %v588 = vmul.f32 %v394, %v535
    %v589 = vadd.f32 %v587, %v588
    %v590 = vmul.f32 %v396, %v540
    %v591 = vadd.f32 %v589, %v590
    %v592 = vmul.f32 %v392, %v545
    %v593 = vmul.f32 %v394, %v549
    %v594 = vadd.f32 %v592, %v593
    %v595 = vmul.f32 %v396, %v554
    %v596 = vadd.f32 %v594, %v595
    %v597 = vmul.f32 %v392, %v559
    %v598 = vmul.f32 %v394, %v563
    %v599 = vadd.f32 %v597, %v598
    %v600 = vmul.f32 %v396, %v568
    %v601 = vadd.f32 %v599, %v600
    %602 = vrot.lane.b32.xlu0 %v123, 2
    %v603 = vpop.permute.xlu0 %602
    %v605 = vsub.f32 %v123, %v603
    %607 = vrot.lane.b32.xlu0 %v605, 126
    %v608 = vpop.permute.xlu0 %607
    %v610 = vmul.f32 %v367, %v608
    %611 = vrot.lane.b32.xlu0 %v605, 102
    %v612 = vpop.permute.xlu0 %611
    %v614 = vmul.f32 %v378, %v612
    %v615 = vadd.f32 %v610, %v614
    %616 = vrot.lane.b32.xlu0 %v605, 78
    %v617 = vpop.permute.xlu0 %616
    %v619 = vmul.f32 %v381, %v617
    %v620 = vadd.f32 %v615, %v619
    %v621 = vadd.f32 %v620, %v398
    %v622 = vmul.f32 %v384, %v608
    %v623 = vmul.f32 %v386, %v612
    %v624 = vadd.f32 %v622, %v623
    %v625 = vmul.f32 %v389, %v617
    %v626 = vadd.f32 %v624, %v625
    %v627 = vadd.f32 %v626, %v517
    %v628 = vmul.f32 %v392, %v608
    %v629 = vmul.f32 %v394, %v612
    %v630 = vadd.f32 %v628, %v629
    %v631 = vmul.f32 %v396, %v617
    %v632 = vadd.f32 %v630, %v631
    %v633 = vadd.f32 %v632, %v527
    %634 = vrot.lane.b32.xlu0 %v367, 125
    %v635 = vpop.permute.xlu0 %634
    %v637 = vmul.f32 %v367, %v635
    %638 = vrot.lane.b32.xlu0 %v384, 125
    %v639 = vpop.permute.xlu0 %638
    %v641 = vmul.f32 %v378, %v639
    %v642 = vadd.f32 %v637, %v641
    %643 = vrot.lane.b32.xlu0 %v392, 125
    %v644 = vpop.permute.xlu0 %643
    %v646 = vmul.f32 %v381, %v644
    %v647 = vadd.f32 %v642, %v646
    %648 = vrot.lane.b32.xlu0 %v378, 125
    %v649 = vpop.permute.xlu0 %648
    %v651 = vmul.f32 %v367, %v649
    %652 = vrot.lane.b32.xlu0 %v386, 125
    %v653 = vpop.permute.xlu0 %652
    %v655 = vmul.f32 %v378, %v653
    %v656 = vadd.f32 %v651, %v655
    %657 = vrot.lane.b32.xlu0 %v394, 125
    %v658 = vpop.permute.xlu0 %657
    %v660 = vmul.f32 %v381, %v658
    %v661 = vadd.f32 %v656, %v660
    %662 = vrot.lane.b32.xlu0 %v381, 125
    %v663 = vpop.permute.xlu0 %662
    %v665 = vmul.f32 %v367, %v663
    %666 = vrot.lane.b32.xlu0 %v389, 125
    %v667 = vpop.permute.xlu0 %666
    %v669 = vmul.f32 %v378, %v667
    %v670 = vadd.f32 %v665, %v669
    %671 = vrot.lane.b32.xlu0 %v396, 125
    %v672 = vpop.permute.xlu0 %671
    %v674 = vmul.f32 %v381, %v672
    %v675 = vadd.f32 %v670, %v674
    %v676 = vmul.f32 %v384, %v635
    %v677 = vmul.f32 %v386, %v639
    %v678 = vadd.f32 %v676, %v677
    %v679 = vmul.f32 %v389, %v644
    %v680 = vadd.f32 %v678, %v679
    %v681 = vmul.f32 %v384, %v649
    %v682 = vmul.f32 %v386, %v653
    %v683 = vadd.f32 %v681, %v682
    %v684 = vmul.f32 %v389, %v658
    %v685 = vadd.f32 %v683, %v684
    %v686 = vmul.f32 %v384, %v663
    %v687 = vmul.f32 %v386, %v667
    %v688 = vadd.f32 %v686, %v687
    %v689 = vmul.f32 %v389, %v672
    %v690 = vadd.f32 %v688, %v689
    %v691 = vmul.f32 %v392, %v635
    %v692 = vmul.f32 %v394, %v639
    %v693 = vadd.f32 %v691, %v692
    %v694 = vmul.f32 %v396, %v644
    %v695 = vadd.f32 %v693, %v694
    %v696 = vmul.f32 %v392, %v649
    %v697 = vmul.f32 %v394, %v653
    %v698 = vadd.f32 %v696, %v697
    %v699 = vmul.f32 %v396, %v658
    %v700 = vadd.f32 %v698, %v699
    %v701 = vmul.f32 %v392, %v663
    %v702 = vmul.f32 %v394, %v667
    %v703 = vadd.f32 %v701, %v702
    %v704 = vmul.f32 %v396, %v672
    %v705 = vadd.f32 %v703, %v704
    %706 = vrot.lane.b32.xlu0 %v123, 3
    %v707 = vpop.permute.xlu0 %706
    %v709 = vsub.f32 %v123, %v707
    %711 = vrot.lane.b32.xlu0 %v709, 125
    %v712 = vpop.permute.xlu0 %711
    %v714 = vmul.f32 %v367, %v712
    %715 = vrot.lane.b32.xlu0 %v709, 101
    %v716 = vpop.permute.xlu0 %715
    %v718 = vmul.f32 %v378, %v716
    %v719 = vadd.f32 %v714, %v718
    %720 = vrot.lane.b32.xlu0 %v709, 77
    %v721 = vpop.permute.xlu0 %720
    %v723 = vmul.f32 %v381, %v721
    %v724 = vadd.f32 %v719, %v723
    %v725 = vadd.f32 %v724, %v398
    %v726 = vmul.f32 %v384, %v712
    %v727 = vmul.f32 %v386, %v716
    %v728 = vadd.f32 %v726, %v727
    %v729 = vmul.f32 %v389, %v721
    %v730 = vadd.f32 %v728, %v729
    %v731 = vadd.f32 %v730, %v517
    %v732 = vmul.f32 %v392, %v712
    %v733 = vmul.f32 %v394, %v716
    %v734 = vadd.f32 %v732, %v733
    %v735 = vmul.f32 %v396, %v721
    %v736 = vadd.f32 %v734, %v735
    %v737 = vadd.f32 %v736, %v527
    %738 = vrot.lane.b32.xlu0 %v367, 124
    %v739 = vpop.permute.xlu0 %738
    %v741 = vmul.f32 %v424, %v739
    %742 = vrot.lane.b32.xlu0 %v384, 124
    %v743 = vpop.permute.xlu0 %742
    %v745 = vmul.f32 %v441, %v743
    %v746 = vadd.f32 %v741, %v745
    %747 = vrot.lane.b32.xlu0 %v392, 124
    %v748 = vpop.permute.xlu0 %747
    %v750 = vmul.f32 %v458, %v748
    %v751 = vadd.f32 %v746, %v750
    %752 = vrot.lane.b32.xlu0 %v378, 124
    %v753 = vpop.permute.xlu0 %752
    %v755 = vmul.f32 %v424, %v753
    %756 = vrot.lane.b32.xlu0 %v386, 124
    %v757 = vpop.permute.xlu0 %756
    %v759 = vmul.f32 %v441, %v757
    %v760 = vadd.f32 %v755, %v759
    %761 = vrot.lane.b32.xlu0 %v394, 124
    %v762 = vpop.permute.xlu0 %761
    %v764 = vmul.f32 %v458, %v762
    %v765 = vadd.f32 %v760, %v764
    %766 = vrot.lane.b32.xlu0 %v381, 124
    %v767 = vpop.permute.xlu0 %766
    %v769 = vmul.f32 %v424, %v767
    %770 = vrot.lane.b32.xlu0 %v389, 124
    %v771 = vpop.permute.xlu0 %770
    %v773 = vmul.f32 %v441, %v771
    %v774 = vadd.f32 %v769, %v773
    %775 = vrot.lane.b32.xlu0 %v396, 124
    %v776 = vpop.permute.xlu0 %775
    %v778 = vmul.f32 %v458, %v776
    %v779 = vadd.f32 %v774, %v778
    %v780 = vmul.f32 %v463, %v739
    %v781 = vmul.f32 %v468, %v743
    %v782 = vadd.f32 %v780, %v781
    %v783 = vmul.f32 %v473, %v748
    %v784 = vadd.f32 %v782, %v783
    %v785 = vmul.f32 %v463, %v753
    %v786 = vmul.f32 %v468, %v757
    %v787 = vadd.f32 %v785, %v786
    %v788 = vmul.f32 %v473, %v762
    %v789 = vadd.f32 %v787, %v788
    %v790 = vmul.f32 %v463, %v767
    %v791 = vmul.f32 %v468, %v771
    %v792 = vadd.f32 %v790, %v791
    %v793 = vmul.f32 %v473, %v776
    %v794 = vadd.f32 %v792, %v793
    %v795 = vmul.f32 %v478, %v739
    %v796 = vmul.f32 %v483, %v743
    %v797 = vadd.f32 %v795, %v796
    %v798 = vmul.f32 %v488, %v748
    %v799 = vadd.f32 %v797, %v798
    %v800 = vmul.f32 %v478, %v753
    %v801 = vmul.f32 %v483, %v757
    %v802 = vadd.f32 %v800, %v801
    %v803 = vmul.f32 %v488, %v762
    %v804 = vadd.f32 %v802, %v803
    %v805 = vmul.f32 %v478, %v767
    %v806 = vmul.f32 %v483, %v771
    %v807 = vadd.f32 %v805, %v806
    %v808 = vmul.f32 %v488, %v776
    %v809 = vadd.f32 %v807, %v808
    %810 = vrot.lane.b32.xlu0 %v709, 124
    %v811 = vpop.permute.xlu0 %810
    %v813 = vmul.f32 %v424, %v811
    %814 = vrot.lane.b32.xlu0 %v709, 100
    %v815 = vpop.permute.xlu0 %814
    %v817 = vmul.f32 %v441, %v815
    %v818 = vadd.f32 %v813, %v817
    %819 = vrot.lane.b32.xlu0 %v709, 76
    %v820 = vpop.permute.xlu0 %819
    %v822 = vmul.f32 %v458, %v820
    %v823 = vadd.f32 %v818, %v822
    %v824 = vadd.f32 %v823, %v509
    %v825 = vmul.f32 %v463, %v811
    %v826 = vmul.f32 %v468, %v815
    %v827 = vadd.f32 %v825, %v826
    %v828 = vmul.f32 %v473, %v820
    %v829 = vadd.f32 %v827, %v828
    %v830 = vadd.f32 %v829, %v519
    %v831 = vmul.f32 %v478, %v811
    %v832 = vmul.f32 %v483, %v815
    %v833 = vadd.f32 %v831, %v832
    %v834 = vmul.f32 %v488, %v820
    %v835 = vadd.f32 %v833, %v834
    %v836 = vadd.f32 %v835, %v529
    %837 = vrot.lane.b32.xlu0 %v367, 123
    %v838 = vpop.permute.xlu0 %837
    %v840 = vmul.f32 %v543, %v838
    %841 = vrot.lane.b32.xlu0 %v384, 123
    %v842 = vpop.permute.xlu0 %841
    %v844 = vmul.f32 %v557, %v842
    %v845 = vadd.f32 %v840, %v844
    %846 = vrot.lane.b32.xlu0 %v392, 123
    %v847 = vpop.permute.xlu0 %846
    %v849 = vmul.f32 %v571, %v847
    %v850 = vadd.f32 %v845, %v849
    %851 = vrot.lane.b32.xlu0 %v378, 123
    %v852 = vpop.permute.xlu0 %851
    %v854 = vmul.f32 %v543, %v852
    %855 = vrot.lane.b32.xlu0 %v386, 123
    %v856 = vpop.permute.xlu0 %855
    %v858 = vmul.f32 %v557, %v856
    %v859 = vadd.f32 %v854, %v858
    %860 = vrot.lane.b32.xlu0 %v394, 123
    %v861 = vpop.permute.xlu0 %860
    %v863 = vmul.f32 %v571, %v861
    %v864 = vadd.f32 %v859, %v863
    %865 = vrot.lane.b32.xlu0 %v381, 123
    %v866 = vpop.permute.xlu0 %865
    %v868 = vmul.f32 %v543, %v866
    %869 = vrot.lane.b32.xlu0 %v389, 123
    %v870 = vpop.permute.xlu0 %869
    %v872 = vmul.f32 %v557, %v870
    %v873 = vadd.f32 %v868, %v872
    %874 = vrot.lane.b32.xlu0 %v396, 123
    %v875 = vpop.permute.xlu0 %874
    %v877 = vmul.f32 %v571, %v875
    %v878 = vadd.f32 %v873, %v877
    %v879 = vmul.f32 %v576, %v838
    %v880 = vmul.f32 %v581, %v842
    %v881 = vadd.f32 %v879, %v880
    %v882 = vmul.f32 %v586, %v847
    %v883 = vadd.f32 %v881, %v882
    %v884 = vmul.f32 %v576, %v852
    %v885 = vmul.f32 %v581, %v856
    %v886 = vadd.f32 %v884, %v885
    %v887 = vmul.f32 %v586, %v861
    %v888 = vadd.f32 %v886, %v887
    %v889 = vmul.f32 %v576, %v866
    %v890 = vmul.f32 %v581, %v870
    %v891 = vadd.f32 %v889, %v890
    %v892 = vmul.f32 %v586, %v875
    %v893 = vadd.f32 %v891, %v892
    %v894 = vmul.f32 %v591, %v838
    %v895 = vmul.f32 %v596, %v842
    %v896 = vadd.f32 %v894, %v895
    %v897 = vmul.f32 %v601, %v847
    %v898 = vadd.f32 %v896, %v897
    %v899 = vmul.f32 %v591, %v852
    %v900 = vmul.f32 %v596, %v856
    %v901 = vadd.f32 %v899, %v900
    %v902 = vmul.f32 %v601, %v861
    %v903 = vadd.f32 %v901, %v902
    %v904 = vmul.f32 %v591, %v866
    %v905 = vmul.f32 %v596, %v870
    %v906 = vadd.f32 %v904, %v905
    %v907 = vmul.f32 %v601, %v875
    %v908 = vadd.f32 %v906, %v907
    %909 = vrot.lane.b32.xlu0 %v709, 123
    %v910 = vpop.permute.xlu0 %909
    %v912 = vmul.f32 %v543, %v910
    %913 = vrot.lane.b32.xlu0 %v709, 99
    %v914 = vpop.permute.xlu0 %913
    %v916 = vmul.f32 %v557, %v914
    %v917 = vadd.f32 %v912, %v916
    %918 = vrot.lane.b32.xlu0 %v709, 75
    %v919 = vpop.permute.xlu0 %918
    %v921 = vmul.f32 %v571, %v919
    %v922 = vadd.f32 %v917, %v921
    %v923 = vadd.f32 %v922, %v621
    %v924 = vmul.f32 %v576, %v910
    %v925 = vmul.f32 %v581, %v914
    %v926 = vadd.f32 %v924, %v925
    %v927 = vmul.f32 %v586, %v919
    %v928 = vadd.f32 %v926, %v927
    %v929 = vadd.f32 %v928, %v627
    %v930 = vmul.f32 %v591, %v910
    %v931 = vmul.f32 %v596, %v914
    %v932 = vadd.f32 %v930, %v931
    %v933 = vmul.f32 %v601, %v919
    %v934 = vadd.f32 %v932, %v933
    %v935 = vadd.f32 %v934, %v633
    %936 = vrot.lane.b32.xlu0 %v367, 122
    %v937 = vpop.permute.xlu0 %936
    %v939 = vmul.f32 %v647, %v937
    %940 = vrot.lane.b32.xlu0 %v384, 122
    %v941 = vpop.permute.xlu0 %940
    %v943 = vmul.f32 %v661, %v941
    %v944 = vadd.f32 %v939, %v943
    %945 = vrot.lane.b32.xlu0 %v392, 122
    %v946 = vpop.permute.xlu0 %945
    %v948 = vmul.f32 %v675, %v946
    %v949 = vadd.f32 %v944, %v948
    %950 = vrot.lane.b32.xlu0 %v378, 122
    %v951 = vpop.permute.xlu0 %950
    %v953 = vmul.f32 %v647, %v951
    %954 = vrot.lane.b32.xlu0 %v386, 122
    %v955 = vpop.permute.xlu0 %954
    %v957 = vmul.f32 %v661, %v955
    %v958 = vadd.f32 %v953, %v957
    %959 = vrot.lane.b32.xlu0 %v394, 122
    %v960 = vpop.permute.xlu0 %959
    %v962 = vmul.f32 %v675, %v960
    %v963 = vadd.f32 %v958, %v962
    %964 = vrot.lane.b32.xlu0 %v381, 122
    %v965 = vpop.permute.xlu0 %964
    %v967 = vmul.f32 %v647, %v965
    %968 = vrot.lane.b32.xlu0 %v389, 122
    %v969 = vpop.permute.xlu0 %968
    %v971 = vmul.f32 %v661, %v969
    %v972 = vadd.f32 %v967, %v971
    %973 = vrot.lane.b32.xlu0 %v396, 122
    %v974 = vpop.permute.xlu0 %973
    %v976 = vmul.f32 %v675, %v974
    %v977 = vadd.f32 %v972, %v976
    %v978 = vmul.f32 %v680, %v937
    %v979 = vmul.f32 %v685, %v941
    %v980 = vadd.f32 %v978, %v979
    %v981 = vmul.f32 %v690, %v946
    %v982 = vadd.f32 %v980, %v981
    %v983 = vmul.f32 %v680, %v951
    %v984 = vmul.f32 %v685, %v955
    %v985 = vadd.f32 %v983, %v984
    %v986 = vmul.f32 %v690, %v960
    %v987 = vadd.f32 %v985, %v986
    %v988 = vmul.f32 %v680, %v965
    %v989 = vmul.f32 %v685, %v969
    %v990 = vadd.f32 %v988, %v989
    %v991 = vmul.f32 %v690, %v974
    %v992 = vadd.f32 %v990, %v991
    %v993 = vmul.f32 %v695, %v937
    %v994 = vmul.f32 %v700, %v941
    %v995 = vadd.f32 %v993, %v994
    %v996 = vmul.f32 %v705, %v946
    %v997 = vadd.f32 %v995, %v996
    %v998 = vmul.f32 %v695, %v951
    %v999 = vmul.f32 %v700, %v955
    %v1000 = vadd.f32 %v998, %v999
    %v1001 = vmul.f32 %v705, %v960
    %v1002 = vadd.f32 %v1000, %v1001
    %v1003 = vmul.f32 %v695, %v965
    %v1004 = vmul.f32 %v700, %v969
    %v1005 = vadd.f32 %v1003, %v1004
    %v1006 = vmul.f32 %v705, %v974
    %v1007 = vadd.f32 %v1005, %v1006
    %1008 = vrot.lane.b32.xlu0 %v709, 122
    %v1009 = vpop.permute.xlu0 %1008
    %v1011 = vmul.f32 %v647, %v1009
    %1012 = vrot.lane.b32.xlu0 %v709, 98
    %v1013 = vpop.permute.xlu0 %1012
    %v1015 = vmul.f32 %v661, %v1013
    %v1016 = vadd.f32 %v1011, %v1015
    %1017 = vrot.lane.b32.xlu0 %v709, 74
    %v1018 = vpop.permute.xlu0 %1017
    %v1020 = vmul.f32 %v675, %v1018
    %v1021 = vadd.f32 %v1016, %v1020
    %v1022 = vadd.f32 %v1021, %v725
    %v1023 = vmul.f32 %v680, %v1009
    %v1024 = vmul.f32 %v685, %v1013
    %v1025 = vadd.f32 %v1023, %v1024
    %v1026 = vmul.f32 %v690, %v1018
    %v1027 = vadd.f32 %v1025, %v1026
    %v1028 = vadd.f32 %v1027, %v731
    %v1029 = vmul.f32 %v695, %v1009
    %v1030 = vmul.f32 %v700, %v1013
    %v1031 = vadd.f32 %v1029, %v1030
    %v1032 = vmul.f32 %v705, %v1018
    %v1033 = vadd.f32 %v1031, %v1032
    %v1034 = vadd.f32 %v1033, %v737
    %1035 = vrot.lane.b32.xlu0 %v367, 121
    %v1036 = vpop.permute.xlu0 %1035
    %v1038 = vmul.f32 %v751, %v1036
    %1039 = vrot.lane.b32.xlu0 %v384, 121
    %v1040 = vpop.permute.xlu0 %1039
    %v1042 = vmul.f32 %v765, %v1040
    %v1043 = vadd.f32 %v1038, %v1042
    %1044 = vrot.lane.b32.xlu0 %v392, 121
    %v1045 = vpop.permute.xlu0 %1044
    %v1047 = vmul.f32 %v779, %v1045
    %v1048 = vadd.f32 %v1043, %v1047
    %1049 = vrot.lane.b32.xlu0 %v378, 121
    %v1050 = vpop.permute.xlu0 %1049
    %v1052 = vmul.f32 %v751, %v1050
    %1053 = vrot.lane.b32.xlu0 %v386, 121
    %v1054 = vpop.permute.xlu0 %1053
    %v1056 = vmul.f32 %v765, %v1054
    %v1057 = vadd.f32 %v1052, %v1056
    %1058 = vrot.lane.b32.xlu0 %v394, 121
    %v1059 = vpop.permute.xlu0 %1058
    %v1061 = vmul.f32 %v779, %v1059
    %v1062 = vadd.f32 %v1057, %v1061
    %1063 = vrot.lane.b32.xlu0 %v381, 121
    %v1064 = vpop.permute.xlu0 %1063
    %v1066 = vmul.f32 %v751, %v1064
    %1067 = vrot.lane.b32.xlu0 %v389, 121
    %v1068 = vpop.permute.xlu0 %1067
    %v1070 = vmul.f32 %v765, %v1068
    %v1071 = vadd.f32 %v1066, %v1070
    %1072 = vrot.lane.b32.xlu0 %v396, 121
    %v1073 = vpop.permute.xlu0 %1072
    %v1075 = vmul.f32 %v779, %v1073
    %v1076 = vadd.f32 %v1071, %v1075
    %v1077 = vmul.f32 %v784, %v1036
    %v1078 = vmul.f32 %v789, %v1040
    %v1079 = vadd.f32 %v1077, %v1078
    %v1080 = vmul.f32 %v794, %v1045
    %v1081 = vadd.f32 %v1079, %v1080
    %v1082 = vmul.f32 %v784, %v1050
    %v1083 = vmul.f32 %v789, %v1054
    %v1084 = vadd.f32 %v1082, %v1083
    %v1085 = vmul.f32 %v794, %v1059
    %v1086 = vadd.f32 %v1084, %v1085
    %v1087 = vmul.f32 %v784, %v1064
    %v1088 = vmul.f32 %v789, %v1068
    %v1089 = vadd.f32 %v1087, %v1088
    %v1090 = vmul.f32 %v794, %v1073
    %v1091 = vadd.f32 %v1089, %v1090
    %v1092 = vmul.f32 %v799, %v1036
    %v1093 = vmul.f32 %v804, %v1040
    %v1094 = vadd.f32 %v1092, %v1093
    %v1095 = vmul.f32 %v809, %v1045
    %v1096 = vadd.f32 %v1094, %v1095
    %v1097 = vmul.f32 %v799, %v1050
    %v1098 = vmul.f32 %v804, %v1054
    %v1099 = vadd.f32 %v1097, %v1098
    %v1100 = vmul.f32 %v809, %v1059
    %v1101 = vadd.f32 %v1099, %v1100
    %v1102 = vmul.f32 %v799, %v1064
    %v1103 = vmul.f32 %v804, %v1068
    %v1104 = vadd.f32 %v1102, %v1103
    %v1105 = vmul.f32 %v809, %v1073
    %v1106 = vadd.f32 %v1104, %v1105
    %1107 = vrot.lane.b32.xlu0 %v709, 121
    %v1108 = vpop.permute.xlu0 %1107
    %v1110 = vmul.f32 %v751, %v1108
    %1111 = vrot.lane.b32.xlu0 %v709, 97
    %v1112 = vpop.permute.xlu0 %1111
    %v1114 = vmul.f32 %v765, %v1112
    %v1115 = vadd.f32 %v1110, %v1114
    %1116 = vrot.lane.b32.xlu0 %v709, 73
    %v1117 = vpop.permute.xlu0 %1116
    %v1119 = vmul.f32 %v779, %v1117
    %v1120 = vadd.f32 %v1115, %v1119
    %v1121 = vadd.f32 %v1120, %v824
    %v1122 = vmul.f32 %v784, %v1108
    %v1123 = vmul.f32 %v789, %v1112
    %v1124 = vadd.f32 %v1122, %v1123
    %v1125 = vmul.f32 %v794, %v1117
    %v1126 = vadd.f32 %v1124, %v1125
    %v1127 = vadd.f32 %v1126, %v830
    %v1128 = vmul.f32 %v799, %v1108
    %v1129 = vmul.f32 %v804, %v1112
    %v1130 = vadd.f32 %v1128, %v1129
    %v1131 = vmul.f32 %v809, %v1117
    %v1132 = vadd.f32 %v1130, %v1131
    %v1133 = vadd.f32 %v1132, %v836
    %1134 = vrot.lane.b32.xlu0 %v367, 120
    %v1135 = vpop.permute.xlu0 %1134
    %v1137 = vmul.f32 %v850, %v1135
    %1138 = vrot.lane.b32.xlu0 %v384, 120
    %v1139 = vpop.permute.xlu0 %1138
    %v1141 = vmul.f32 %v864, %v1139
    %v1142 = vadd.f32 %v1137, %v1141
    %1143 = vrot.lane.b32.xlu0 %v392, 120
    %v1144 = vpop.permute.xlu0 %1143
    %v1146 = vmul.f32 %v878, %v1144
    %v1147 = vadd.f32 %v1142, %v1146
    %1148 = vrot.lane.b32.xlu0 %v378, 120
    %v1149 = vpop.permute.xlu0 %1148
    %v1151 = vmul.f32 %v850, %v1149
    %1152 = vrot.lane.b32.xlu0 %v386, 120
    %v1153 = vpop.permute.xlu0 %1152
    %v1155 = vmul.f32 %v864, %v1153
    %v1156 = vadd.f32 %v1151, %v1155
    %1157 = vrot.lane.b32.xlu0 %v394, 120
    %v1158 = vpop.permute.xlu0 %1157
    %v1160 = vmul.f32 %v878, %v1158
    %v1161 = vadd.f32 %v1156, %v1160
    %1162 = vrot.lane.b32.xlu0 %v381, 120
    %v1163 = vpop.permute.xlu0 %1162
    %v1165 = vmul.f32 %v850, %v1163
    %1166 = vrot.lane.b32.xlu0 %v389, 120
    %v1167 = vpop.permute.xlu0 %1166
    %v1169 = vmul.f32 %v864, %v1167
    %v1170 = vadd.f32 %v1165, %v1169
    %1171 = vrot.lane.b32.xlu0 %v396, 120
    %v1172 = vpop.permute.xlu0 %1171
    %v1174 = vmul.f32 %v878, %v1172
    %v1175 = vadd.f32 %v1170, %v1174
    %v1176 = vmul.f32 %v883, %v1135
    %v1177 = vmul.f32 %v888, %v1139
    %v1178 = vadd.f32 %v1176, %v1177
    %v1179 = vmul.f32 %v893, %v1144
    %v1180 = vadd.f32 %v1178, %v1179
    %v1181 = vmul.f32 %v883, %v1149
    %v1182 = vmul.f32 %v888, %v1153
    %v1183 = vadd.f32 %v1181, %v1182
    %v1184 = vmul.f32 %v893, %v1158
    %v1185 = vadd.f32 %v1183, %v1184
    %v1186 = vmul.f32 %v883, %v1163
    %v1187 = vmul.f32 %v888, %v1167
    %v1188 = vadd.f32 %v1186, %v1187
    %v1189 = vmul.f32 %v893, %v1172
    %v1190 = vadd.f32 %v1188, %v1189
    %v1191 = vmul.f32 %v898, %v1135
    %v1192 = vmul.f32 %v903, %v1139
    %v1193 = vadd.f32 %v1191, %v1192
    %v1194 = vmul.f32 %v908, %v1144
    %v1195 = vadd.f32 %v1193, %v1194
    %v1196 = vmul.f32 %v898, %v1149
    %v1197 = vmul.f32 %v903, %v1153
    %v1198 = vadd.f32 %v1196, %v1197
    %v1199 = vmul.f32 %v908, %v1158
    %v1200 = vadd.f32 %v1198, %v1199
    %v1201 = vmul.f32 %v898, %v1163
    %v1202 = vmul.f32 %v903, %v1167
    %v1203 = vadd.f32 %v1201, %v1202
    %v1204 = vmul.f32 %v908, %v1172
    %v1205 = vadd.f32 %v1203, %v1204
    %1206 = vrot.lane.b32.xlu0 %v709, 120
    %v1207 = vpop.permute.xlu0 %1206
    %v1209 = vmul.f32 %v850, %v1207
    %1210 = vrot.lane.b32.xlu0 %v709, 96
    %v1211 = vpop.permute.xlu0 %1210
    %v1213 = vmul.f32 %v864, %v1211
    %v1214 = vadd.f32 %v1209, %v1213
    %1215 = vrot.lane.b32.xlu0 %v709, 72
    %v1216 = vpop.permute.xlu0 %1215
    %v1218 = vmul.f32 %v878, %v1216
    %v1219 = vadd.f32 %v1214, %v1218
    %v1220 = vadd.f32 %v1219, %v923
    %v1221 = vmul.f32 %v883, %v1207
    %v1222 = vmul.f32 %v888, %v1211
    %v1223 = vadd.f32 %v1221, %v1222
    %v1224 = vmul.f32 %v893, %v1216
    %v1225 = vadd.f32 %v1223, %v1224
    %v1226 = vadd.f32 %v1225, %v929
    %v1227 = vmul.f32 %v898, %v1207
    %v1228 = vmul.f32 %v903, %v1211
    %v1229 = vadd.f32 %v1227, %v1228
    %v1230 = vmul.f32 %v908, %v1216
    %v1231 = vadd.f32 %v1229, %v1230
    %v1232 = vadd.f32 %v1231, %v935
    %1233 = vrot.lane.b32.xlu0 %v367, 119
    %v1234 = vpop.permute.xlu0 %1233
    %v1236 = vmul.f32 %v949, %v1234
    %1237 = vrot.lane.b32.xlu0 %v384, 119
    %v1238 = vpop.permute.xlu0 %1237
    %v1240 = vmul.f32 %v963, %v1238
    %v1241 = vadd.f32 %v1236, %v1240
    %1242 = vrot.lane.b32.xlu0 %v392, 119
    %v1243 = vpop.permute.xlu0 %1242
    %v1245 = vmul.f32 %v977, %v1243
    %v1246 = vadd.f32 %v1241, %v1245
    %1247 = vrot.lane.b32.xlu0 %v378, 119
    %v1248 = vpop.permute.xlu0 %1247
    %v1250 = vmul.f32 %v949, %v1248
    %1251 = vrot.lane.b32.xlu0 %v386, 119
    %v1252 = vpop.permute.xlu0 %1251
    %v1254 = vmul.f32 %v963, %v1252
    %v1255 = vadd.f32 %v1250, %v1254
    %1256 = vrot.lane.b32.xlu0 %v394, 119
    %v1257 = vpop.permute.xlu0 %1256
    %v1259 = vmul.f32 %v977, %v1257
    %v1260 = vadd.f32 %v1255, %v1259
    %1261 = vrot.lane.b32.xlu0 %v381, 119
    %v1262 = vpop.permute.xlu0 %1261
    %v1264 = vmul.f32 %v949, %v1262
    %1265 = vrot.lane.b32.xlu0 %v389, 119
    %v1266 = vpop.permute.xlu0 %1265
    %v1268 = vmul.f32 %v963, %v1266
    %v1269 = vadd.f32 %v1264, %v1268
    %1270 = vrot.lane.b32.xlu0 %v396, 119
    %v1271 = vpop.permute.xlu0 %1270
    %v1273 = vmul.f32 %v977, %v1271
    %v1274 = vadd.f32 %v1269, %v1273
    %v1275 = vmul.f32 %v982, %v1234
    %v1276 = vmul.f32 %v987, %v1238
    %v1277 = vadd.f32 %v1275, %v1276
    %v1278 = vmul.f32 %v992, %v1243
    %v1279 = vadd.f32 %v1277, %v1278
    %v1280 = vmul.f32 %v982, %v1248
    %v1281 = vmul.f32 %v987, %v1252
    %v1282 = vadd.f32 %v1280, %v1281
    %v1283 = vmul.f32 %v992, %v1257
    %v1284 = vadd.f32 %v1282, %v1283
    %v1285 = vmul.f32 %v982, %v1262
    %v1286 = vmul.f32 %v987, %v1266
    %v1287 = vadd.f32 %v1285, %v1286
    %v1288 = vmul.f32 %v992, %v1271
    %v1289 = vadd.f32 %v1287, %v1288
    %v1290 = vmul.f32 %v997, %v1234
    %v1291 = vmul.f32 %v1002, %v1238
    %v1292 = vadd.f32 %v1290, %v1291
    %v1293 = vmul.f32 %v1007, %v1243
    %v1294 = vadd.f32 %v1292, %v1293
    %v1295 = vmul.f32 %v997, %v1248
    %v1296 = vmul.f32 %v1002, %v1252
    %v1297 = vadd.f32 %v1295, %v1296
    %v1298 = vmul.f32 %v1007, %v1257
    %v1299 = vadd.f32 %v1297, %v1298
    %v1300 = vmul.f32 %v997, %v1262
    %v1301 = vmul.f32 %v1002, %v1266
    %v1302 = vadd.f32 %v1300, %v1301
    %v1303 = vmul.f32 %v1007, %v1271
    %v1304 = vadd.f32 %v1302, %v1303
    %1305 = vrot.lane.b32.xlu0 %v709, 119
    %v1306 = vpop.permute.xlu0 %1305
    %v1308 = vmul.f32 %v949, %v1306
    %1309 = vrot.lane.b32.xlu0 %v709, 95
    %v1310 = vpop.permute.xlu0 %1309
    %v1312 = vmul.f32 %v963, %v1310
    %v1313 = vadd.f32 %v1308, %v1312
    %1314 = vrot.lane.b32.xlu0 %v709, 71
    %v1315 = vpop.permute.xlu0 %1314
    %v1317 = vmul.f32 %v977, %v1315
    %v1318 = vadd.f32 %v1313, %v1317
    %v1319 = vadd.f32 %v1318, %v1022
    %v1320 = vmul.f32 %v982, %v1306
    %v1321 = vmul.f32 %v987, %v1310
    %v1322 = vadd.f32 %v1320, %v1321
    %v1323 = vmul.f32 %v992, %v1315
    %v1324 = vadd.f32 %v1322, %v1323
    %v1325 = vadd.f32 %v1324, %v1028
    %v1326 = vmul.f32 %v997, %v1306
    %v1327 = vmul.f32 %v1002, %v1310
    %v1328 = vadd.f32 %v1326, %v1327
    %v1329 = vmul.f32 %v1007, %v1315
    %v1330 = vadd.f32 %v1328, %v1329
    %v1331 = vadd.f32 %v1330, %v1034
    %1332 = vrot.lane.b32.xlu0 %v709, 118
    %v1333 = vpop.permute.xlu0 %1332
    %v1335 = vmul.f32 %v1048, %v1333
    %1336 = vrot.lane.b32.xlu0 %v709, 94
    %v1337 = vpop.permute.xlu0 %1336
    %v1339 = vmul.f32 %v1062, %v1337
    %v1340 = vadd.f32 %v1335, %v1339
    %1341 = vrot.lane.b32.xlu0 %v709, 70
    %v1342 = vpop.permute.xlu0 %1341
    %v1344 = vmul.f32 %v1076, %v1342
    %v1345 = vadd.f32 %v1340, %v1344
    %v1346 = vadd.f32 %v1345, %v1121
    %v1347 = vmul.f32 %v1081, %v1333
    %v1348 = vmul.f32 %v1086, %v1337
    %v1349 = vadd.f32 %v1347, %v1348
    %v1350 = vmul.f32 %v1091, %v1342
    %v1351 = vadd.f32 %v1349, %v1350
    %v1352 = vadd.f32 %v1351, %v1127
    %v1353 = vmul.f32 %v1096, %v1333
    %v1354 = vmul.f32 %v1101, %v1337
    %v1355 = vadd.f32 %v1353, %v1354
    %v1356 = vmul.f32 %v1106, %v1342
    %v1357 = vadd.f32 %v1355, %v1356
    %v1358 = vadd.f32 %v1357, %v1133
    %1359 = vrot.lane.b32.xlu0 %v709, 117
    %v1360 = vpop.permute.xlu0 %1359
    %v1362 = vmul.f32 %v1147, %v1360
    %1363 = vrot.lane.b32.xlu0 %v709, 93
    %v1364 = vpop.permute.xlu0 %1363
    %v1366 = vmul.f32 %v1161, %v1364
    %v1367 = vadd.f32 %v1362, %v1366
    %1368 = vrot.lane.b32.xlu0 %v709, 69
    %v1369 = vpop.permute.xlu0 %1368
    %v1371 = vmul.f32 %v1175, %v1369
    %v1372 = vadd.f32 %v1367, %v1371
    %v1373 = vadd.f32 %v1372, %v1220
    %v1374 = vmul.f32 %v1180, %v1360
    %v1375 = vmul.f32 %v1185, %v1364
    %v1376 = vadd.f32 %v1374, %v1375
    %v1377 = vmul.f32 %v1190, %v1369
    %v1378 = vadd.f32 %v1376, %v1377
    %v1379 = vadd.f32 %v1378, %v1226
    %v1380 = vmul.f32 %v1195, %v1360
    %v1381 = vmul.f32 %v1200, %v1364
    %v1382 = vadd.f32 %v1380, %v1381
    %v1383 = vmul.f32 %v1205, %v1369
    %v1384 = vadd.f32 %v1382, %v1383
    %v1385 = vadd.f32 %v1384, %v1232
    %1386 = vrot.lane.b32.xlu0 %v367, 116
    %v1387 = vpop.permute.xlu0 %1386
    %v1389 = vmul.f32 %v1246, %v1387
    %1390 = vrot.lane.b32.xlu0 %v384, 116
    %v1391 = vpop.permute.xlu0 %1390
    %v1393 = vmul.f32 %v1260, %v1391
    %v1394 = vadd.f32 %v1389, %v1393
    %1395 = vrot.lane.b32.xlu0 %v392, 116
    %v1396 = vpop.permute.xlu0 %1395
    %v1398 = vmul.f32 %v1274, %v1396
    %v1399 = vadd.f32 %v1394, %v1398
    %1400 = vrot.lane.b32.xlu0 %v378, 116
    %v1401 = vpop.permute.xlu0 %1400
    %v1403 = vmul.f32 %v1246, %v1401
    %1404 = vrot.lane.b32.xlu0 %v386, 116
    %v1405 = vpop.permute.xlu0 %1404
    %v1407 = vmul.f32 %v1260, %v1405
    %v1408 = vadd.f32 %v1403, %v1407
    %1409 = vrot.lane.b32.xlu0 %v394, 116
    %v1410 = vpop.permute.xlu0 %1409
    %v1412 = vmul.f32 %v1274, %v1410
    %v1413 = vadd.f32 %v1408, %v1412
    %1414 = vrot.lane.b32.xlu0 %v381, 116
    %v1415 = vpop.permute.xlu0 %1414
    %v1417 = vmul.f32 %v1246, %v1415
    %1418 = vrot.lane.b32.xlu0 %v389, 116
    %v1419 = vpop.permute.xlu0 %1418
    %v1421 = vmul.f32 %v1260, %v1419
    %v1422 = vadd.f32 %v1417, %v1421
    %1423 = vrot.lane.b32.xlu0 %v396, 116
    %v1424 = vpop.permute.xlu0 %1423
    %v1426 = vmul.f32 %v1274, %v1424
    %v1427 = vadd.f32 %v1422, %v1426
    %v1428 = vmul.f32 %v1279, %v1387
    %v1429 = vmul.f32 %v1284, %v1391
    %v1430 = vadd.f32 %v1428, %v1429
    %v1431 = vmul.f32 %v1289, %v1396
    %v1432 = vadd.f32 %v1430, %v1431
    %v1433 = vmul.f32 %v1279, %v1401
    %v1434 = vmul.f32 %v1284, %v1405
    %v1435 = vadd.f32 %v1433, %v1434
    %v1436 = vmul.f32 %v1289, %v1410
    %v1437 = vadd.f32 %v1435, %v1436
    %v1438 = vmul.f32 %v1279, %v1415
    %v1439 = vmul.f32 %v1284, %v1419
    %v1440 = vadd.f32 %v1438, %v1439
    %v1441 = vmul.f32 %v1289, %v1424
    %v1442 = vadd.f32 %v1440, %v1441
    %v1443 = vmul.f32 %v1294, %v1387
    %v1444 = vmul.f32 %v1299, %v1391
    %v1445 = vadd.f32 %v1443, %v1444
    %v1446 = vmul.f32 %v1304, %v1396
    %v1447 = vadd.f32 %v1445, %v1446
    %v1448 = vmul.f32 %v1294, %v1401
    %v1449 = vmul.f32 %v1299, %v1405
    %v1450 = vadd.f32 %v1448, %v1449
    %v1451 = vmul.f32 %v1304, %v1410
    %v1452 = vadd.f32 %v1450, %v1451
    %v1453 = vmul.f32 %v1294, %v1415
    %v1454 = vmul.f32 %v1299, %v1419
    %v1455 = vadd.f32 %v1453, %v1454
    %v1456 = vmul.f32 %v1304, %v1424
    %v1457 = vadd.f32 %v1455, %v1456
    %1458 = vrot.lane.b32.xlu0 %v709, 116
    %v1459 = vpop.permute.xlu0 %1458
    %v1461 = vmul.f32 %v1246, %v1459
    %1462 = vrot.lane.b32.xlu0 %v709, 92
    %v1463 = vpop.permute.xlu0 %1462
    %v1465 = vmul.f32 %v1260, %v1463
    %v1466 = vadd.f32 %v1461, %v1465
    %1467 = vrot.lane.b32.xlu0 %v709, 68
    %v1468 = vpop.permute.xlu0 %1467
    %v1470 = vmul.f32 %v1274, %v1468
    %v1471 = vadd.f32 %v1466, %v1470
    %v1472 = vadd.f32 %v1471, %v1319
    %v1473 = vmul.f32 %v1279, %v1459
    %v1474 = vmul.f32 %v1284, %v1463
    %v1475 = vadd.f32 %v1473, %v1474
    %v1476 = vmul.f32 %v1289, %v1468
    %v1477 = vadd.f32 %v1475, %v1476
    %v1478 = vadd.f32 %v1477, %v1325
    %v1479 = vmul.f32 %v1294, %v1459
    %v1480 = vmul.f32 %v1299, %v1463
    %v1481 = vadd.f32 %v1479, %v1480
    %v1482 = vmul.f32 %v1304, %v1468
    %v1483 = vadd.f32 %v1481, %v1482
    %v1484 = vadd.f32 %v1483, %v1331
    %1485 = vrot.lane.b32.xlu0 %v367, 115
    %v1486 = vpop.permute.xlu0 %1485
    %v1488 = vmul.f32 %v1246, %v1486
    %1489 = vrot.lane.b32.xlu0 %v384, 115
    %v1490 = vpop.permute.xlu0 %1489
    %v1492 = vmul.f32 %v1260, %v1490
    %v1493 = vadd.f32 %v1488, %v1492
    %1494 = vrot.lane.b32.xlu0 %v392, 115
    %v1495 = vpop.permute.xlu0 %1494
    %v1497 = vmul.f32 %v1274, %v1495
    %v1498 = vadd.f32 %v1493, %v1497
    %1499 = vrot.lane.b32.xlu0 %v378, 115
    %v1500 = vpop.permute.xlu0 %1499
    %v1502 = vmul.f32 %v1246, %v1500
    %1503 = vrot.lane.b32.xlu0 %v386, 115
    %v1504 = vpop.permute.xlu0 %1503
    %v1506 = vmul.f32 %v1260, %v1504
    %v1507 = vadd.f32 %v1502, %v1506
    %1508 = vrot.lane.b32.xlu0 %v394, 115
    %v1509 = vpop.permute.xlu0 %1508
    %v1511 = vmul.f32 %v1274, %v1509
    %v1512 = vadd.f32 %v1507, %v1511
    %1513 = vrot.lane.b32.xlu0 %v381, 115
    %v1514 = vpop.permute.xlu0 %1513
    %v1516 = vmul.f32 %v1246, %v1514
    %1517 = vrot.lane.b32.xlu0 %v389, 115
    %v1518 = vpop.permute.xlu0 %1517
    %v1520 = vmul.f32 %v1260, %v1518
    %v1521 = vadd.f32 %v1516, %v1520
    %1522 = vrot.lane.b32.xlu0 %v396, 115
    %v1523 = vpop.permute.xlu0 %1522
    %v1525 = vmul.f32 %v1274, %v1523
    %v1526 = vadd.f32 %v1521, %v1525
    %v1527 = vmul.f32 %v1279, %v1486
    %v1528 = vmul.f32 %v1284, %v1490
    %v1529 = vadd.f32 %v1527, %v1528
    %v1530 = vmul.f32 %v1289, %v1495
    %v1531 = vadd.f32 %v1529, %v1530
    %v1532 = vmul.f32 %v1279, %v1500
    %v1533 = vmul.f32 %v1284, %v1504
    %v1534 = vadd.f32 %v1532, %v1533
    %v1535 = vmul.f32 %v1289, %v1509
    %v1536 = vadd.f32 %v1534, %v1535
    %v1537 = vmul.f32 %v1279, %v1514
    %v1538 = vmul.f32 %v1284, %v1518
    %v1539 = vadd.f32 %v1537, %v1538
    %v1540 = vmul.f32 %v1289, %v1523
    %v1541 = vadd.f32 %v1539, %v1540
    %v1542 = vmul.f32 %v1294, %v1486
    %v1543 = vmul.f32 %v1299, %v1490
    %v1544 = vadd.f32 %v1542, %v1543
    %v1545 = vmul.f32 %v1304, %v1495
    %v1546 = vadd.f32 %v1544, %v1545
    %v1547 = vmul.f32 %v1294, %v1500
    %v1548 = vmul.f32 %v1299, %v1504
    %v1549 = vadd.f32 %v1547, %v1548
    %v1550 = vmul.f32 %v1304, %v1509
    %v1551 = vadd.f32 %v1549, %v1550
    %v1552 = vmul.f32 %v1294, %v1514
    %v1553 = vmul.f32 %v1299, %v1518
    %v1554 = vadd.f32 %v1552, %v1553
    %v1555 = vmul.f32 %v1304, %v1523
    %v1556 = vadd.f32 %v1554, %v1555
    %1557 = vrot.lane.b32.xlu0 %v123, 4
    %v1558 = vpop.permute.xlu0 %1557
    %v1560 = vsub.f32 %v123, %v1558
    %1562 = vrot.lane.b32.xlu0 %v1560, 115
    %v1563 = vpop.permute.xlu0 %1562
    %v1565 = vmul.f32 %v1246, %v1563
    %1566 = vrot.lane.b32.xlu0 %v1560, 91
    %v1567 = vpop.permute.xlu0 %1566
    %v1569 = vmul.f32 %v1260, %v1567
    %v1570 = vadd.f32 %v1565, %v1569
    %1571 = vrot.lane.b32.xlu0 %v1560, 67
    %v1572 = vpop.permute.xlu0 %1571
    %v1574 = vmul.f32 %v1274, %v1572
    %v1575 = vadd.f32 %v1570, %v1574
    %v1576 = vadd.f32 %v1575, %v1319
    %v1577 = vmul.f32 %v1279, %v1563
    %v1578 = vmul.f32 %v1284, %v1567
    %v1579 = vadd.f32 %v1577, %v1578
    %v1580 = vmul.f32 %v1289, %v1572
    %v1581 = vadd.f32 %v1579, %v1580
    %v1582 = vadd.f32 %v1581, %v1325
    %v1583 = vmul.f32 %v1294, %v1563
    %v1584 = vmul.f32 %v1299, %v1567
    %v1585 = vadd.f32 %v1583, %v1584
    %v1586 = vmul.f32 %v1304, %v1572
    %v1587 = vadd.f32 %v1585, %v1586
    %v1588 = vadd.f32 %v1587, %v1331
    %1589 = vrot.lane.b32.xlu0 %v367, 114
    %v1590 = vpop.permute.xlu0 %1589
    %v1592 = vmul.f32 %v1246, %v1590
    %1593 = vrot.lane.b32.xlu0 %v384, 114
    %v1594 = vpop.permute.xlu0 %1593
    %v1596 = vmul.f32 %v1260, %v1594
    %v1597 = vadd.f32 %v1592, %v1596
    %1598 = vrot.lane.b32.xlu0 %v392, 114
    %v1599 = vpop.permute.xlu0 %1598
    %v1601 = vmul.f32 %v1274, %v1599
    %v1602 = vadd.f32 %v1597, %v1601
    %1603 = vrot.lane.b32.xlu0 %v378, 114
    %v1604 = vpop.permute.xlu0 %1603
    %v1606 = vmul.f32 %v1246, %v1604
    %1607 = vrot.lane.b32.xlu0 %v386, 114
    %v1608 = vpop.permute.xlu0 %1607
    %v1610 = vmul.f32 %v1260, %v1608
    %v1611 = vadd.f32 %v1606, %v1610
    %1612 = vrot.lane.b32.xlu0 %v394, 114
    %v1613 = vpop.permute.xlu0 %1612
    %v1615 = vmul.f32 %v1274, %v1613
    %v1616 = vadd.f32 %v1611, %v1615
    %1617 = vrot.lane.b32.xlu0 %v381, 114
    %v1618 = vpop.permute.xlu0 %1617
    %v1620 = vmul.f32 %v1246, %v1618
    %1621 = vrot.lane.b32.xlu0 %v389, 114
    %v1622 = vpop.permute.xlu0 %1621
    %v1624 = vmul.f32 %v1260, %v1622
    %v1625 = vadd.f32 %v1620, %v1624
    %1626 = vrot.lane.b32.xlu0 %v396, 114
    %v1627 = vpop.permute.xlu0 %1626
    %v1629 = vmul.f32 %v1274, %v1627
    %v1630 = vadd.f32 %v1625, %v1629
    %v1631 = vmul.f32 %v1279, %v1590
    %v1632 = vmul.f32 %v1284, %v1594
    %v1633 = vadd.f32 %v1631, %v1632
    %v1634 = vmul.f32 %v1289, %v1599
    %v1635 = vadd.f32 %v1633, %v1634
    %v1636 = vmul.f32 %v1279, %v1604
    %v1637 = vmul.f32 %v1284, %v1608
    %v1638 = vadd.f32 %v1636, %v1637
    %v1639 = vmul.f32 %v1289, %v1613
    %v1640 = vadd.f32 %v1638, %v1639
    %v1641 = vmul.f32 %v1279, %v1618
    %v1642 = vmul.f32 %v1284, %v1622
    %v1643 = vadd.f32 %v1641, %v1642
    %v1644 = vmul.f32 %v1289, %v1627
    %v1645 = vadd.f32 %v1643, %v1644
    %v1646 = vmul.f32 %v1294, %v1590
    %v1647 = vmul.f32 %v1299, %v1594
    %v1648 = vadd.f32 %v1646, %v1647
    %v1649 = vmul.f32 %v1304, %v1599
    %v1650 = vadd.f32 %v1648, %v1649
    %v1651 = vmul.f32 %v1294, %v1604
    %v1652 = vmul.f32 %v1299, %v1608
    %v1653 = vadd.f32 %v1651, %v1652
    %v1654 = vmul.f32 %v1304, %v1613
    %v1655 = vadd.f32 %v1653, %v1654
    %v1656 = vmul.f32 %v1294, %v1618
    %v1657 = vmul.f32 %v1299, %v1622
    %v1658 = vadd.f32 %v1656, %v1657
    %v1659 = vmul.f32 %v1304, %v1627
    %v1660 = vadd.f32 %v1658, %v1659
    %1661 = vrot.lane.b32.xlu0 %v123, 5
    %v1662 = vpop.permute.xlu0 %1661
    %v1664 = vsub.f32 %v123, %v1662
    %1666 = vrot.lane.b32.xlu0 %v1664, 114
    %v1667 = vpop.permute.xlu0 %1666
    %v1669 = vmul.f32 %v1246, %v1667
    %1670 = vrot.lane.b32.xlu0 %v1664, 90
    %v1671 = vpop.permute.xlu0 %1670
    %v1673 = vmul.f32 %v1260, %v1671
    %v1674 = vadd.f32 %v1669, %v1673
    %1675 = vrot.lane.b32.xlu0 %v1664, 66
    %v1676 = vpop.permute.xlu0 %1675
    %v1678 = vmul.f32 %v1274, %v1676
    %v1679 = vadd.f32 %v1674, %v1678
    %v1680 = vadd.f32 %v1679, %v1319
    %v1681 = vmul.f32 %v1279, %v1667
    %v1682 = vmul.f32 %v1284, %v1671
    %v1683 = vadd.f32 %v1681, %v1682
    %v1684 = vmul.f32 %v1289, %v1676
    %v1685 = vadd.f32 %v1683, %v1684
    %v1686 = vadd.f32 %v1685, %v1325
    %v1687 = vmul.f32 %v1294, %v1667
    %v1688 = vmul.f32 %v1299, %v1671
    %v1689 = vadd.f32 %v1687, %v1688
    %v1690 = vmul.f32 %v1304, %v1676
    %v1691 = vadd.f32 %v1689, %v1690
    %v1692 = vadd.f32 %v1691, %v1331
    %1693 = vrot.lane.b32.xlu0 %v709, 113
    %v1694 = vpop.permute.xlu0 %1693
    %v1696 = vmul.f32 %v1399, %v1694
    %1697 = vrot.lane.b32.xlu0 %v709, 89
    %v1698 = vpop.permute.xlu0 %1697
    %v1700 = vmul.f32 %v1413, %v1698
    %v1701 = vadd.f32 %v1696, %v1700
    %1702 = vrot.lane.b32.xlu0 %v709, 65
    %v1703 = vpop.permute.xlu0 %1702
    %v1705 = vmul.f32 %v1427, %v1703
    %v1706 = vadd.f32 %v1701, %v1705
    %v1707 = vadd.f32 %v1706, %v1472
    %v1708 = vmul.f32 %v1432, %v1694
    %v1709 = vmul.f32 %v1437, %v1698
    %v1710 = vadd.f32 %v1708, %v1709
    %v1711 = vmul.f32 %v1442, %v1703
    %v1712 = vadd.f32 %v1710, %v1711
    %v1713 = vadd.f32 %v1712, %v1478
    %v1714 = vmul.f32 %v1447, %v1694
    %v1715 = vmul.f32 %v1452, %v1698
    %v1716 = vadd.f32 %v1714, %v1715
    %v1717 = vmul.f32 %v1457, %v1703
    %v1718 = vadd.f32 %v1716, %v1717
    %v1719 = vadd.f32 %v1718, %v1484
    %1720 = vrot.lane.b32.xlu0 %v367, 112
    %v1721 = vpop.permute.xlu0 %1720
    %v1723 = vmul.f32 %v1498, %v1721
    %1724 = vrot.lane.b32.xlu0 %v384, 112
    %v1725 = vpop.permute.xlu0 %1724
    %v1727 = vmul.f32 %v1512, %v1725
    %v1728 = vadd.f32 %v1723, %v1727
    %1729 = vrot.lane.b32.xlu0 %v392, 112
    %v1730 = vpop.permute.xlu0 %1729
    %v1732 = vmul.f32 %v1526, %v1730
    %v1733 = vadd.f32 %v1728, %v1732
    %1734 = vrot.lane.b32.xlu0 %v378, 112
    %v1735 = vpop.permute.xlu0 %1734
    %v1737 = vmul.f32 %v1498, %v1735
    %1738 = vrot.lane.b32.xlu0 %v386, 112
    %v1739 = vpop.permute.xlu0 %1738
    %v1741 = vmul.f32 %v1512, %v1739
    %v1742 = vadd.f32 %v1737, %v1741
    %1743 = vrot.lane.b32.xlu0 %v394, 112
    %v1744 = vpop.permute.xlu0 %1743
    %v1746 = vmul.f32 %v1526, %v1744
    %v1747 = vadd.f32 %v1742, %v1746
    %1748 = vrot.lane.b32.xlu0 %v381, 112
    %v1749 = vpop.permute.xlu0 %1748
    %v1751 = vmul.f32 %v1498, %v1749
    %1752 = vrot.lane.b32.xlu0 %v389, 112
    %v1753 = vpop.permute.xlu0 %1752
    %v1755 = vmul.f32 %v1512, %v1753
    %v1756 = vadd.f32 %v1751, %v1755
    %1757 = vrot.lane.b32.xlu0 %v396, 112
    %v1758 = vpop.permute.xlu0 %1757
    %v1760 = vmul.f32 %v1526, %v1758
    %v1761 = vadd.f32 %v1756, %v1760
    %v1762 = vmul.f32 %v1531, %v1721
    %v1763 = vmul.f32 %v1536, %v1725
    %v1764 = vadd.f32 %v1762, %v1763
    %v1765 = vmul.f32 %v1541, %v1730
    %v1766 = vadd.f32 %v1764, %v1765
    %v1767 = vmul.f32 %v1531, %v1735
    %v1768 = vmul.f32 %v1536, %v1739
    %v1769 = vadd.f32 %v1767, %v1768
    %v1770 = vmul.f32 %v1541, %v1744
    %v1771 = vadd.f32 %v1769, %v1770
    %v1772 = vmul.f32 %v1531, %v1749
    %v1773 = vmul.f32 %v1536, %v1753
    %v1774 = vadd.f32 %v1772, %v1773
    %v1775 = vmul.f32 %v1541, %v1758
    %v1776 = vadd.f32 %v1774, %v1775
    %v1777 = vmul.f32 %v1546, %v1721
    %v1778 = vmul.f32 %v1551, %v1725
    %v1779 = vadd.f32 %v1777, %v1778
    %v1780 = vmul.f32 %v1556, %v1730
    %v1781 = vadd.f32 %v1779, %v1780
    %v1782 = vmul.f32 %v1546, %v1735
    %v1783 = vmul.f32 %v1551, %v1739
    %v1784 = vadd.f32 %v1782, %v1783
    %v1785 = vmul.f32 %v1556, %v1744
    %v1786 = vadd.f32 %v1784, %v1785
    %v1787 = vmul.f32 %v1546, %v1749
    %v1788 = vmul.f32 %v1551, %v1753
    %v1789 = vadd.f32 %v1787, %v1788
    %v1790 = vmul.f32 %v1556, %v1758
    %v1791 = vadd.f32 %v1789, %v1790
    %1792 = vrot.lane.b32.xlu0 %v709, 112
    %v1793 = vpop.permute.xlu0 %1792
    %v1795 = vmul.f32 %v1498, %v1793
    %1796 = vrot.lane.b32.xlu0 %v709, 88
    %v1797 = vpop.permute.xlu0 %1796
    %v1799 = vmul.f32 %v1512, %v1797
    %v1800 = vadd.f32 %v1795, %v1799
    %1801 = vrot.lane.b32.xlu0 %v709, 64
    %v1802 = vpop.permute.xlu0 %1801
    %v1804 = vmul.f32 %v1526, %v1802
    %v1805 = vadd.f32 %v1800, %v1804
    %v1806 = vadd.f32 %v1805, %v1576
    %v1807 = vmul.f32 %v1531, %v1793
    %v1808 = vmul.f32 %v1536, %v1797
    %v1809 = vadd.f32 %v1807, %v1808
    %v1810 = vmul.f32 %v1541, %v1802
    %v1811 = vadd.f32 %v1809, %v1810
    %v1812 = vadd.f32 %v1811, %v1582
    %v1813 = vmul.f32 %v1546, %v1793
    %v1814 = vmul.f32 %v1551, %v1797
    %v1815 = vadd.f32 %v1813, %v1814
    %v1816 = vmul.f32 %v1556, %v1802
    %v1817 = vadd.f32 %v1815, %v1816
    %v1818 = vadd.f32 %v1817, %v1588
    %1819 = vrot.lane.b32.xlu0 %v367, 111
    %v1820 = vpop.permute.xlu0 %1819
    %v1822 = vmul.f32 %v1602, %v1820
    %1823 = vrot.lane.b32.xlu0 %v384, 111
    %v1824 = vpop.permute.xlu0 %1823
    %v1826 = vmul.f32 %v1616, %v1824
    %v1827 = vadd.f32 %v1822, %v1826
    %1828 = vrot.lane.b32.xlu0 %v392, 111
    %v1829 = vpop.permute.xlu0 %1828
    %v1831 = vmul.f32 %v1630, %v1829
    %v1832 = vadd.f32 %v1827, %v1831
    %1833 = vrot.lane.b32.xlu0 %v378, 111
    %v1834 = vpop.permute.xlu0 %1833
    %v1836 = vmul.f32 %v1602, %v1834
    %1837 = vrot.lane.b32.xlu0 %v386, 111
    %v1838 = vpop.permute.xlu0 %1837
    %v1840 = vmul.f32 %v1616, %v1838
    %v1841 = vadd.f32 %v1836, %v1840
    %1842 = vrot.lane.b32.xlu0 %v394, 111
    %v1843 = vpop.permute.xlu0 %1842
    %v1845 = vmul.f32 %v1630, %v1843
    %v1846 = vadd.f32 %v1841, %v1845
    %1847 = vrot.lane.b32.xlu0 %v381, 111
    %v1848 = vpop.permute.xlu0 %1847
    %v1850 = vmul.f32 %v1602, %v1848
    %1851 = vrot.lane.b32.xlu0 %v389, 111
    %v1852 = vpop.permute.xlu0 %1851
    %v1854 = vmul.f32 %v1616, %v1852
    %v1855 = vadd.f32 %v1850, %v1854
    %1856 = vrot.lane.b32.xlu0 %v396, 111
    %v1857 = vpop.permute.xlu0 %1856
    %v1859 = vmul.f32 %v1630, %v1857
    %v1860 = vadd.f32 %v1855, %v1859
    %v1861 = vmul.f32 %v1635, %v1820
    %v1862 = vmul.f32 %v1640, %v1824
    %v1863 = vadd.f32 %v1861, %v1862
    %v1864 = vmul.f32 %v1645, %v1829
    %v1865 = vadd.f32 %v1863, %v1864
    %v1866 = vmul.f32 %v1635, %v1834
    %v1867 = vmul.f32 %v1640, %v1838
    %v1868 = vadd.f32 %v1866, %v1867
    %v1869 = vmul.f32 %v1645, %v1843
    %v1870 = vadd.f32 %v1868, %v1869
    %v1871 = vmul.f32 %v1635, %v1848
    %v1872 = vmul.f32 %v1640, %v1852
    %v1873 = vadd.f32 %v1871, %v1872
    %v1874 = vmul.f32 %v1645, %v1857
    %v1875 = vadd.f32 %v1873, %v1874
    %v1876 = vmul.f32 %v1650, %v1820
    %v1877 = vmul.f32 %v1655, %v1824
    %v1878 = vadd.f32 %v1876, %v1877
    %v1879 = vmul.f32 %v1660, %v1829
    %v1880 = vadd.f32 %v1878, %v1879
    %v1881 = vmul.f32 %v1650, %v1834
    %v1882 = vmul.f32 %v1655, %v1838
    %v1883 = vadd.f32 %v1881, %v1882
    %v1884 = vmul.f32 %v1660, %v1843
    %v1885 = vadd.f32 %v1883, %v1884
    %v1886 = vmul.f32 %v1650, %v1848
    %v1887 = vmul.f32 %v1655, %v1852
    %v1888 = vadd.f32 %v1886, %v1887
    %v1889 = vmul.f32 %v1660, %v1857
    %v1890 = vadd.f32 %v1888, %v1889
    %1891 = vrot.lane.b32.xlu0 %v709, 111
    %v1892 = vpop.permute.xlu0 %1891
    %v1894 = vmul.f32 %v1602, %v1892
    %1895 = vrot.lane.b32.xlu0 %v709, 87
    %v1896 = vpop.permute.xlu0 %1895
    %v1898 = vmul.f32 %v1616, %v1896
    %v1899 = vadd.f32 %v1894, %v1898
    %1900 = vrot.lane.b32.xlu0 %v709, 63
    %v1901 = vpop.permute.xlu0 %1900
    %v1903 = vmul.f32 %v1630, %v1901
    %v1904 = vadd.f32 %v1899, %v1903
    %v1905 = vadd.f32 %v1904, %v1680
    %v1906 = vmul.f32 %v1635, %v1892
    %v1907 = vmul.f32 %v1640, %v1896
    %v1908 = vadd.f32 %v1906, %v1907
    %v1909 = vmul.f32 %v1645, %v1901
    %v1910 = vadd.f32 %v1908, %v1909
    %v1911 = vadd.f32 %v1910, %v1686
    %v1912 = vmul.f32 %v1650, %v1892
    %v1913 = vmul.f32 %v1655, %v1896
    %v1914 = vadd.f32 %v1912, %v1913
    %v1915 = vmul.f32 %v1660, %v1901
    %v1916 = vadd.f32 %v1914, %v1915
    %v1917 = vadd.f32 %v1916, %v1692
    %1918 = vrot.lane.b32.xlu0 %v367, 110
    %v1919 = vpop.permute.xlu0 %1918
    %v1921 = vmul.f32 %v1733, %v1919
    %1922 = vrot.lane.b32.xlu0 %v384, 110
    %v1923 = vpop.permute.xlu0 %1922
    %v1925 = vmul.f32 %v1747, %v1923
    %v1926 = vadd.f32 %v1921, %v1925
    %1927 = vrot.lane.b32.xlu0 %v392, 110
    %v1928 = vpop.permute.xlu0 %1927
    %v1930 = vmul.f32 %v1761, %v1928
    %v1931 = vadd.f32 %v1926, %v1930
    %1932 = vrot.lane.b32.xlu0 %v378, 110
    %v1933 = vpop.permute.xlu0 %1932
    %v1935 = vmul.f32 %v1733, %v1933
    %1936 = vrot.lane.b32.xlu0 %v386, 110
    %v1937 = vpop.permute.xlu0 %1936
    %v1939 = vmul.f32 %v1747, %v1937
    %v1940 = vadd.f32 %v1935, %v1939
    %1941 = vrot.lane.b32.xlu0 %v394, 110
    %v1942 = vpop.permute.xlu0 %1941
    %v1944 = vmul.f32 %v1761, %v1942
    %v1945 = vadd.f32 %v1940, %v1944
    %1946 = vrot.lane.b32.xlu0 %v381, 110
    %v1947 = vpop.permute.xlu0 %1946
    %v1949 = vmul.f32 %v1733, %v1947
    %1950 = vrot.lane.b32.xlu0 %v389, 110
    %v1951 = vpop.permute.xlu0 %1950
    %v1953 = vmul.f32 %v1747, %v1951
    %v1954 = vadd.f32 %v1949, %v1953
    %1955 = vrot.lane.b32.xlu0 %v396, 110
    %v1956 = vpop.permute.xlu0 %1955
    %v1958 = vmul.f32 %v1761, %v1956
    %v1959 = vadd.f32 %v1954, %v1958
    %v1960 = vmul.f32 %v1766, %v1919
    %v1961 = vmul.f32 %v1771, %v1923
    %v1962 = vadd.f32 %v1960, %v1961
    %v1963 = vmul.f32 %v1776, %v1928
    %v1964 = vadd.f32 %v1962, %v1963
    %v1965 = vmul.f32 %v1766, %v1933
    %v1966 = vmul.f32 %v1771, %v1937
    %v1967 = vadd.f32 %v1965, %v1966
    %v1968 = vmul.f32 %v1776, %v1942
    %v1969 = vadd.f32 %v1967, %v1968
    %v1970 = vmul.f32 %v1766, %v1947
    %v1971 = vmul.f32 %v1771, %v1951
    %v1972 = vadd.f32 %v1970, %v1971
    %v1973 = vmul.f32 %v1776, %v1956
    %v1974 = vadd.f32 %v1972, %v1973
    %v1975 = vmul.f32 %v1781, %v1919
    %v1976 = vmul.f32 %v1786, %v1923
    %v1977 = vadd.f32 %v1975, %v1976
    %v1978 = vmul.f32 %v1791, %v1928
    %v1979 = vadd.f32 %v1977, %v1978
    %v1980 = vmul.f32 %v1781, %v1933
    %v1981 = vmul.f32 %v1786, %v1937
    %v1982 = vadd.f32 %v1980, %v1981
    %v1983 = vmul.f32 %v1791, %v1942
    %v1984 = vadd.f32 %v1982, %v1983
    %v1985 = vmul.f32 %v1781, %v1947
    %v1986 = vmul.f32 %v1786, %v1951
    %v1987 = vadd.f32 %v1985, %v1986
    %v1988 = vmul.f32 %v1791, %v1956
    %v1989 = vadd.f32 %v1987, %v1988
    %1990 = vrot.lane.b32.xlu0 %v605, 110
    %v1991 = vpop.permute.xlu0 %1990
    %v1993 = vmul.f32 %v1733, %v1991
    %1994 = vrot.lane.b32.xlu0 %v605, 86
    %v1995 = vpop.permute.xlu0 %1994
    %v1997 = vmul.f32 %v1747, %v1995
    %v1998 = vadd.f32 %v1993, %v1997
    %1999 = vrot.lane.b32.xlu0 %v605, 62
    %v2000 = vpop.permute.xlu0 %1999
    %v2002 = vmul.f32 %v1761, %v2000
    %v2003 = vadd.f32 %v1998, %v2002
    %v2004 = vadd.f32 %v2003, %v1806
    %v2005 = vmul.f32 %v1766, %v1991
    %v2006 = vmul.f32 %v1771, %v1995
    %v2007 = vadd.f32 %v2005, %v2006
    %v2008 = vmul.f32 %v1776, %v2000
    %v2009 = vadd.f32 %v2007, %v2008
    %v2010 = vadd.f32 %v2009, %v1812
    %v2011 = vmul.f32 %v1781, %v1991
    %v2012 = vmul.f32 %v1786, %v1995
    %v2013 = vadd.f32 %v2011, %v2012
    %v2014 = vmul.f32 %v1791, %v2000
    %v2015 = vadd.f32 %v2013, %v2014
    %v2016 = vadd.f32 %v2015, %v1818
    %2017 = vrot.lane.b32.xlu0 %v367, 109
    %v2018 = vpop.permute.xlu0 %2017
    %v2020 = vmul.f32 %v1832, %v2018
    %2021 = vrot.lane.b32.xlu0 %v384, 109
    %v2022 = vpop.permute.xlu0 %2021
    %v2024 = vmul.f32 %v1846, %v2022
    %v2025 = vadd.f32 %v2020, %v2024
    %2026 = vrot.lane.b32.xlu0 %v392, 109
    %v2027 = vpop.permute.xlu0 %2026
    %v2029 = vmul.f32 %v1860, %v2027
    %v2030 = vadd.f32 %v2025, %v2029
    %2031 = vrot.lane.b32.xlu0 %v378, 109
    %v2032 = vpop.permute.xlu0 %2031
    %v2034 = vmul.f32 %v1832, %v2032
    %2035 = vrot.lane.b32.xlu0 %v386, 109
    %v2036 = vpop.permute.xlu0 %2035
    %v2038 = vmul.f32 %v1846, %v2036
    %v2039 = vadd.f32 %v2034, %v2038
    %2040 = vrot.lane.b32.xlu0 %v394, 109
    %v2041 = vpop.permute.xlu0 %2040
    %v2043 = vmul.f32 %v1860, %v2041
    %v2044 = vadd.f32 %v2039, %v2043
    %2045 = vrot.lane.b32.xlu0 %v381, 109
    %v2046 = vpop.permute.xlu0 %2045
    %v2048 = vmul.f32 %v1832, %v2046
    %2049 = vrot.lane.b32.xlu0 %v389, 109
    %v2050 = vpop.permute.xlu0 %2049
    %v2052 = vmul.f32 %v1846, %v2050
    %v2053 = vadd.f32 %v2048, %v2052
    %2054 = vrot.lane.b32.xlu0 %v396, 109
    %v2055 = vpop.permute.xlu0 %2054
    %v2057 = vmul.f32 %v1860, %v2055
    %v2058 = vadd.f32 %v2053, %v2057
    %v2059 = vmul.f32 %v1865, %v2018
    %v2060 = vmul.f32 %v1870, %v2022
    %v2061 = vadd.f32 %v2059, %v2060
    %v2062 = vmul.f32 %v1875, %v2027
    %v2063 = vadd.f32 %v2061, %v2062
    %v2064 = vmul.f32 %v1865, %v2032
    %v2065 = vmul.f32 %v1870, %v2036
    %v2066 = vadd.f32 %v2064, %v2065
    %v2067 = vmul.f32 %v1875, %v2041
    %v2068 = vadd.f32 %v2066, %v2067
    %v2069 = vmul.f32 %v1865, %v2046
    %v2070 = vmul.f32 %v1870, %v2050
    %v2071 = vadd.f32 %v2069, %v2070
    %v2072 = vmul.f32 %v1875, %v2055
    %v2073 = vadd.f32 %v2071, %v2072
    %v2074 = vmul.f32 %v1880, %v2018
    %v2075 = vmul.f32 %v1885, %v2022
    %v2076 = vadd.f32 %v2074, %v2075
    %v2077 = vmul.f32 %v1890, %v2027
    %v2078 = vadd.f32 %v2076, %v2077
    %v2079 = vmul.f32 %v1880, %v2032
    %v2080 = vmul.f32 %v1885, %v2036
    %v2081 = vadd.f32 %v2079, %v2080
    %v2082 = vmul.f32 %v1890, %v2041
    %v2083 = vadd.f32 %v2081, %v2082
    %v2084 = vmul.f32 %v1880, %v2046
    %v2085 = vmul.f32 %v1885, %v2050
    %v2086 = vadd.f32 %v2084, %v2085
    %v2087 = vmul.f32 %v1890, %v2055
    %v2088 = vadd.f32 %v2086, %v2087
    %2089 = vrot.lane.b32.xlu0 %v605, 109
    %v2090 = vpop.permute.xlu0 %2089
    %v2092 = vmul.f32 %v1832, %v2090
    %2093 = vrot.lane.b32.xlu0 %v605, 85
    %v2094 = vpop.permute.xlu0 %2093
    %v2096 = vmul.f32 %v1846, %v2094
    %v2097 = vadd.f32 %v2092, %v2096
    %2098 = vrot.lane.b32.xlu0 %v605, 61
    %v2099 = vpop.permute.xlu0 %2098
    %v2101 = vmul.f32 %v1860, %v2099
    %v2102 = vadd.f32 %v2097, %v2101
    %v2103 = vadd.f32 %v2102, %v1905
    %v2104 = vmul.f32 %v1865, %v2090
    %v2105 = vmul.f32 %v1870, %v2094
    %v2106 = vadd.f32 %v2104, %v2105
    %v2107 = vmul.f32 %v1875, %v2099
    %v2108 = vadd.f32 %v2106, %v2107
    %v2109 = vadd.f32 %v2108, %v1911
    %v2110 = vmul.f32 %v1880, %v2090
    %v2111 = vmul.f32 %v1885, %v2094
    %v2112 = vadd.f32 %v2110, %v2111
    %v2113 = vmul.f32 %v1890, %v2099
    %v2114 = vadd.f32 %v2112, %v2113
    %v2115 = vadd.f32 %v2114, %v1917
    %2116 = vrot.lane.b32.xlu0 %v367, 108
    %v2117 = vpop.permute.xlu0 %2116
    %v2119 = vmul.f32 %v1931, %v2117
    %2120 = vrot.lane.b32.xlu0 %v384, 108
    %v2121 = vpop.permute.xlu0 %2120
    %v2123 = vmul.f32 %v1945, %v2121
    %v2124 = vadd.f32 %v2119, %v2123
    %2125 = vrot.lane.b32.xlu0 %v392, 108
    %v2126 = vpop.permute.xlu0 %2125
    %v2128 = vmul.f32 %v1959, %v2126
    %v2129 = vadd.f32 %v2124, %v2128
    %2130 = vrot.lane.b32.xlu0 %v378, 108
    %v2131 = vpop.permute.xlu0 %2130
    %v2133 = vmul.f32 %v1931, %v2131
    %2134 = vrot.lane.b32.xlu0 %v386, 108
    %v2135 = vpop.permute.xlu0 %2134
    %v2137 = vmul.f32 %v1945, %v2135
    %v2138 = vadd.f32 %v2133, %v2137
    %2139 = vrot.lane.b32.xlu0 %v394, 108
    %v2140 = vpop.permute.xlu0 %2139
    %v2142 = vmul.f32 %v1959, %v2140
    %v2143 = vadd.f32 %v2138, %v2142
    %2144 = vrot.lane.b32.xlu0 %v381, 108
    %v2145 = vpop.permute.xlu0 %2144
    %v2147 = vmul.f32 %v1931, %v2145
    %2148 = vrot.lane.b32.xlu0 %v389, 108
    %v2149 = vpop.permute.xlu0 %2148
    %v2151 = vmul.f32 %v1945, %v2149
    %v2152 = vadd.f32 %v2147, %v2151
    %2153 = vrot.lane.b32.xlu0 %v396, 108
    %v2154 = vpop.permute.xlu0 %2153
    %v2156 = vmul.f32 %v1959, %v2154
    %v2157 = vadd.f32 %v2152, %v2156
    %v2158 = vmul.f32 %v1964, %v2117
    %v2159 = vmul.f32 %v1969, %v2121
    %v2160 = vadd.f32 %v2158, %v2159
    %v2161 = vmul.f32 %v1974, %v2126
    %v2162 = vadd.f32 %v2160, %v2161
    %v2163 = vmul.f32 %v1964, %v2131
    %v2164 = vmul.f32 %v1969, %v2135
    %v2165 = vadd.f32 %v2163, %v2164
    %v2166 = vmul.f32 %v1974, %v2140
    %v2167 = vadd.f32 %v2165, %v2166
    %v2168 = vmul.f32 %v1964, %v2145
    %v2169 = vmul.f32 %v1969, %v2149
    %v2170 = vadd.f32 %v2168, %v2169
    %v2171 = vmul.f32 %v1974, %v2154
    %v2172 = vadd.f32 %v2170, %v2171
    %v2173 = vmul.f32 %v1979, %v2117
    %v2174 = vmul.f32 %v1984, %v2121
    %v2175 = vadd.f32 %v2173, %v2174
    %v2176 = vmul.f32 %v1989, %v2126
    %v2177 = vadd.f32 %v2175, %v2176
    %v2178 = vmul.f32 %v1979, %v2131
    %v2179 = vmul.f32 %v1984, %v2135
    %v2180 = vadd.f32 %v2178, %v2179
    %v2181 = vmul.f32 %v1989, %v2140
    %v2182 = vadd.f32 %v2180, %v2181
    %v2183 = vmul.f32 %v1979, %v2145
    %v2184 = vmul.f32 %v1984, %v2149
    %v2185 = vadd.f32 %v2183, %v2184
    %v2186 = vmul.f32 %v1989, %v2154
    %v2187 = vadd.f32 %v2185, %v2186
    %2188 = vrot.lane.b32.xlu0 %v605, 108
    %v2189 = vpop.permute.xlu0 %2188
    %v2191 = vmul.f32 %v1931, %v2189
    %2192 = vrot.lane.b32.xlu0 %v605, 84
    %v2193 = vpop.permute.xlu0 %2192
    %v2195 = vmul.f32 %v1945, %v2193
    %v2196 = vadd.f32 %v2191, %v2195
    %2197 = vrot.lane.b32.xlu0 %v605, 60
    %v2198 = vpop.permute.xlu0 %2197
    %v2200 = vmul.f32 %v1959, %v2198
    %v2201 = vadd.f32 %v2196, %v2200
    %v2202 = vadd.f32 %v2201, %v2004
    %v2203 = vmul.f32 %v1964, %v2189
    %v2204 = vmul.f32 %v1969, %v2193
    %v2205 = vadd.f32 %v2203, %v2204
    %v2206 = vmul.f32 %v1974, %v2198
    %v2207 = vadd.f32 %v2205, %v2206
    %v2208 = vadd.f32 %v2207, %v2010
    %v2209 = vmul.f32 %v1979, %v2189
    %v2210 = vmul.f32 %v1984, %v2193
    %v2211 = vadd.f32 %v2209, %v2210
    %v2212 = vmul.f32 %v1989, %v2198
    %v2213 = vadd.f32 %v2211, %v2212
    %v2214 = vadd.f32 %v2213, %v2016
    %2215 = vrot.lane.b32.xlu0 %v367, 107
    %v2216 = vpop.permute.xlu0 %2215
    %v2218 = vmul.f32 %v2030, %v2216
    %2219 = vrot.lane.b32.xlu0 %v384, 107
    %v2220 = vpop.permute.xlu0 %2219
    %v2222 = vmul.f32 %v2044, %v2220
    %v2223 = vadd.f32 %v2218, %v2222
    %2224 = vrot.lane.b32.xlu0 %v392, 107
    %v2225 = vpop.permute.xlu0 %2224
    %v2227 = vmul.f32 %v2058, %v2225
    %v2228 = vadd.f32 %v2223, %v2227
    %2229 = vrot.lane.b32.xlu0 %v378, 107
    %v2230 = vpop.permute.xlu0 %2229
    %v2232 = vmul.f32 %v2030, %v2230
    %2233 = vrot.lane.b32.xlu0 %v386, 107
    %v2234 = vpop.permute.xlu0 %2233
    %v2236 = vmul.f32 %v2044, %v2234
    %v2237 = vadd.f32 %v2232, %v2236
    %2238 = vrot.lane.b32.xlu0 %v394, 107
    %v2239 = vpop.permute.xlu0 %2238
    %v2241 = vmul.f32 %v2058, %v2239
    %v2242 = vadd.f32 %v2237, %v2241
    %2243 = vrot.lane.b32.xlu0 %v381, 107
    %v2244 = vpop.permute.xlu0 %2243
    %v2246 = vmul.f32 %v2030, %v2244
    %2247 = vrot.lane.b32.xlu0 %v389, 107
    %v2248 = vpop.permute.xlu0 %2247
    %v2250 = vmul.f32 %v2044, %v2248
    %v2251 = vadd.f32 %v2246, %v2250
    %2252 = vrot.lane.b32.xlu0 %v396, 107
    %v2253 = vpop.permute.xlu0 %2252
    %v2255 = vmul.f32 %v2058, %v2253
    %v2256 = vadd.f32 %v2251, %v2255
    %v2257 = vmul.f32 %v2063, %v2216
    %v2258 = vmul.f32 %v2068, %v2220
    %v2259 = vadd.f32 %v2257, %v2258
    %v2260 = vmul.f32 %v2073, %v2225
    %v2261 = vadd.f32 %v2259, %v2260
    %v2262 = vmul.f32 %v2063, %v2230
    %v2263 = vmul.f32 %v2068, %v2234
    %v2264 = vadd.f32 %v2262, %v2263
    %v2265 = vmul.f32 %v2073, %v2239
    %v2266 = vadd.f32 %v2264, %v2265
    %v2267 = vmul.f32 %v2063, %v2244
    %v2268 = vmul.f32 %v2068, %v2248
    %v2269 = vadd.f32 %v2267, %v2268
    %v2270 = vmul.f32 %v2073, %v2253
    %v2271 = vadd.f32 %v2269, %v2270
    %v2272 = vmul.f32 %v2078, %v2216
    %v2273 = vmul.f32 %v2083, %v2220
    %v2274 = vadd.f32 %v2272, %v2273
    %v2275 = vmul.f32 %v2088, %v2225
    %v2276 = vadd.f32 %v2274, %v2275
    %v2277 = vmul.f32 %v2078, %v2230
    %v2278 = vmul.f32 %v2083, %v2234
    %v2279 = vadd.f32 %v2277, %v2278
    %v2280 = vmul.f32 %v2088, %v2239
    %v2281 = vadd.f32 %v2279, %v2280
    %v2282 = vmul.f32 %v2078, %v2244
    %v2283 = vmul.f32 %v2083, %v2248
    %v2284 = vadd.f32 %v2282, %v2283
    %v2285 = vmul.f32 %v2088, %v2253
    %v2286 = vadd.f32 %v2284, %v2285
    %2287 = vrot.lane.b32.xlu0 %v605, 107
    %v2288 = vpop.permute.xlu0 %2287
    %v2290 = vmul.f32 %v2030, %v2288
    %2291 = vrot.lane.b32.xlu0 %v605, 83
    %v2292 = vpop.permute.xlu0 %2291
    %v2294 = vmul.f32 %v2044, %v2292
    %v2295 = vadd.f32 %v2290, %v2294
    %2296 = vrot.lane.b32.xlu0 %v605, 59
    %v2297 = vpop.permute.xlu0 %2296
    %v2299 = vmul.f32 %v2058, %v2297
    %v2300 = vadd.f32 %v2295, %v2299
    %v2301 = vadd.f32 %v2300, %v2103
    %v2302 = vmul.f32 %v2063, %v2288
    %v2303 = vmul.f32 %v2068, %v2292
    %v2304 = vadd.f32 %v2302, %v2303
    %v2305 = vmul.f32 %v2073, %v2297
    %v2306 = vadd.f32 %v2304, %v2305
    %v2307 = vadd.f32 %v2306, %v2109
    %v2308 = vmul.f32 %v2078, %v2288
    %v2309 = vmul.f32 %v2083, %v2292
    %v2310 = vadd.f32 %v2308, %v2309
    %v2311 = vmul.f32 %v2088, %v2297
    %v2312 = vadd.f32 %v2310, %v2311
    %v2313 = vadd.f32 %v2312, %v2115
    %2314 = vrot.lane.b32.xlu0 %v605, 106
    %v2315 = vpop.permute.xlu0 %2314
    %v2317 = vmul.f32 %v2129, %v2315
    %2318 = vrot.lane.b32.xlu0 %v605, 82
    %v2319 = vpop.permute.xlu0 %2318
    %v2321 = vmul.f32 %v2143, %v2319
    %v2322 = vadd.f32 %v2317, %v2321
    %2323 = vrot.lane.b32.xlu0 %v605, 58
    %v2324 = vpop.permute.xlu0 %2323
    %v2326 = vmul.f32 %v2157, %v2324
    %v2327 = vadd.f32 %v2322, %v2326
    %v2328 = vadd.f32 %v2327, %v2202
    %v2329 = vmul.f32 %v2162, %v2315
    %v2330 = vmul.f32 %v2167, %v2319
    %v2331 = vadd.f32 %v2329, %v2330
    %v2332 = vmul.f32 %v2172, %v2324
    %v2333 = vadd.f32 %v2331, %v2332
    %v2334 = vadd.f32 %v2333, %v2208
    %v2335 = vmul.f32 %v2177, %v2315
    %v2336 = vmul.f32 %v2182, %v2319
    %v2337 = vadd.f32 %v2335, %v2336
    %v2338 = vmul.f32 %v2187, %v2324
    %v2339 = vadd.f32 %v2337, %v2338
    %v2340 = vadd.f32 %v2339, %v2214
    %2341 = vrot.lane.b32.xlu0 %v605, 105
    %v2342 = vpop.permute.xlu0 %2341
    %v2344 = vmul.f32 %v2228, %v2342
    %2345 = vrot.lane.b32.xlu0 %v605, 81
    %v2346 = vpop.permute.xlu0 %2345
    %v2348 = vmul.f32 %v2242, %v2346
    %v2349 = vadd.f32 %v2344, %v2348
    %2350 = vrot.lane.b32.xlu0 %v605, 57
    %v2351 = vpop.permute.xlu0 %2350
    %v2353 = vmul.f32 %v2256, %v2351
    %v2354 = vadd.f32 %v2349, %v2353
    %v2355 = vadd.f32 %v2354, %v2301
    %v2356 = vmul.f32 %v2261, %v2342
    %v2357 = vmul.f32 %v2266, %v2346
    %v2358 = vadd.f32 %v2356, %v2357
    %v2359 = vmul.f32 %v2271, %v2351
    %v2360 = vadd.f32 %v2358, %v2359
    %v2361 = vadd.f32 %v2360, %v2307
    %v2362 = vmul.f32 %v2276, %v2342
    %v2363 = vmul.f32 %v2281, %v2346
    %v2364 = vadd.f32 %v2362, %v2363
    %v2365 = vmul.f32 %v2286, %v2351
    %v2366 = vadd.f32 %v2364, %v2365
    %v2367 = vadd.f32 %v2366, %v2313
    %2368 = vst [vmem:[#allocation7] sm:$0x3] 0.0
    %vm2369 = vcmask 1024
    %2370 = vst.msk [vmem:[#allocation7] sm:$0x3] %vm2369, %v398
    %vm2371 = vcmask 197824
    %2372 = vst.msk [vmem:[#allocation7] sm:$0x3] %vm2371, %v403
    %vm2373 = vcmask 394624
    %2374 = vst.msk [vmem:[#allocation7] sm:$0x3] %vm2373, %v407
    %2376 = vrot.lane.b32.xlu0 %v509, 1
    %v2377 = vpop.permute.xlu0 %2376
    %vm2379 = vcmask 9224
    %2380 = vst.msk [vmem:[#allocation7] sm:$0x3] %vm2379, %v2377
    %2382 = vrot.lane.b32.xlu0 %v519, 25
    %v2383 = vpop.permute.xlu0 %2382
    %vm2385 = vcmask 206024
    %2386 = vst.msk [vmem:[#allocation7] sm:$0x3] %vm2385, %v2383
    %2388 = vrot.lane.b32.xlu0 %v529, 49
    %v2389 = vpop.permute.xlu0 %2388
    %vm2391 = vcmask 402824
    %2392 = vst.msk [vmem:[#allocation7] sm:$0x3] %vm2391, %v2389
    %2394 = vrot.lane.b32.xlu0 %v621, 2
    %v2395 = vpop.permute.xlu0 %2394
    %vm2397 = vcmask 17424
    %2398 = vst.msk [vmem:[#allocation7] sm:$0x3] %vm2397, %v2395
    %2400 = vrot.lane.b32.xlu0 %v627, 26
    %v2401 = vpop.permute.xlu0 %2400
    %vm2403 = vcmask 214224
    %2404 = vst.msk [vmem:[#allocation7] sm:$0x3] %vm2403, %v2401
    %2406 = vrot.lane.b32.xlu0 %v633, 50
    %v2407 = vpop.permute.xlu0 %2406
    %vm2409 = vcmask 411024
    %2410 = vst.msk [vmem:[#allocation7] sm:$0x3] %vm2409, %v2407
    %2412 = vrot.lane.b32.xlu0 %v725, 3
    %v2413 = vpop.permute.xlu0 %2412
    %vm2415 = vcmask 25624
    %2416 = vst.msk [vmem:[#allocation7] sm:$0x3] %vm2415, %v2413
    %2418 = vrot.lane.b32.xlu0 %v731, 27
    %v2419 = vpop.permute.xlu0 %2418
    %vm2421 = vcmask 222424
    %2422 = vst.msk [vmem:[#allocation7] sm:$0x3] %vm2421, %v2419
    %2424 = vrot.lane.b32.xlu0 %v737, 51
    %v2425 = vpop.permute.xlu0 %2424
    %vm2427 = vcmask 419224
    %2428 = vst.msk [vmem:[#allocation7] sm:$0x3] %vm2427, %v2425
    %2430 = vrot.lane.b32.xlu0 %v824, 4
    %v2431 = vpop.permute.xlu0 %2430
    %vm2433 = vcmask 33824
    %2434 = vst.msk [vmem:[#allocation7] sm:$0x3] %vm2433, %v2431
    %2436 = vrot.lane.b32.xlu0 %v830, 28
    %v2437 = vpop.permute.xlu0 %2436
    %vm2439 = vcmask 230624
    %2440 = vst.msk [vmem:[#allocation7] sm:$0x3] %vm2439, %v2437
    %2442 = vrot.lane.b32.xlu0 %v836, 52
    %v2443 = vpop.permute.xlu0 %2442
    %vm2445 = vcmask 427424
    %2446 = vst.msk [vmem:[#allocation7] sm:$0x3] %vm2445, %v2443
    %2448 = vrot.lane.b32.xlu0 %v923, 5
    %v2449 = vpop.permute.xlu0 %2448
    %vm2451 = vcmask 42024
    %2452 = vst.msk [vmem:[#allocation7] sm:$0x3] %vm2451, %v2449
    %2454 = vrot.lane.b32.xlu0 %v929, 29
    %v2455 = vpop.permute.xlu0 %2454
    %vm2457 = vcmask 238824
    %2458 = vst.msk [vmem:[#allocation7] sm:$0x3] %vm2457, %v2455
    %2460 = vrot.lane.b32.xlu0 %v935, 53
    %v2461 = vpop.permute.xlu0 %2460
    %vm2463 = vcmask 435624
    %2464 = vst.msk [vmem:[#allocation7] sm:$0x3] %vm2463, %v2461
    %2466 = vrot.lane.b32.xlu0 %v1022, 6
    %v2467 = vpop.permute.xlu0 %2466
    %vm2469 = vcmask 50224
    %2470 = vst.msk [vmem:[#allocation7] sm:$0x3] %vm2469, %v2467
    %2472 = vrot.lane.b32.xlu0 %v1028, 30
    %v2473 = vpop.permute.xlu0 %2472
    %vm2475 = vcmask 247024
    %2476 = vst.msk [vmem:[#allocation7] sm:$0x3] %vm2475, %v2473
    %2478 = vrot.lane.b32.xlu0 %v1034, 54
    %v2479 = vpop.permute.xlu0 %2478
    %vm2481 = vcmask 443824
    %2482 = vst.msk [vmem:[#allocation7] sm:$0x3] %vm2481, %v2479
    %2484 = vrot.lane.b32.xlu0 %v1121, 7
    %v2485 = vpop.permute.xlu0 %2484
    %vm2487 = vcmask 58424
    %2488 = vst.msk [vmem:[#allocation7] sm:$0x3] %vm2487, %v2485
    %2490 = vrot.lane.b32.xlu0 %v1127, 31
    %v2491 = vpop.permute.xlu0 %2490
    %vm2493 = vcmask 255224
    %2494 = vst.msk [vmem:[#allocation7] sm:$0x3] %vm2493, %v2491
    %2496 = vrot.lane.b32.xlu0 %v1133, 55
    %v2497 = vpop.permute.xlu0 %2496
    %vm2499 = vcmask 452024
    %2500 = vst.msk [vmem:[#allocation7] sm:$0x3] %vm2499, %v2497
    %2502 = vrot.lane.b32.xlu0 %v1220, 8
    %v2503 = vpop.permute.xlu0 %2502
    %vm2505 = vcmask 66624
    %2506 = vst.msk [vmem:[#allocation7] sm:$0x3] %vm2505, %v2503
    %2508 = vrot.lane.b32.xlu0 %v1226, 32
    %v2509 = vpop.permute.xlu0 %2508
    %vm2511 = vcmask 263424
    %2512 = vst.msk [vmem:[#allocation7] sm:$0x3] %vm2511, %v2509
    %2514 = vrot.lane.b32.xlu0 %v1232, 56
    %v2515 = vpop.permute.xlu0 %2514
    %vm2517 = vcmask 460224
    %2518 = vst.msk [vmem:[#allocation7] sm:$0x3] %vm2517, %v2515
    %2520 = vrot.lane.b32.xlu0 %v1319, 9
    %v2521 = vpop.permute.xlu0 %2520
    %vm2523 = vcmask 74824
    %2524 = vst.msk [vmem:[#allocation7] sm:$0x3] %vm2523, %v2521
    %2526 = vrot.lane.b32.xlu0 %v1325, 33
    %v2527 = vpop.permute.xlu0 %2526
    %vm2529 = vcmask 271624
    %2530 = vst.msk [vmem:[#allocation7] sm:$0x3] %vm2529, %v2527
    %2532 = vrot.lane.b32.xlu0 %v1331, 57
    %v2533 = vpop.permute.xlu0 %2532
    %vm2535 = vcmask 468424
    %2536 = vst.msk [vmem:[#allocation7] sm:$0x3] %vm2535, %v2533
    %2538 = vrot.lane.b32.xlu0 %v1346, 10
    %v2539 = vpop.permute.xlu0 %2538
    %vm2541 = vcmask 83024
    %2542 = vst.msk [vmem:[#allocation7] sm:$0x3] %vm2541, %v2539
    %2544 = vrot.lane.b32.xlu0 %v1352, 34
    %v2545 = vpop.permute.xlu0 %2544
    %vm2547 = vcmask 279824
    %2548 = vst.msk [vmem:[#allocation7] sm:$0x3] %vm2547, %v2545
    %2550 = vrot.lane.b32.xlu0 %v1358, 58
    %v2551 = vpop.permute.xlu0 %2550
    %vm2553 = vcmask 476624
    %2554 = vst.msk [vmem:[#allocation7] sm:$0x3] %vm2553, %v2551
    %2556 = vrot.lane.b32.xlu0 %v1373, 11
    %v2557 = vpop.permute.xlu0 %2556
    %vm2559 = vcmask 91224
    %2560 = vst.msk [vmem:[#allocation7] sm:$0x3] %vm2559, %v2557
    %2562 = vrot.lane.b32.xlu0 %v1379, 35
    %v2563 = vpop.permute.xlu0 %2562
    %vm2565 = vcmask 288024
    %2566 = vst.msk [vmem:[#allocation7] sm:$0x3] %vm2565, %v2563
    %2568 = vrot.lane.b32.xlu0 %v1385, 59
    %v2569 = vpop.permute.xlu0 %2568
    %vm2571 = vcmask 484824
    %2572 = vst.msk [vmem:[#allocation7] sm:$0x3] %vm2571, %v2569
    %2574 = vrot.lane.b32.xlu0 %v1472, 12
    %v2575 = vpop.permute.xlu0 %2574
    %vm2577 = vcmask 99424
    %2578 = vst.msk [vmem:[#allocation7] sm:$0x3] %vm2577, %v2575
    %2580 = vrot.lane.b32.xlu0 %v1478, 36
    %v2581 = vpop.permute.xlu0 %2580
    %vm2583 = vcmask 296224
    %2584 = vst.msk [vmem:[#allocation7] sm:$0x3] %vm2583, %v2581
    %2586 = vrot.lane.b32.xlu0 %v1484, 60
    %v2587 = vpop.permute.xlu0 %2586
    %vm2589 = vcmask 493024
    %2590 = vst.msk [vmem:[#allocation7] sm:$0x3] %vm2589, %v2587
    %2592 = vrot.lane.b32.xlu0 %v1576, 13
    %v2593 = vpop.permute.xlu0 %2592
    %vm2595 = vcmask 107624
    %2596 = vst.msk [vmem:[#allocation7] sm:$0x3] %vm2595, %v2593
    %2598 = vrot.lane.b32.xlu0 %v1582, 37
    %v2599 = vpop.permute.xlu0 %2598
    %vm2601 = vcmask 304424
    %2602 = vst.msk [vmem:[#allocation7] sm:$0x3] %vm2601, %v2599
    %2604 = vrot.lane.b32.xlu0 %v1588, 61
    %v2605 = vpop.permute.xlu0 %2604
    %vm2607 = vcmask 501224
    %2608 = vst.msk [vmem:[#allocation7] sm:$0x3] %vm2607, %v2605
    %2610 = vrot.lane.b32.xlu0 %v1680, 14
    %v2611 = vpop.permute.xlu0 %2610
    %vm2613 = vcmask 115824
    %2614 = vst.msk [vmem:[#allocation7] sm:$0x3] %vm2613, %v2611
    %2616 = vrot.lane.b32.xlu0 %v1686, 38
    %v2617 = vpop.permute.xlu0 %2616
    %vm2619 = vcmask 312624
    %2620 = vst.msk [vmem:[#allocation7] sm:$0x3] %vm2619, %v2617
    %2622 = vrot.lane.b32.xlu0 %v1692, 62
    %v2623 = vpop.permute.xlu0 %2622
    %vm2625 = vcmask 509424
    %2626 = vst.msk [vmem:[#allocation7] sm:$0x3] %vm2625, %v2623
    %2628 = vrot.lane.b32.xlu0 %v1707, 15
    %v2629 = vpop.permute.xlu0 %2628
    %vm2631 = vcmask 124024
    %2632 = vst.msk [vmem:[#allocation7] sm:$0x3] %vm2631, %v2629
    %2634 = vrot.lane.b32.xlu0 %v1713, 39
    %v2635 = vpop.permute.xlu0 %2634
    %vm2637 = vcmask 320824
    %2638 = vst.msk [vmem:[#allocation7] sm:$0x3] %vm2637, %v2635
    %2640 = vrot.lane.b32.xlu0 %v1719, 63
    %v2641 = vpop.permute.xlu0 %2640
    %vm2643 = vcmask 517624
    %2644 = vst.msk [vmem:[#allocation7] sm:$0x3] %vm2643, %v2641
    %2646 = vrot.lane.b32.xlu0 %v1806, 16
    %v2647 = vpop.permute.xlu0 %2646
    %vm2649 = vcmask 132224
    %2650 = vst.msk [vmem:[#allocation7] sm:$0x3] %vm2649, %v2647
    %2652 = vrot.lane.b32.xlu0 %v1812, 40
    %v2653 = vpop.permute.xlu0 %2652
    %vm2655 = vcmask 329024
    %2656 = vst.msk [vmem:[#allocation7] sm:$0x3] %vm2655, %v2653
    %2658 = vrot.lane.b32.xlu0 %v1818, 64
    %v2659 = vpop.permute.xlu0 %2658
    %vm2661 = vcmask 525824
    %2662 = vst.msk [vmem:[#allocation7] sm:$0x3] %vm2661, %v2659
    %2664 = vrot.lane.b32.xlu0 %v1905, 17
    %v2665 = vpop.permute.xlu0 %2664
    %vm2667 = vcmask 140424
    %2668 = vst.msk [vmem:[#allocation7] sm:$0x3] %vm2667, %v2665
    %2670 = vrot.lane.b32.xlu0 %v1911, 41
    %v2671 = vpop.permute.xlu0 %2670
    %vm2673 = vcmask 337224
    %2674 = vst.msk [vmem:[#allocation7] sm:$0x3] %vm2673, %v2671
    %2676 = vrot.lane.b32.xlu0 %v1917, 65
    %v2677 = vpop.permute.xlu0 %2676
    %vm2679 = vcmask 534024
    %2680 = vst.msk [vmem:[#allocation7] sm:$0x3] %vm2679, %v2677
    %2682 = vrot.lane.b32.xlu0 %v2004, 18
    %v2683 = vpop.permute.xlu0 %2682
    %vm2685 = vcmask 148624
    %2686 = vst.msk [vmem:[#allocation7] sm:$0x3] %vm2685, %v2683
    %2688 = vrot.lane.b32.xlu0 %v2010, 42
    %v2689 = vpop.permute.xlu0 %2688
    %vm2691 = vcmask 345424
    %2692 = vst.msk [vmem:[#allocation7] sm:$0x3] %vm2691, %v2689
    %2694 = vrot.lane.b32.xlu0 %v2016, 66
    %v2695 = vpop.permute.xlu0 %2694
    %vm2697 = vcmask 542224
    %2698 = vst.msk [vmem:[#allocation7] sm:$0x3] %vm2697, %v2695
    %2700 = vrot.lane.b32.xlu0 %v2103, 19
    %v2701 = vpop.permute.xlu0 %2700
    %vm2703 = vcmask 156824
    %2704 = vst.msk [vmem:[#allocation7] sm:$0x3] %vm2703, %v2701
    %2706 = vrot.lane.b32.xlu0 %v2109, 43
    %v2707 = vpop.permute.xlu0 %2706
    %vm2709 = vcmask 353624
    %2710 = vst.msk [vmem:[#allocation7] sm:$0x3] %vm2709, %v2707
    %2712 = vrot.lane.b32.xlu0 %v2115, 67
    %v2713 = vpop.permute.xlu0 %2712
    %vm2715 = vcmask 550424
    %2716 = vst.msk [vmem:[#allocation7] sm:$0x3] %vm2715, %v2713
    %2718 = vrot.lane.b32.xlu0 %v2202, 20
    %v2719 = vpop.permute.xlu0 %2718
    %vm2721 = vcmask 165024
    %2722 = vst.msk [vmem:[#allocation7] sm:$0x3] %vm2721, %v2719
    %2724 = vrot.lane.b32.xlu0 %v2208, 44
    %v2725 = vpop.permute.xlu0 %2724
    %vm2727 = vcmask 361824
    %2728 = vst.msk [vmem:[#allocation7] sm:$0x3] %vm2727, %v2725
    %2730 = vrot.lane.b32.xlu0 %v2214, 68
    %v2731 = vpop.permute.xlu0 %2730
    %vm2733 = vcmask 558624
    %2734 = vst.msk [vmem:[#allocation7] sm:$0x3] %vm2733, %v2731
    %2736 = vrot.lane.b32.xlu0 %v2301, 21
    %v2737 = vpop.permute.xlu0 %2736
    %vm2739 = vcmask 173224
    %2740 = vst.msk [vmem:[#allocation7] sm:$0x3] %vm2739, %v2737
    %2742 = vrot.lane.b32.xlu0 %v2307, 45
    %v2743 = vpop.permute.xlu0 %2742
    %vm2745 = vcmask 370024
    %2746 = vst.msk [vmem:[#allocation7] sm:$0x3] %vm2745, %v2743
    %2748 = vrot.lane.b32.xlu0 %v2313, 69
    %v2749 = vpop.permute.xlu0 %2748
    %vm2751 = vcmask 566824
    %2752 = vst.msk [vmem:[#allocation7] sm:$0x3] %vm2751, %v2749
    %2754 = vrot.lane.b32.xlu0 %v2328, 22
    %v2755 = vpop.permute.xlu0 %2754
    %vm2757 = vcmask 181424
    %2758 = vst.msk [vmem:[#allocation7] sm:$0x3] %vm2757, %v2755
    %2760 = vrot.lane.b32.xlu0 %v2334, 46
    %v2761 = vpop.permute.xlu0 %2760
    %vm2763 = vcmask 378224
    %2764 = vst.msk [vmem:[#allocation7] sm:$0x3] %vm2763, %v2761
    %2766 = vrot.lane.b32.xlu0 %v2340, 70
    %v2767 = vpop.permute.xlu0 %2766
    %vm2769 = vcmask 575024
    %2770 = vst.msk [vmem:[#allocation7] sm:$0x3] %vm2769, %v2767
    %2772 = vrot.lane.b32.xlu0 %v2355, 23
    %v2773 = vpop.permute.xlu0 %2772
    %vm2775 = vcmask 189624
    %2776 = vst.msk [vmem:[#allocation7] sm:$0x3] %vm2775, %v2773
    %2778 = vrot.lane.b32.xlu0 %v2361, 47
    %v2779 = vpop.permute.xlu0 %2778
    %vm2781 = vcmask 386424
    %2782 = vst.msk [vmem:[#allocation7] sm:$0x3] %vm2781, %v2779
    %2784 = vrot.lane.b32.xlu0 %v2367, 71
    %v2785 = vpop.permute.xlu0 %2784
    %vm2787 = vcmask 583224
    %2788 = vst.msk [vmem:[#allocation7] sm:$0x3] %vm2787, %v2785
    // Predicated region
    $region26: #{tpu_custom_call.1} parent=1 // pred_check
      _
    $region27: #{tpu_custom_call.1} parent=1 // pred_check_branch
      %2790 = sbr.rel (0) target = $region29
    $region28: #{tpu_custom_call.1} parent=1 // pred_region
      %s2792 = ssub.s32 32, 32
      %2793 = vsyncadd [#allocation4], %s2792
      %s2795 = sshll.u32 [#allocation7], 4
      %s2796 = int_to_ptr.vmem [resolvable:$true] %s2795
      %2798 = dma.vmem_to_hbm [thread:$0]  %s2796, 32, %s4, [#allocation4]
    $region29: #{tpu_custom_call.1} parent=1 // pred_fallthru
      _
    // Predicated region
    $region30: #{tpu_custom_call.1} parent=1 // pred_check
      _
    $region31: #{tpu_custom_call.1} parent=1 // pred_check_branch
      %2800 = sbr.rel (0) target = $region33
    $region32: #{tpu_custom_call.1} parent=1 // pred_region
      %2801 = dma.done [#allocation4], 32
    $region33: #{tpu_custom_call.1} parent=1 // pred_fallthru
      _
    %2802 = vsyncpa [#allocation3], 1
    %2803 = vsyncpa [#allocation6], 1
    %2804 = vsyncpa [#allocation4], 1

</llo_original>
